<compile_context>
chip_gen: v6e
topology: v6e:2x2x1
jax: 0.10.0
libtpu: 0.0.40
codegen_flags: <defaults>
</compile_context>

<pallas_src>
import functools

import jax
import jax.numpy as jnp
from jax import lax
from jax.experimental import pallas as pl
from jax.experimental.pallas import tpu as pltpu

BN_EPS = 1e-5
LEAKY_SLOPE = 0.2
KH = KW = 4


def _ceil_div(a, b):
    return -(-a // b)


# ---------------------------------------------------------------------------
# Phase 1: conv as KH*KW shifted accumulating MXU matmuls (f32 accumulator)
#          + per-image BatchNorm partial statistics (sum, centered M2).
# ---------------------------------------------------------------------------
def _conv_stats_kernel(x_ref, w_ref, y_ref, stat_ref, *, stride, h_out, w_out):
    # x_ref:    (1, stride*stride, Hq, Wq, C_in)  compute dtype (space-to-depth input)
    # w_ref:    (KH*KW, C_in, C_out)              compute dtype (resident across grid)
    # y_ref:    (1, h_out*w_out, C_out)           compute dtype (conv output)
    # stat_ref: (1, 2, C_out)                     f32 [row 0: sum, row 1: centered M2]
    c_in = x_ref.shape[-1]
    c_out = w_ref.shape[-1]
    p_sp = h_out * w_out

    acc = jnp.zeros((p_sp, c_out), jnp.float32)
    for kh in range(KH):
        for kw in range(KW):
            ph = (kh % stride) * stride + (kw % stride)   # stride phase plane
            i0, j0 = kh // stride, kw // stride           # offset inside the plane
            xs = x_ref[0, ph, i0:i0 + h_out, j0:j0 + w_out, :]
            acc = acc + jnp.dot(xs.reshape(p_sp, c_in),
                                w_ref[kh * KW + kw],
                                preferred_element_type=jnp.float32)

    # Writeback in compute dtype (bf16 by default) — stats come from the f32 acc.
    y_ref[0] = acc.astype(y_ref.dtype)

    col_sum = jnp.sum(acc, axis=0, keepdims=True)                   # (1, C_out)
    d = acc - col_sum * (1.0 / p_sp)                                # centered at tile mean
    stat_ref[0, 0:1, :] = col_sum
    stat_ref[0, 1:2, :] = jnp.sum(d * d, axis=0, keepdims=True)


# ---------------------------------------------------------------------------
# Phase 2: folded BatchNorm affine (single FMA) + LeakyReLU(0.2),
#          output written as lane-dense (C, H*W) blocks (NCHW-ready).
# ---------------------------------------------------------------------------
def _bn_lrelu_kernel(y_ref, scale_ref, shift_ref, o_ref):
    # y_ref: (1, C_out, P) compute dtype; scale/shift: (C_out, 1) f32
    # o_ref: (1, C_out, P) f32
    z = y_ref[0].astype(jnp.float32) * scale_ref[...] + shift_ref[...]
    o_ref[0] = jnp.where(z >= 0.0, z, LEAKY_SLOPE * z).astype(o_ref.dtype)


@functools.partial(jax.jit, static_argnames=("stride", "compute_dtype"))
def cnn_block_forward(x, weight, gamma, beta, stride, *, compute_dtype=jnp.bfloat16):
    """
    x:      (N, C_in, H, W)  float32 (NCHW, as in PyTorch)
    weight: (C_out, C_in, KH, KW)
    gamma, beta: (C_out,)
    Returns (N, C_out, H_out, W_out) float32.
    """
    n, c_in, h, w = x.shape
    c_out = weight.shape[0]
    s = int(stride)
    h_out = (h + 2 - KH) // s + 1
    w_out = (w + 2 - KW) // s + 1
    p_sp = h_out * w_out

    # ---- NCHW -> NHWC, reflect pad, cast to the MXU compute dtype (~1x input).
    x_nhwc = jnp.transpose(x, (0, 2, 3, 1)).astype(compute_dtype)
    xp = jnp.pad(x_nhwc, ((0, 0), (1, 1), (1, 1), (0, 0)), mode="reflect")

    # ---- space-to-depth by stride:
    #      x_s2d[n, ph*s+pw, i, j, c] = xp[n, s*i+ph, s*j+pw, c]
    #      (pure relayout, same total size) so that every (kh, kw) tap inside the
    #      kernel is a contiguous static slice.  Divisibility zero-padding is never
    #      read by the conv taps.
    hq = max(_ceil_div(h + 2, s), (KH - 1) // s + h_out)
    wq = max(_ceil_div(w + 2, s), (KW - 1) // s + w_out)
    xp = jnp.pad(xp, ((0, 0), (0, s * hq - (h + 2)), (0, s * wq - (w + 2)), (0, 0)))
    x_s2d = (xp.reshape(n, hq, s, wq, s, c_in)
               .transpose(0, 2, 4, 1, 3, 5)
               .reshape(n, s * s, hq, wq, c_in))

    # ---- weight: OIHW -> (KH*KW, C_in, C_out), tap order (kh, kw).
    w_r = (jnp.transpose(weight, (2, 3, 1, 0))
              .reshape(KH * KW, c_in, c_out).astype(compute_dtype))

    # ---- VMEM / cost bookkeeping (per grid step = one image).
    cb = jnp.dtype(compute_dtype).itemsize
    x_blk = s * s * hq * wq * c_in * cb
    w_bytes = KH * KW * c_in * c_out * cb
    y_blk = p_sp * c_out * cb
    o_blk = p_sp * c_out * 4
    stat_blk = 2 * c_out * 4
    acc_bytes = p_sp * c_out * 4
    est = 2 * (x_blk + y_blk + stat_blk + o_blk) + 2 * w_bytes + acc_bytes
    vmem_limit = int(max(32 << 20, min(2 * est + (8 << 20), 100 << 20)))
    # TODO(synk): for images/accumulators too large for one grid step, add an
    # H-tiled variant with halo'd input blocks (pl.Element index maps or manual DMA).

    cparams = pltpu.CompilerParams(
        dimension_semantics=("parallel",),
        vmem_limit_bytes=vmem_limit,
    )

    k_total = KH * KW * c_in
    ce1 = pl.CostEstimate(
        flops=2 * n * p_sp * k_total * c_out,
        transcendentals=0,
        bytes_accessed=n * (x_blk + y_blk + stat_blk) + w_bytes)
    ce2 = pl.CostEstimate(
        flops=4 * n * p_sp * c_out,
        transcendentals=0,
        bytes_accessed=n * (y_blk + o_blk) + 2 * c_out * 4)

    # ---- Phase 1: conv (shifted matmuls) + per-image BN partials -----------------
    y, stats = pl.pallas_call(
        functools.partial(_conv_stats_kernel, stride=s, h_out=h_out, w_out=w_out),
        out_shape=(jax.ShapeDtypeStruct((n, p_sp, c_out), compute_dtype),
                   jax.ShapeDtypeStruct((n, 2, c_out), jnp.float32)),
        grid=(n,),
        in_specs=[
            pl.BlockSpec((1, s * s, hq, wq, c_in), lambda i: (i, 0, 0, 0, 0)),
            pl.BlockSpec((KH * KW, c_in, c_out), lambda i: (0, 0, 0)),  # resident
        ],
        out_specs=(
            pl.BlockSpec((1, p_sp, c_out), lambda i: (i, 0, 0)),
            pl.BlockSpec((1, 2, c_out), lambda i: (i, 0, 0)),
        ),
        compiler_params=cparams,
        cost_estimate=ce1,
    )(x_s2d, w_r)

    # ---- tiny glue: Chan-style combine of per-image (sum, M2) -> folded BN affine.
    sum_t = stats[:, 0, :]
    m2_t = stats[:, 1, :]
    m_total = jnp.float32(n * p_sp)
    mean_t = sum_t / jnp.float32(p_sp)
    mean = jnp.sum(sum_t, axis=0) / m_total
    m2 = jnp.sum(m2_t, axis=0) + jnp.float32(p_sp) * jnp.sum(
        (mean_t - mean[None, :]) ** 2, axis=0)
    var = m2 / m_total                                    # biased, as BN train-mode norm
    scale = gamma.astype(jnp.float32) * lax.rsqrt(var + BN_EPS)
    shift = beta.astype(jnp.float32) - mean * scale

    # Single small compute-dtype transpose so Phase 2 emits lane-dense (C, H*W)
    # blocks and the final NCHW result is just a metadata reshape.
    # TODO(synk): fold this transpose into Phase 1 as an in-kernel acc.T store.
    y_t = jnp.transpose(y, (0, 2, 1))                     # (N, C_out, P)

    # ---- Phase 2: folded BN affine + LeakyReLU, NCHW-ready output ----------------
    out_ncp = pl.pallas_call(
        _bn_lrelu_kernel,
        out_shape=jax.ShapeDtypeStruct((n, c_out, p_sp), jnp.float32),
        grid=(n,),
        in_specs=[
            pl.BlockSpec((1, c_out, p_sp), lambda i: (i, 0, 0)),
            pl.BlockSpec((c_out, 1), lambda i: (0, 0)),
            pl.BlockSpec((c_out, 1), lambda i: (0, 0)),
        ],
        out_specs=pl.BlockSpec((1, c_out, p_sp), lambda i: (i, 0, 0)),
        compiler_params=cparams,
        cost_estimate=ce2,
    )(y_t, scale.reshape(c_out, 1), shift.reshape(c_out, 1))

    return out_ncp.reshape(n, c_out, h_out, w_out)        # NCHW, no extra data pass


def _reference_forward(x, weight, gamma, beta, stride, compute_dtype=jnp.float32):
    """Pure-JAX reference (reflect-pad conv + train-mode BN + LeakyReLU)."""
    xp = jnp.pad(x, ((0, 0), (0, 0), (1, 1), (1, 1)),
                 mode="reflect").astype(compute_dtype)
    y = lax.conv_general_dilated(
        xp, weight.astype(compute_dtype), window_strides=(stride, stride),
        padding="VALID", dimension_numbers=("NCHW", "OIHW", "NCHW"),
        preferred_element_type=jnp.float32)
    mean = jnp.mean(y, axis=(0, 2, 3), keepdims=True)
    var = jnp.mean((y - mean) ** 2, axis=(0, 2, 3), keepdims=True)
    y_hat = (y - mean) * lax.rsqrt(var + BN_EPS)
    z = y_hat * gamma.reshape(1, -1, 1, 1) + beta.reshape(1, -1, 1, 1)
    return jnp.where(z >= 0, z, LEAKY_SLOPE * z)


if __name__ == "__main__":
    # Small deterministic config consistent with the module: CNNBlock(4, 8, stride=2)
    N, C_IN, H, W = 2, 4, 16, 16
    C_OUT = 8
    STRIDE = 2

    key = jax.random.PRNGKey(0)
    kx, kw2 = jax.random.split(key)

    x = jax.random.normal(kx, (N, C_IN, H, W), dtype=jnp.float32)
    # PyTorch default Conv2d init: uniform(-1/sqrt(fan_in), 1/sqrt(fan_in)); BN 1/0.
    fan_in = C_IN * KH * KW
    bound = 1.0 / (fan_in ** 0.5)
    weight = jax.random.uniform(kw2, (C_OUT, C_IN, KH, KW),
                                minval=-bound, maxval=bound, dtype=jnp.float32)
    gamma = jnp.ones((C_OUT,), dtype=jnp.float32)
    beta = jnp.zeros((C_OUT,), dtype=jnp.float32)

    # 1) Exact-semantics check: f32 operands everywhere vs pure-JAX f32 reference.
    out_f32 = jax.block_until_ready(
        cnn_block_forward(x, weight, gamma, beta, STRIDE, compute_dtype=jnp.float32))
    ref_f32 = jax.block_until_ready(
        _reference_forward(x, weight, gamma, beta, STRIDE, jnp.float32))
    assert out_f32.shape == (N, C_OUT, H // STRIDE, W // STRIDE), out_f32.shape
    assert jnp.allclose(out_f32, ref_f32, atol=1e-4, rtol=1e-4), \
        float(jnp.max(jnp.abs(out_f32 - ref_f32)))

    # 2) Optimized path: bf16 MXU operands + bf16 y intermediate (f32 accumulation
    #    and f32 BN stats) vs a matching bf16-operand reference.  Slightly wider
    #    tolerance accounts for the bf16 rounding of the y intermediate.
    out_bf = jax.block_until_ready(
        cnn_block_forward(x, weight, gamma, beta, STRIDE, compute_dtype=jnp.bfloat16))
    ref_bf = jax.block_until_ready(
        _reference_forward(x, weight, gamma, beta, STRIDE, jnp.bfloat16))
    assert out_bf.shape == (N, C_OUT, H // STRIDE, W // STRIDE), out_bf.shape
    assert jnp.allclose(out_bf, ref_bf, atol=2e-2, rtol=2e-2), \
        float(jnp.max(jnp.abs(out_bf - ref_bf)))

    print("KERNEL_OK")
</pallas_src>

<mosaic_0001>
module attributes {stable_mosaic.version = 11 : i64} {
  func.func @_conv_stats_kernel(%arg0: i32, %arg1: memref<1x4x9x9x4xf32, #tpu.memory_space<vmem>>, %arg2: memref<16x4x8xf32, #tpu.memory_space<vmem>>, %arg3: memref<1x64x8xf32, #tpu.memory_space<vmem>>, %arg4: memref<1x2x8xf32, #tpu.memory_space<vmem>>) attributes {dimension_semantics = [#tpu.dimension_semantics<parallel>], iteration_bounds = array<i64: 2>, scalar_prefetch = 0 : i64, scratch_operands = 0 : i64, tpu.core_type = #tpu.core_type<tc>, window_params = [{transform_indices = @transform_0, window_bounds = array<i64: 1, 4, 9, 9, 4>}, {pipeline_mode = #tpu.pipeline_mode<synchronous>, transform_indices = @transform_1, window_bounds = array<i64: 16, 4, 8>}, {transform_indices = @transform_2, window_bounds = array<i64: 1, 64, 8>}, {transform_indices = @transform_3, window_bounds = array<i64: 1, 2, 8>}]} {
    %cst = arith.constant 0.000000e+00 : f32
    %0 = vector.broadcast %cst : f32 to vector<64x8xf32>
    %c0 = arith.constant 0 : index
    %c0_0 = arith.constant 0 : index
    %c0_1 = arith.constant 0 : index
    %c0_2 = arith.constant 0 : index
    %c0_3 = arith.constant 0 : index
    %1 = vector.load %arg1[%c0, %c0_0, %c0_1, %c0_2, %c0_3] : memref<1x4x9x9x4xf32, #tpu.memory_space<vmem>>, vector<1x1x8x8x4xf32>
    %2 = vector.shape_cast %1 : vector<1x1x8x8x4xf32> to vector<8x8x4xf32>
    %3 = vector.shape_cast %2 : vector<8x8x4xf32> to vector<64x4xf32>
    %c0_4 = arith.constant 0 : index
    %c0_5 = arith.constant 0 : index
    %c0_6 = arith.constant 0 : index
    %4 = vector.load %arg2[%c0_4, %c0_5, %c0_6] : memref<16x4x8xf32, #tpu.memory_space<vmem>>, vector<1x4x8xf32>
    %5 = vector.shape_cast %4 : vector<1x4x8xf32> to vector<4x8xf32>
    %cst_7 = arith.constant dense<0.000000e+00> : vector<64x8xf32>
    %6 = tpu.matmul %3, %5, %cst_7 {dimension_numbers = #tpu.dot_dimension_numbers<[1], [0], [0], [1], [0, 0, 1, 1], [], []>} : vector<64x4xf32>, vector<4x8xf32>, vector<64x8xf32> -> vector<64x8xf32>
    %7 = arith.addf %0, %6 : vector<64x8xf32>
    %c0_8 = arith.constant 0 : index
    %c1 = arith.constant 1 : index
    %c0_9 = arith.constant 0 : index
    %c0_10 = arith.constant 0 : index
    %c0_11 = arith.constant 0 : index
    %8 = vector.load %arg1[%c0_8, %c1, %c0_9, %c0_10, %c0_11] : memref<1x4x9x9x4xf32, #tpu.memory_space<vmem>>, vector<1x1x8x8x4xf32>
    %9 = vector.shape_cast %8 : vector<1x1x8x8x4xf32> to vector<8x8x4xf32>
    %10 = vector.shape_cast %9 : vector<8x8x4xf32> to vector<64x4xf32>
    %c1_12 = arith.constant 1 : index
    %c0_13 = arith.constant 0 : index
    %c0_14 = arith.constant 0 : index
    %11 = vector.load %arg2[%c1_12, %c0_13, %c0_14] : memref<16x4x8xf32, #tpu.memory_space<vmem>>, vector<1x4x8xf32>
    %12 = vector.shape_cast %11 : vector<1x4x8xf32> to vector<4x8xf32>
    %cst_15 = arith.constant dense<0.000000e+00> : vector<64x8xf32>
    %13 = tpu.matmul %10, %12, %cst_15 {dimension_numbers = #tpu.dot_dimension_numbers<[1], [0], [0], [1], [0, 0, 1, 1], [], []>} : vector<64x4xf32>, vector<4x8xf32>, vector<64x8xf32> -> vector<64x8xf32>
    %14 = arith.addf %7, %13 : vector<64x8xf32>
    %c0_16 = arith.constant 0 : index
    %c0_17 = arith.constant 0 : index
    %c0_18 = arith.constant 0 : index
    %c1_19 = arith.constant 1 : index
    %c0_20 = arith.constant 0 : index
    %15 = vector.load %arg1[%c0_16, %c0_17, %c0_18, %c1_19, %c0_20] : memref<1x4x9x9x4xf32, #tpu.memory_space<vmem>>, vector<1x1x8x8x4xf32>
    %16 = vector.shape_cast %15 : vector<1x1x8x8x4xf32> to vector<8x8x4xf32>
    %17 = vector.shape_cast %16 : vector<8x8x4xf32> to vector<64x4xf32>
    %c2 = arith.constant 2 : index
    %c0_21 = arith.constant 0 : index
    %c0_22 = arith.constant 0 : index
    %18 = vector.load %arg2[%c2, %c0_21, %c0_22] : memref<16x4x8xf32, #tpu.memory_space<vmem>>, vector<1x4x8xf32>
    %19 = vector.shape_cast %18 : vector<1x4x8xf32> to vector<4x8xf32>
    %cst_23 = arith.constant dense<0.000000e+00> : vector<64x8xf32>
    %20 = tpu.matmul %17, %19, %cst_23 {dimension_numbers = #tpu.dot_dimension_numbers<[1], [0], [0], [1], [0, 0, 1, 1], [], []>} : vector<64x4xf32>, vector<4x8xf32>, vector<64x8xf32> -> vector<64x8xf32>
    %21 = arith.addf %14, %20 : vector<64x8xf32>
    %c0_24 = arith.constant 0 : index
    %c1_25 = arith.constant 1 : index
    %c0_26 = arith.constant 0 : index
    %c1_27 = arith.constant 1 : index
    %c0_28 = arith.constant 0 : index
    %22 = vector.load %arg1[%c0_24, %c1_25, %c0_26, %c1_27, %c0_28] : memref<1x4x9x9x4xf32, #tpu.memory_space<vmem>>, vector<1x1x8x8x4xf32>
    %23 = vector.shape_cast %22 : vector<1x1x8x8x4xf32> to vector<8x8x4xf32>
    %24 = vector.shape_cast %23 : vector<8x8x4xf32> to vector<64x4xf32>
    %c3 = arith.constant 3 : index
    %c0_29 = arith.constant 0 : index
    %c0_30 = arith.constant 0 : index
    %25 = vector.load %arg2[%c3, %c0_29, %c0_30] : memref<16x4x8xf32, #tpu.memory_space<vmem>>, vector<1x4x8xf32>
    %26 = vector.shape_cast %25 : vector<1x4x8xf32> to vector<4x8xf32>
    %cst_31 = arith.constant dense<0.000000e+00> : vector<64x8xf32>
    %27 = tpu.matmul %24, %26, %cst_31 {dimension_numbers = #tpu.dot_dimension_numbers<[1], [0], [0], [1], [0, 0, 1, 1], [], []>} : vector<64x4xf32>, vector<4x8xf32>, vector<64x8xf32> -> vector<64x8xf32>
    %28 = arith.addf %21, %27 : vector<64x8xf32>
    %c0_32 = arith.constant 0 : index
    %c2_33 = arith.constant 2 : index
    %c0_34 = arith.constant 0 : index
    %c0_35 = arith.constant 0 : index
    %c0_36 = arith.constant 0 : index
    %29 = vector.load %arg1[%c0_32, %c2_33, %c0_34, %c0_35, %c0_36] : memref<1x4x9x9x4xf32, #tpu.memory_space<vmem>>, vector<1x1x8x8x4xf32>
    %30 = vector.shape_cast %29 : vector<1x1x8x8x4xf32> to vector<8x8x4xf32>
    %31 = vector.shape_cast %30 : vector<8x8x4xf32> to vector<64x4xf32>
    %c4 = arith.constant 4 : index
    %c0_37 = arith.constant 0 : index
    %c0_38 = arith.constant 0 : index
    %32 = vector.load %arg2[%c4, %c0_37, %c0_38] : memref<16x4x8xf32, #tpu.memory_space<vmem>>, vector<1x4x8xf32>
    %33 = vector.shape_cast %32 : vector<1x4x8xf32> to vector<4x8xf32>
    %cst_39 = arith.constant dense<0.000000e+00> : vector<64x8xf32>
    %34 = tpu.matmul %31, %33, %cst_39 {dimension_numbers = #tpu.dot_dimension_numbers<[1], [0], [0], [1], [0, 0, 1, 1], [], []>} : vector<64x4xf32>, vector<4x8xf32>, vector<64x8xf32> -> vector<64x8xf32>
    %35 = arith.addf %28, %34 : vector<64x8xf32>
    %c0_40 = arith.constant 0 : index
    %c3_41 = arith.constant 3 : index
    %c0_42 = arith.constant 0 : index
    %c0_43 = arith.constant 0 : index
    %c0_44 = arith.constant 0 : index
    %36 = vector.load %arg1[%c0_40, %c3_41, %c0_42, %c0_43, %c0_44] : memref<1x4x9x9x4xf32, #tpu.memory_space<vmem>>, vector<1x1x8x8x4xf32>
    %37 = vector.shape_cast %36 : vector<1x1x8x8x4xf32> to vector<8x8x4xf32>
    %38 = vector.shape_cast %37 : vector<8x8x4xf32> to vector<64x4xf32>
    %c5 = arith.constant 5 : index
    %c0_45 = arith.constant 0 : index
    %c0_46 = arith.constant 0 : index
    %39 = vector.load %arg2[%c5, %c0_45, %c0_46] : memref<16x4x8xf32, #tpu.memory_space<vmem>>, vector<1x4x8xf32>
    %40 = vector.shape_cast %39 : vector<1x4x8xf32> to vector<4x8xf32>
    %cst_47 = arith.constant dense<0.000000e+00> : vector<64x8xf32>
    %41 = tpu.matmul %38, %40, %cst_47 {dimension_numbers = #tpu.dot_dimension_numbers<[1], [0], [0], [1], [0, 0, 1, 1], [], []>} : vector<64x4xf32>, vector<4x8xf32>, vector<64x8xf32> -> vector<64x8xf32>
    %42 = arith.addf %35, %41 : vector<64x8xf32>
    %c0_48 = arith.constant 0 : index
    %c2_49 = arith.constant 2 : index
    %c0_50 = arith.constant 0 : index
    %c1_51 = arith.constant 1 : index
    %c0_52 = arith.constant 0 : index
    %43 = vector.load %arg1[%c0_48, %c2_49, %c0_50, %c1_51, %c0_52] : memref<1x4x9x9x4xf32, #tpu.memory_space<vmem>>, vector<1x1x8x8x4xf32>
    %44 = vector.shape_cast %43 : vector<1x1x8x8x4xf32> to vector<8x8x4xf32>
    %45 = vector.shape_cast %44 : vector<8x8x4xf32> to vector<64x4xf32>
    %c6 = arith.constant 6 : index
    %c0_53 = arith.constant 0 : index
    %c0_54 = arith.constant 0 : index
    %46 = vector.load %arg2[%c6, %c0_53, %c0_54] : memref<16x4x8xf32, #tpu.memory_space<vmem>>, vector<1x4x8xf32>
    %47 = vector.shape_cast %46 : vector<1x4x8xf32> to vector<4x8xf32>
    %cst_55 = arith.constant dense<0.000000e+00> : vector<64x8xf32>
    %48 = tpu.matmul %45, %47, %cst_55 {dimension_numbers = #tpu.dot_dimension_numbers<[1], [0], [0], [1], [0, 0, 1, 1], [], []>} : vector<64x4xf32>, vector<4x8xf32>, vector<64x8xf32> -> vector<64x8xf32>
    %49 = arith.addf %42, %48 : vector<64x8xf32>
    %c0_56 = arith.constant 0 : index
    %c3_57 = arith.constant 3 : index
    %c0_58 = arith.constant 0 : index
    %c1_59 = arith.constant 1 : index
    %c0_60 = arith.constant 0 : index
    %50 = vector.load %arg1[%c0_56, %c3_57, %c0_58, %c1_59, %c0_60] : memref<1x4x9x9x4xf32, #tpu.memory_space<vmem>>, vector<1x1x8x8x4xf32>
    %51 = vector.shape_cast %50 : vector<1x1x8x8x4xf32> to vector<8x8x4xf32>
    %52 = vector.shape_cast %51 : vector<8x8x4xf32> to vector<64x4xf32>
    %c7 = arith.constant 7 : index
    %c0_61 = arith.constant 0 : index
    %c0_62 = arith.constant 0 : index
    %53 = vector.load %arg2[%c7, %c0_61, %c0_62] : memref<16x4x8xf32, #tpu.memory_space<vmem>>, vector<1x4x8xf32>
    %54 = vector.shape_cast %53 : vector<1x4x8xf32> to vector<4x8xf32>
    %cst_63 = arith.constant dense<0.000000e+00> : vector<64x8xf32>
    %55 = tpu.matmul %52, %54, %cst_63 {dimension_numbers = #tpu.dot_dimension_numbers<[1], [0], [0], [1], [0, 0, 1, 1], [], []>} : vector<64x4xf32>, vector<4x8xf32>, vector<64x8xf32> -> vector<64x8xf32>
    %56 = arith.addf %49, %55 : vector<64x8xf32>
    %c0_64 = arith.constant 0 : index
    %c0_65 = arith.constant 0 : index
    %c1_66 = arith.constant 1 : index
    %c0_67 = arith.constant 0 : index
    %c0_68 = arith.constant 0 : index
    %57 = vector.load %arg1[%c0_64, %c0_65, %c1_66, %c0_67, %c0_68] : memref<1x4x9x9x4xf32, #tpu.memory_space<vmem>>, vector<1x1x8x8x4xf32>
    %58 = vector.shape_cast %57 : vector<1x1x8x8x4xf32> to vector<8x8x4xf32>
    %59 = vector.shape_cast %58 : vector<8x8x4xf32> to vector<64x4xf32>
    %c8 = arith.constant 8 : index
    %c0_69 = arith.constant 0 : index
    %c0_70 = arith.constant 0 : index
    %60 = vector.load %arg2[%c8, %c0_69, %c0_70] : memref<16x4x8xf32, #tpu.memory_space<vmem>>, vector<1x4x8xf32>
    %61 = vector.shape_cast %60 : vector<1x4x8xf32> to vector<4x8xf32>
    %cst_71 = arith.constant dense<0.000000e+00> : vector<64x8xf32>
    %62 = tpu.matmul %59, %61, %cst_71 {dimension_numbers = #tpu.dot_dimension_numbers<[1], [0], [0], [1], [0, 0, 1, 1], [], []>} : vector<64x4xf32>, vector<4x8xf32>, vector<64x8xf32> -> vector<64x8xf32>
    %63 = arith.addf %56, %62 : vector<64x8xf32>
    %c0_72 = arith.constant 0 : index
    %c1_73 = arith.constant 1 : index
    %c1_74 = arith.constant 1 : index
    %c0_75 = arith.constant 0 : index
    %c0_76 = arith.constant 0 : index
    %64 = vector.load %arg1[%c0_72, %c1_73, %c1_74, %c0_75, %c0_76] : memref<1x4x9x9x4xf32, #tpu.memory_space<vmem>>, vector<1x1x8x8x4xf32>
    %65 = vector.shape_cast %64 : vector<1x1x8x8x4xf32> to vector<8x8x4xf32>
    %66 = vector.shape_cast %65 : vector<8x8x4xf32> to vector<64x4xf32>
    %c9 = arith.constant 9 : index
    %c0_77 = arith.constant 0 : index
    %c0_78 = arith.constant 0 : index
    %67 = vector.load %arg2[%c9, %c0_77, %c0_78] : memref<16x4x8xf32, #tpu.memory_space<vmem>>, vector<1x4x8xf32>
    %68 = vector.shape_cast %67 : vector<1x4x8xf32> to vector<4x8xf32>
    %cst_79 = arith.constant dense<0.000000e+00> : vector<64x8xf32>
    %69 = tpu.matmul %66, %68, %cst_79 {dimension_numbers = #tpu.dot_dimension_numbers<[1], [0], [0], [1], [0, 0, 1, 1], [], []>} : vector<64x4xf32>, vector<4x8xf32>, vector<64x8xf32> -> vector<64x8xf32>
    %70 = arith.addf %63, %69 : vector<64x8xf32>
    %c0_80 = arith.constant 0 : index
    %c0_81 = arith.constant 0 : index
    %c1_82 = arith.constant 1 : index
    %c1_83 = arith.constant 1 : index
    %c0_84 = arith.constant 0 : index
    %71 = vector.load %arg1[%c0_80, %c0_81, %c1_82, %c1_83, %c0_84] : memref<1x4x9x9x4xf32, #tpu.memory_space<vmem>>, vector<1x1x8x8x4xf32>
    %72 = vector.shape_cast %71 : vector<1x1x8x8x4xf32> to vector<8x8x4xf32>
    %73 = vector.shape_cast %72 : vector<8x8x4xf32> to vector<64x4xf32>
    %c10 = arith.constant 10 : index
    %c0_85 = arith.constant 0 : index
    %c0_86 = arith.constant 0 : index
    %74 = vector.load %arg2[%c10, %c0_85, %c0_86] : memref<16x4x8xf32, #tpu.memory_space<vmem>>, vector<1x4x8xf32>
    %75 = vector.shape_cast %74 : vector<1x4x8xf32> to vector<4x8xf32>
    %cst_87 = arith.constant dense<0.000000e+00> : vector<64x8xf32>
    %76 = tpu.matmul %73, %75, %cst_87 {dimension_numbers = #tpu.dot_dimension_numbers<[1], [0], [0], [1], [0, 0, 1, 1], [], []>} : vector<64x4xf32>, vector<4x8xf32>, vector<64x8xf32> -> vector<64x8xf32>
    %77 = arith.addf %70, %76 : vector<64x8xf32>
    %c0_88 = arith.constant 0 : index
    %c1_89 = arith.constant 1 : index
    %c1_90 = arith.constant 1 : index
    %c1_91 = arith.constant 1 : index
    %c0_92 = arith.constant 0 : index
    %78 = vector.load %arg1[%c0_88, %c1_89, %c1_90, %c1_91, %c0_92] : memref<1x4x9x9x4xf32, #tpu.memory_space<vmem>>, vector<1x1x8x8x4xf32>
    %79 = vector.shape_cast %78 : vector<1x1x8x8x4xf32> to vector<8x8x4xf32>
    %80 = vector.shape_cast %79 : vector<8x8x4xf32> to vector<64x4xf32>
    %c11 = arith.constant 11 : index
    %c0_93 = arith.constant 0 : index
    %c0_94 = arith.constant 0 : index
    %81 = vector.load %arg2[%c11, %c0_93, %c0_94] : memref<16x4x8xf32, #tpu.memory_space<vmem>>, vector<1x4x8xf32>
    %82 = vector.shape_cast %81 : vector<1x4x8xf32> to vector<4x8xf32>
    %cst_95 = arith.constant dense<0.000000e+00> : vector<64x8xf32>
    %83 = tpu.matmul %80, %82, %cst_95 {dimension_numbers = #tpu.dot_dimension_numbers<[1], [0], [0], [1], [0, 0, 1, 1], [], []>} : vector<64x4xf32>, vector<4x8xf32>, vector<64x8xf32> -> vector<64x8xf32>
    %84 = arith.addf %77, %83 : vector<64x8xf32>
    %c0_96 = arith.constant 0 : index
    %c2_97 = arith.constant 2 : index
    %c1_98 = arith.constant 1 : index
    %c0_99 = arith.constant 0 : index
    %c0_100 = arith.constant 0 : index
    %85 = vector.load %arg1[%c0_96, %c2_97, %c1_98, %c0_99, %c0_100] : memref<1x4x9x9x4xf32, #tpu.memory_space<vmem>>, vector<1x1x8x8x4xf32>
    %86 = vector.shape_cast %85 : vector<1x1x8x8x4xf32> to vector<8x8x4xf32>
    %87 = vector.shape_cast %86 : vector<8x8x4xf32> to vector<64x4xf32>
    %c12 = arith.constant 12 : index
    %c0_101 = arith.constant 0 : index
    %c0_102 = arith.constant 0 : index
    %88 = vector.load %arg2[%c12, %c0_101, %c0_102] : memref<16x4x8xf32, #tpu.memory_space<vmem>>, vector<1x4x8xf32>
    %89 = vector.shape_cast %88 : vector<1x4x8xf32> to vector<4x8xf32>
    %cst_103 = arith.constant dense<0.000000e+00> : vector<64x8xf32>
    %90 = tpu.matmul %87, %89, %cst_103 {dimension_numbers = #tpu.dot_dimension_numbers<[1], [0], [0], [1], [0, 0, 1, 1], [], []>} : vector<64x4xf32>, vector<4x8xf32>, vector<64x8xf32> -> vector<64x8xf32>
    %91 = arith.addf %84, %90 : vector<64x8xf32>
    %c0_104 = arith.constant 0 : index
    %c3_105 = arith.constant 3 : index
    %c1_106 = arith.constant 1 : index
    %c0_107 = arith.constant 0 : index
    %c0_108 = arith.constant 0 : index
    %92 = vector.load %arg1[%c0_104, %c3_105, %c1_106, %c0_107, %c0_108] : memref<1x4x9x9x4xf32, #tpu.memory_space<vmem>>, vector<1x1x8x8x4xf32>
    %93 = vector.shape_cast %92 : vector<1x1x8x8x4xf32> to vector<8x8x4xf32>
    %94 = vector.shape_cast %93 : vector<8x8x4xf32> to vector<64x4xf32>
    %c13 = arith.constant 13 : index
    %c0_109 = arith.constant 0 : index
    %c0_110 = arith.constant 0 : index
    %95 = vector.load %arg2[%c13, %c0_109, %c0_110] : memref<16x4x8xf32, #tpu.memory_space<vmem>>, vector<1x4x8xf32>
    %96 = vector.shape_cast %95 : vector<1x4x8xf32> to vector<4x8xf32>
    %cst_111 = arith.constant dense<0.000000e+00> : vector<64x8xf32>
    %97 = tpu.matmul %94, %96, %cst_111 {dimension_numbers = #tpu.dot_dimension_numbers<[1], [0], [0], [1], [0, 0, 1, 1], [], []>} : vector<64x4xf32>, vector<4x8xf32>, vector<64x8xf32> -> vector<64x8xf32>
    %98 = arith.addf %91, %97 : vector<64x8xf32>
    %c0_112 = arith.constant 0 : index
    %c2_113 = arith.constant 2 : index
    %c1_114 = arith.constant 1 : index
    %c1_115 = arith.constant 1 : index
    %c0_116 = arith.constant 0 : index
    %99 = vector.load %arg1[%c0_112, %c2_113, %c1_114, %c1_115, %c0_116] : memref<1x4x9x9x4xf32, #tpu.memory_space<vmem>>, vector<1x1x8x8x4xf32>
    %100 = vector.shape_cast %99 : vector<1x1x8x8x4xf32> to vector<8x8x4xf32>
    %101 = vector.shape_cast %100 : vector<8x8x4xf32> to vector<64x4xf32>
    %c14 = arith.constant 14 : index
    %c0_117 = arith.constant 0 : index
    %c0_118 = arith.constant 0 : index
    %102 = vector.load %arg2[%c14, %c0_117, %c0_118] : memref<16x4x8xf32, #tpu.memory_space<vmem>>, vector<1x4x8xf32>
    %103 = vector.shape_cast %102 : vector<1x4x8xf32> to vector<4x8xf32>
    %cst_119 = arith.constant dense<0.000000e+00> : vector<64x8xf32>
    %104 = tpu.matmul %101, %103, %cst_119 {dimension_numbers = #tpu.dot_dimension_numbers<[1], [0], [0], [1], [0, 0, 1, 1], [], []>} : vector<64x4xf32>, vector<4x8xf32>, vector<64x8xf32> -> vector<64x8xf32>
    %105 = arith.addf %98, %104 : vector<64x8xf32>
    %c0_120 = arith.constant 0 : index
    %c3_121 = arith.constant 3 : index
    %c1_122 = arith.constant 1 : index
    %c1_123 = arith.constant 1 : index
    %c0_124 = arith.constant 0 : index
    %106 = vector.load %arg1[%c0_120, %c3_121, %c1_122, %c1_123, %c0_124] : memref<1x4x9x9x4xf32, #tpu.memory_space<vmem>>, vector<1x1x8x8x4xf32>
    %107 = vector.shape_cast %106 : vector<1x1x8x8x4xf32> to vector<8x8x4xf32>
    %108 = vector.shape_cast %107 : vector<8x8x4xf32> to vector<64x4xf32>
    %c15 = arith.constant 15 : index
    %c0_125 = arith.constant 0 : index
    %c0_126 = arith.constant 0 : index
    %109 = vector.load %arg2[%c15, %c0_125, %c0_126] : memref<16x4x8xf32, #tpu.memory_space<vmem>>, vector<1x4x8xf32>
    %110 = vector.shape_cast %109 : vector<1x4x8xf32> to vector<4x8xf32>
    %cst_127 = arith.constant dense<0.000000e+00> : vector<64x8xf32>
    %111 = tpu.matmul %108, %110, %cst_127 {dimension_numbers = #tpu.dot_dimension_numbers<[1], [0], [0], [1], [0, 0, 1, 1], [], []>} : vector<64x4xf32>, vector<4x8xf32>, vector<64x8xf32> -> vector<64x8xf32>
    %112 = arith.addf %105, %111 : vector<64x8xf32>
    %c0_128 = arith.constant 0 : index
    %c0_129 = arith.constant 0 : index
    %c0_130 = arith.constant 0 : index
    %113 = vector.load %arg3[%c0_128, %c0_129, %c0_130] : memref<1x64x8xf32, #tpu.memory_space<vmem>>, vector<1x64x8xf32>
    %114 = vector.shape_cast %113 : vector<1x64x8xf32> to vector<64x8xf32>
    %115 = vector.shape_cast %112 : vector<64x8xf32> to vector<1x64x8xf32>
    tpu.vector_store %arg3[%c0_128, %c0_129, %c0_130], %115 {strides = array<i32>} : memref<1x64x8xf32, #tpu.memory_space<vmem>>, vector<1x64x8xf32>,
    %cst_131 = arith.constant dense<0.000000e+00> : vector<8xf32>
    %116 = vector.multi_reduction <add>, %112, %cst_131 [0] : vector<64x8xf32> to vector<8xf32>
    %117 = vector.shape_cast %116 : vector<8xf32> to vector<1x8xf32>
    %cst_132 = arith.constant 1.562500e-02 : f32
    %118 = vector.broadcast %cst_132 : f32 to vector<1x8xf32>
    %119 = arith.mulf %117, %118 : vector<1x8xf32>
    %120 = vector.broadcast %119 : vector<1x8xf32> to vector<64x8xf32>
    %121 = arith.subf %112, %120 : vector<64x8xf32>
    %c0_133 = arith.constant 0 : index
    %c0_134 = arith.constant 0 : index
    %c0_135 = arith.constant 0 : index
    %122 = vector.load %arg4[%c0_133, %c0_134, %c0_135] : memref<1x2x8xf32, #tpu.memory_space<vmem>>, vector<1x1x8xf32>
    %123 = vector.shape_cast %122 : vector<1x1x8xf32> to vector<1x8xf32>
    %124 = vector.shape_cast %117 : vector<1x8xf32> to vector<1x1x8xf32>
    tpu.vector_store %arg4[%c0_133, %c0_134, %c0_135], %124 {strides = array<i32>} : memref<1x2x8xf32, #tpu.memory_space<vmem>>, vector<1x1x8xf32>,
    %125 = arith.mulf %121, %121 : vector<64x8xf32>
    %cst_136 = arith.constant dense<0.000000e+00> : vector<8xf32>
    %126 = vector.multi_reduction <add>, %125, %cst_136 [0] : vector<64x8xf32> to vector<8xf32>
    %127 = vector.shape_cast %126 : vector<8xf32> to vector<1x8xf32>
    %c0_137 = arith.constant 0 : index
    %c1_138 = arith.constant 1 : index
    %c0_139 = arith.constant 0 : index
    %128 = vector.load %arg4[%c0_137, %c1_138, %c0_139] : memref<1x2x8xf32, #tpu.memory_space<vmem>>, vector<1x1x8xf32>
    %129 = vector.shape_cast %128 : vector<1x1x8xf32> to vector<1x8xf32>
    %130 = vector.shape_cast %127 : vector<1x8xf32> to vector<1x1x8xf32>
    tpu.vector_store %arg4[%c0_137, %c1_138, %c0_139], %130 {strides = array<i32>} : memref<1x2x8xf32, #tpu.memory_space<vmem>>, vector<1x1x8xf32>,
    return
  }
  func.func @transform_0(%arg0: i32) -> (i32, i32, i32, i32, i32) {
    %c0_i32 = arith.constant 0 : i32
    %c0_i32_0 = arith.constant 0 : i32
    %c0_i32_1 = arith.constant 0 : i32
    %c0_i32_2 = arith.constant 0 : i32
    %c0_i32_3 = arith.constant 0 : i32
    return %arg0, %c0_i32, %c0_i32_0, %c0_i32_1, %c0_i32_2 : i32, i32, i32, i32, i32
  }
  func.func @transform_1(%arg0: i32) -> (i32, i32, i32) {
    %c0_i32 = arith.constant 0 : i32
    %c0_i32_0 = arith.constant 0 : i32
    %c0_i32_1 = arith.constant 0 : i32
    %c0_i32_2 = arith.constant 0 : i32
    return %c0_i32, %c0_i32_0, %c0_i32_1 : i32, i32, i32
  }
  func.func @transform_2(%arg0: i32) -> (i32, i32, i32) {
    %c0_i32 = arith.constant 0 : i32
    %c0_i32_0 = arith.constant 0 : i32
    %c0_i32_1 = arith.constant 0 : i32
    return %arg0, %c0_i32, %c0_i32_0 : i32, i32, i32
  }
  func.func @transform_3(%arg0: i32) -> (i32, i32, i32) {
    %c0_i32 = arith.constant 0 : i32
    %c0_i32_0 = arith.constant 0 : i32
    %c0_i32_1 = arith.constant 0 : i32
    return %arg0, %c0_i32, %c0_i32_0 : i32, i32, i32
  }
}

module attributes {stable_mosaic.version = 11 : i64} {
  func.func @_bn_lrelu_kernel(%arg0: i32, %arg1: memref<1x8x64xf32, #tpu.memory_space<vmem>>, %arg2: memref<8x1xf32, #tpu.memory_space<vmem>>, %arg3: memref<8x1xf32, #tpu.memory_space<vmem>>, %arg4: memref<1x8x64xf32, #tpu.memory_space<vmem>>) attributes {dimension_semantics = [#tpu.dimension_semantics<parallel>], iteration_bounds = array<i64: 2>, scalar_prefetch = 0 : i64, scratch_operands = 0 : i64, tpu.core_type = #tpu.core_type<tc>, window_params = [{transform_indices = @transform_0, window_bounds = array<i64: 1, 8, 64>}, {pipeline_mode = #tpu.pipeline_mode<synchronous>, transform_indices = @transform_1, window_bounds = array<i64: 8, 1>}, {pipeline_mode = #tpu.pipeline_mode<synchronous>, transform_indices = @transform_2, window_bounds = array<i64: 8, 1>}, {transform_indices = @transform_3, window_bounds = array<i64: 1, 8, 64>}]} {
    %c0 = arith.constant 0 : index
    %c0_0 = arith.constant 0 : index
    %c0_1 = arith.constant 0 : index
    %0 = vector.load %arg1[%c0, %c0_0, %c0_1] : memref<1x8x64xf32, #tpu.memory_space<vmem>>, vector<1x8x64xf32>
    %1 = vector.shape_cast %0 : vector<1x8x64xf32> to vector<8x64xf32>
    %c0_2 = arith.constant 0 : index
    %c0_3 = arith.constant 0 : index
    %2 = vector.load %arg2[%c0_2, %c0_3] : memref<8x1xf32, #tpu.memory_space<vmem>>, vector<8x1xf32>
    %3 = vector.broadcast %2 : vector<8x1xf32> to vector<8x64xf32>
    %4 = arith.mulf %1, %3 : vector<8x64xf32>
    %c0_4 = arith.constant 0 : index
    %c0_5 = arith.constant 0 : index
    %5 = vector.load %arg3[%c0_4, %c0_5] : memref<8x1xf32, #tpu.memory_space<vmem>>, vector<8x1xf32>
    %6 = vector.broadcast %5 : vector<8x1xf32> to vector<8x64xf32>
    %7 = arith.addf %4, %6 : vector<8x64xf32>
    %cst = arith.constant 0.000000e+00 : f32
    %8 = vector.broadcast %cst : f32 to vector<8x64xf32>
    %9 = arith.cmpf oge, %7, %8 : vector<8x64xf32>
    %cst_6 = arith.constant 2.000000e-01 : f32
    %10 = vector.broadcast %cst_6 : f32 to vector<8x64xf32>
    %11 = arith.mulf %10, %7 : vector<8x64xf32>
    %12 = arith.select %9, %7, %11 : vector<8x64xi1>, vector<8x64xf32>
    %c0_7 = arith.constant 0 : index
    %c0_8 = arith.constant 0 : index
    %c0_9 = arith.constant 0 : index
    %13 = vector.load %arg4[%c0_7, %c0_8, %c0_9] : memref<1x8x64xf32, #tpu.memory_space<vmem>>, vector<1x8x64xf32>
    %14 = vector.shape_cast %13 : vector<1x8x64xf32> to vector<8x64xf32>
    %15 = vector.shape_cast %12 : vector<8x64xf32> to vector<1x8x64xf32>
    tpu.vector_store %arg4[%c0_7, %c0_8, %c0_9], %15 {strides = array<i32>} : memref<1x8x64xf32, #tpu.memory_space<vmem>>, vector<1x8x64xf32>,
    return
  }
  func.func @transform_0(%arg0: i32) -> (i32, i32, i32) {
    %c0_i32 = arith.constant 0 : i32
    %c0_i32_0 = arith.constant 0 : i32
    %c0_i32_1 = arith.constant 0 : i32
    return %arg0, %c0_i32, %c0_i32_0 : i32, i32, i32
  }
  func.func @transform_1(%arg0: i32) -> (i32, i32) {
    %c0_i32 = arith.constant 0 : i32
    %c0_i32_0 = arith.constant 0 : i32
    %c0_i32_1 = arith.constant 0 : i32
    return %c0_i32, %c0_i32_0 : i32, i32
  }
  func.func @transform_2(%arg0: i32) -> (i32, i32) {
    %c0_i32 = arith.constant 0 : i32
    %c0_i32_0 = arith.constant 0 : i32
    %c0_i32_1 = arith.constant 0 : i32
    return %c0_i32, %c0_i32_0 : i32, i32
  }
  func.func @transform_3(%arg0: i32) -> (i32, i32, i32) {
    %c0_i32 = arith.constant 0 : i32
    %c0_i32_0 = arith.constant 0 : i32
    %c0_i32_1 = arith.constant 0 : i32
    return %arg0, %c0_i32, %c0_i32_0 : i32, i32, i32
  }
}

</mosaic_0001>

<llo_original>
// kernel: cnn_block_forward.3
$region0: #{cnn_block_forward.3}
  #allocation0 [shape = 'u32[]', space=smem, size = 0x4, offset = 0x4, fixed_abs, tag = 'smem constant byte address 0x4 - core index']
  #allocation1 [shape = 'u32[144,128]{1,0:T(1,128)}', space=vmem, size = 0x12000, scoped, tag = 'internal scratch']
  %s0 = inlined_call_operand.vmem [shape: f32[2,8,64], index: 0, kind: input, shape index: {}]
  %s1 = inlined_call_operand.vmem [shape: f32[8,1], index: 1, kind: input, shape index: {}]
  %s2 = inlined_call_operand.vmem [shape: f32[8,1], index: 2, kind: input, shape index: {}]
  %s3 = inlined_call_operand.vmem [shape: f32[2,8,64], index: 3, kind: output, shape index: {}]
  %s4 = sld [smem:[#allocation0]]
  $region45: #{cnn_block_forward.3} parent=0
    _
  %s6 = ssub.s32 1, %s4
  %s7 = scalar_select 0, %s6, %s4
  loop: start=0, step=1, limit=4
  $region2: #{cnn_block_forward.3} parent=0 // loop_pre_header
    _
  $region3: #{cnn_block_forward.3} parent=0 // loop_header
    %s9 = sphi 0, %s13
    %p10 = scmp.ge.s32.totalorder %s9, 4
    %s19 = sphi 0, %s21
    %s22 = sphi 0, %s19
    %s23 = sphi 0, %s22
    %s39 = sphi 0, %s23
    %s43 = sphi 0, %s43
    %s45 = sphi 0, %s43
    %s46 = sphi 0, %s45
    %s60 = sphi 0, %s46
    %s64 = sphi 0, %s64
    %s66 = sphi 0, %s64
    %s67 = sphi 0, %s66
    %s81 = sphi 0, %s67
    %s87 = sphi 0, %s89
    %s90 = sphi 0, %s87
    %s91 = sphi 0, %s90
    %s107 = sphi 0, %s91
  $region4: #{cnn_block_forward.3} parent=0 // loop_header_branch
    %12 = sbr.rel (%p10) target = $region8
  $region5: #{cnn_block_forward.3} parent=0 // loop_body
    %s14 = ssub.s32 %s9, 1
    %s15 = ssub.s32 %s9, 2
    %s16 = sadd.s32 %s9, 1
    %s17 = ssub.s32 %s9, %s16
    %p18 = scmp.eq.s32.totalorder %s17, 0
    %s20 = sadd.s32 %s19, 1
    %s21 = scalar_select %p18, %s19, %s20
    %p24 = pneg %p18
    %p25 = scmp.eq.s32.totalorder %s9, 1
    %p26 = por %p24, %p25
    %p27 = scmp.ne.s32.totalorder %s19, %s22
    %p28 = scmp.eq.s32.totalorder %s9, 0
    %p29 = por %p27, %p28
    %p30 = scmp.ne.s32.totalorder %s19, %s22
    %p31 = scmp.eq.s32.totalorder %s14, 1
    %p32 = por %p30, %p31
    %p33 = scmp.ne.s32.totalorder %s22, %s23
    %p34 = scmp.eq.s32.totalorder %s14, 0
    %p35 = por %p33, %p34
    %p36 = scmp.ne.s32.totalorder %s22, %s23
    %p37 = scmp.eq.s32.totalorder %s15, 1
    %p38 = por %p36, %p37
    %p40 = scmp.ne.s32.totalorder %s23, %s39
    %p41 = scmp.eq.s32.totalorder %s15, 0
    %p42 = por %p40, %p41
    %s44 = sadd.s32 %s43, 1
    %p47 = scmp.eq.s32.totalorder %s9, 1
    %p48 = scmp.ne.s32.totalorder %s43, %s45
    %p49 = scmp.eq.s32.totalorder %s9, 0
    %p50 = por %p48, %p49
    %p51 = scmp.ne.s32.totalorder %s43, %s45
    %p52 = scmp.eq.s32.totalorder %s14, 1
    %p53 = por %p51, %p52
    %p54 = scmp.ne.s32.totalorder %s45, %s46
    %p55 = scmp.eq.s32.totalorder %s14, 0
    %p56 = por %p54, %p55
    %p57 = scmp.ne.s32.totalorder %s45, %s46
    %p58 = scmp.eq.s32.totalorder %s15, 1
    %p59 = por %p57, %p58
    %p61 = scmp.ne.s32.totalorder %s46, %s60
    %p62 = scmp.eq.s32.totalorder %s15, 0
    %p63 = por %p61, %p62
    %s65 = sadd.s32 %s64, 1
    %p68 = scmp.eq.s32.totalorder %s9, 1
    %p69 = scmp.ne.s32.totalorder %s64, %s66
    %p70 = scmp.eq.s32.totalorder %s9, 0
    %p71 = por %p69, %p70
    %p72 = scmp.ne.s32.totalorder %s64, %s66
    %p73 = scmp.eq.s32.totalorder %s14, 1
    %p74 = por %p72, %p73
    %p75 = scmp.ne.s32.totalorder %s66, %s67
    %p76 = scmp.eq.s32.totalorder %s14, 0
    %p77 = por %p75, %p76
    %p78 = scmp.ne.s32.totalorder %s66, %s67
    %p79 = scmp.eq.s32.totalorder %s15, 1
    %p80 = por %p78, %p79
    %p82 = scmp.ne.s32.totalorder %s67, %s81
    %p83 = scmp.eq.s32.totalorder %s15, 0
    %p84 = por %p82, %p83
    %s85 = ssub.s32 %s9, %s16
    %p86 = scmp.eq.s32.totalorder %s85, 0
    %s88 = sadd.s32 %s87, 1
    %s89 = scalar_select %p86, %s87, %s88
    %p92 = pneg %p86
    %p93 = scmp.eq.s32.totalorder %s9, 1
    %p94 = por %p92, %p93
    %p95 = scmp.ne.s32.totalorder %s87, %s90
    %p96 = scmp.eq.s32.totalorder %s9, 0
    %p97 = por %p95, %p96
    %p98 = scmp.ne.s32.totalorder %s87, %s90
    %p99 = scmp.eq.s32.totalorder %s14, 1
    %p100 = por %p98, %p99
    %p101 = scmp.ne.s32.totalorder %s90, %s91
    %p102 = scmp.eq.s32.totalorder %s14, 0
    %p103 = por %p101, %p102
    %p104 = scmp.ne.s32.totalorder %s90, %s91
    %p105 = scmp.eq.s32.totalorder %s15, 1
    %p106 = por %p104, %p105
    %p108 = scmp.ne.s32.totalorder %s91, %s107
    %p109 = scmp.eq.s32.totalorder %s15, 0
    %p110 = por %p108, %p109
    %p111 = scmp.le.s32.totalorder 1, %s9
    %p112 = scmp.lt.s32.totalorder %s9, 3
    %p113 = pnand %p111, %p112
    %p114 = pneg %p113
    // Predicated region
    $region9: #{cnn_block_forward.3} parent=5 // pred_check
      _
    $region10: #{cnn_block_forward.3} parent=5 // pred_check_branch
      %116 = sbr.rel (%p113) target = $region12
    $region11: #{cnn_block_forward.3} parent=5 // pred_region
      %s117 = ssub.s32 %s9, 1
      // Predicated region
      $region13: #{cnn_block_forward.3} parent=11 // pred_check
        %p118 = pneg %p56
      $region14: #{cnn_block_forward.3} parent=11 // pred_check_branch
        %120 = sbr.rel (%p118) target = $region16
      $region15: #{cnn_block_forward.3} parent=11 // pred_region
        _
      $region16: #{cnn_block_forward.3} parent=11 // pred_fallthru
        _
      // Predicated region
      $region17: #{cnn_block_forward.3} parent=11 // pred_check
        %p121 = pneg %p77
      $region18: #{cnn_block_forward.3} parent=11 // pred_check_branch
        %123 = sbr.rel (%p121) target = $region20
      $region19: #{cnn_block_forward.3} parent=11 // pred_region
        _
      $region20: #{cnn_block_forward.3} parent=11 // pred_fallthru
        _
    $region12: #{cnn_block_forward.3} parent=5 // pred_fallthru
      _
    %p124 = scmp.lt.s32.totalorder %s9, 2
    // Predicated region
    $region21: #{cnn_block_forward.3} parent=5 // pred_check
      %p125 = pneg %p124
    $region22: #{cnn_block_forward.3} parent=5 // pred_check_branch
      %127 = sbr.rel (%p125) target = $region24
    $region23: #{cnn_block_forward.3} parent=5 // pred_region
      // Predicated region
      $region25: #{cnn_block_forward.3} parent=23 // pred_check
        %p128 = pneg %p29
      $region26: #{cnn_block_forward.3} parent=23 // pred_check_branch
        %130 = sbr.rel (%p128) target = $region28
      $region27: #{cnn_block_forward.3} parent=23 // pred_region
        %p131 = scmp.lt.s32.totalorder %s9, 1
        %s132 = scalar_select %p131, %s9, 1
        %s133 = smul.addr %s132, 8
        %s134 = scalar_lea.vmem %s0, %s133
      $region28: #{cnn_block_forward.3} parent=23 // pred_fallthru
        _
    $region24: #{cnn_block_forward.3} parent=5 // pred_fallthru
      _
    %p135 = scmp.le.s32.totalorder 1, %s9
    %p136 = scmp.lt.s32.totalorder %s9, 3
    %p137 = pnand %p135, %p136
    %p138 = pneg %p137
    // Predicated region
    $region29: #{cnn_block_forward.3} parent=5 // pred_check
      _
    $region30: #{cnn_block_forward.3} parent=5 // pred_check_branch
      %140 = sbr.rel (%p137) target = $region32
    $region31: #{cnn_block_forward.3} parent=5 // pred_region
      %s141 = ssub.s32 %s9, 1
      %p142 = scmp.lt.s32.totalorder %s14, 1
      %s143 = scalar_select %p142, %s14, 1
      %s144 = smul.addr %s143, 8
      %s145 = scalar_lea.vmem %s0, %s144
      %p146 = pneg %p35
      %p147 = pneg %p32
      %p148 = pneg %p56
      %p149 = pneg %p53
      %p150 = pneg %p77
      %p151 = pneg %p74
      %p152 = pneg %p103
      %p153 = pneg %p100
      %p154 = scmp.lt.s32.totalorder %s14, 1
      %s155 = scalar_select %p154, %s14, 1
      %s156 = smul.addr %s155, 8
      %s157 = scalar_lea.vmem %s3, %s156
      %p158 = scmp.lt.s32.totalorder %s14, 1
      %s159 = scalar_select %p158, %s14, 1
      %s160 = smul.addr %s159, 8
      %s161 = scalar_lea.vmem %s0, %s160
      %p162 = scmp.lt.s32.totalorder %s14, 1
      %s163 = scalar_select %p162, %s14, 1
      %s164 = smul.addr %s163, 8
      %s165 = scalar_lea.vmem %s3, %s164
      %v166 = vld [vmem:[%s161] sm:$0xff]
      %v167 = vld [vmem:[%s1] sm:$0xff]
      %169 = vset.pattern.permute.xlu0 0
      %170 = vperm.xlu0 %169, %v167
      %v171 = vpop.permute.xlu0 %170
      %v173 = vmul.f32 %v166, %v171
      %v174 = vld [vmem:[%s2] sm:$0xff]
      %176 = vset.pattern.permute.xlu0 0
      %177 = vperm.xlu0 %176, %v174
      %v178 = vpop.permute.xlu0 %177
      %v180 = vadd.f32 %v173, %v178
      %vm181 = vcmp.ge.f32.partialorder %v180, 0.0
      %v182 = vmul.f32 %v180, 0.2
      %v183 = vsel %vm181, %v180, %v182
      %vm184 = vcmask 523264
      %185 = vst.msk [vmem:[%s165] sm:$0xff] %vm184, %v183
      %p186 = scmp.lt.s32.totalorder %s14, 1
      %s187 = scalar_select %p186, %s14, 1
      %s188 = smul.addr %s187, 8
      %s189 = scalar_lea.vmem %s3, %s188
      // Predicated region
      $region33: #{cnn_block_forward.3} parent=31 // pred_check
        %p190 = pneg %p100
      $region34: #{cnn_block_forward.3} parent=31 // pred_check_branch
        %192 = sbr.rel (%p190) target = $region36
      $region35: #{cnn_block_forward.3} parent=31 // pred_region
        _
      $region36: #{cnn_block_forward.3} parent=31 // pred_fallthru
        _
    $region32: #{cnn_block_forward.3} parent=5 // pred_fallthru
      _
    %p193 = scmp.le.s32.totalorder 2, %s9
    // Predicated region
    $region37: #{cnn_block_forward.3} parent=5 // pred_check
      %p194 = pneg %p193
    $region38: #{cnn_block_forward.3} parent=5 // pred_check_branch
      %196 = sbr.rel (%p194) target = $region40
    $region39: #{cnn_block_forward.3} parent=5 // pred_region
      %s197 = ssub.s32 %s9, 2
      // Predicated region
      $region41: #{cnn_block_forward.3} parent=39 // pred_check
        %p198 = pneg %p106
      $region42: #{cnn_block_forward.3} parent=39 // pred_check_branch
        %200 = sbr.rel (%p198) target = $region44
      $region43: #{cnn_block_forward.3} parent=39 // pred_region
        %p201 = scmp.lt.s32.totalorder %s15, 1
        %s202 = scalar_select %p201, %s15, 1
        %s203 = smul.addr %s202, 8
        %s204 = scalar_lea.vmem %s3, %s203
      $region44: #{cnn_block_forward.3} parent=39 // pred_fallthru
        _
    $region40: #{cnn_block_forward.3} parent=5 // pred_fallthru
      _
  $region6: #{cnn_block_forward.3} parent=0 // loop_footer
    %s13 = sadd.s32 1, %s9
  $region7: #{cnn_block_forward.3} parent=0 // loop_footer_branch
    %8 = sbr.rel target = $region3
  $region8: #{cnn_block_forward.3} parent=0 // loop_exit
    _

// kernel: cnn_block_forward.2
$region0: #{cnn_block_forward.2}
  #allocation0 [shape = 'u32[]', space=smem, size = 0x4, offset = 0x4, fixed_abs, tag = 'smem constant byte address 0x4 - core index']
  #allocation1 [shape = 'u32[144,128]{1,0:T(1,128)}', space=vmem, size = 0x12000, scoped, tag = 'internal scratch']
  %s0 = inlined_call_operand.vmem [shape: f32[2,4,9,9,4], index: 0, kind: input, shape index: {}]
  %s1 = inlined_call_operand.vmem [shape: f32[16,4,8], index: 1, kind: input, shape index: {}]
  %s2 = inlined_call_operand.vmem [shape: f32[2,64,8], index: 2, kind: output, shape index: {0}]
  %s3 = inlined_call_operand.vmem [shape: f32[2,2,8], index: 3, kind: output, shape index: {1}]
  %4 = xla_tuple %s2, %s3
  %s5 = sld [smem:[#allocation0]]
  $region49: #{cnn_block_forward.2} parent=0
    _
  %s7 = ssub.s32 1, %s5
  %s8 = scalar_select 0, %s7, %s5
  loop: start=0, step=1, limit=4
  $region2: #{cnn_block_forward.2} parent=0 // loop_pre_header
    _
  $region3: #{cnn_block_forward.2} parent=0 // loop_header
    %s10 = sphi 0, %s14
    %p11 = scmp.ge.s32.totalorder %s10, 4
    %s20 = sphi 0, %s22
    %s23 = sphi 0, %s20
    %s24 = sphi 0, %s23
    %s40 = sphi 0, %s24
    %s44 = sphi 0, %s44
    %s46 = sphi 0, %s44
    %s47 = sphi 0, %s46
    %s61 = sphi 0, %s47
    %s67 = sphi 0, %s69
    %s70 = sphi 0, %s67
    %s71 = sphi 0, %s70
    %s87 = sphi 0, %s71
    %s93 = sphi 0, %s95
    %s96 = sphi 0, %s93
    %s97 = sphi 0, %s96
    %s113 = sphi 0, %s97
  $region4: #{cnn_block_forward.2} parent=0 // loop_header_branch
    %13 = sbr.rel (%p11) target = $region8
  $region5: #{cnn_block_forward.2} parent=0 // loop_body
    %s15 = ssub.s32 %s10, 1
    %s16 = ssub.s32 %s10, 2
    %s17 = sadd.s32 %s10, 1
    %s18 = ssub.s32 %s10, %s17
    %p19 = scmp.eq.s32.totalorder %s18, 0
    %s21 = sadd.s32 %s20, 1
    %s22 = scalar_select %p19, %s20, %s21
    %p25 = pneg %p19
    %p26 = scmp.eq.s32.totalorder %s10, 1
    %p27 = por %p25, %p26
    %p28 = scmp.ne.s32.totalorder %s20, %s23
    %p29 = scmp.eq.s32.totalorder %s10, 0
    %p30 = por %p28, %p29
    %p31 = scmp.ne.s32.totalorder %s20, %s23
    %p32 = scmp.eq.s32.totalorder %s15, 1
    %p33 = por %p31, %p32
    %p34 = scmp.ne.s32.totalorder %s23, %s24
    %p35 = scmp.eq.s32.totalorder %s15, 0
    %p36 = por %p34, %p35
    %p37 = scmp.ne.s32.totalorder %s23, %s24
    %p38 = scmp.eq.s32.totalorder %s16, 1
    %p39 = por %p37, %p38
    %p41 = scmp.ne.s32.totalorder %s24, %s40
    %p42 = scmp.eq.s32.totalorder %s16, 0
    %p43 = por %p41, %p42
    %s45 = sadd.s32 %s44, 1
    %p48 = scmp.eq.s32.totalorder %s10, 1
    %p49 = scmp.ne.s32.totalorder %s44, %s46
    %p50 = scmp.eq.s32.totalorder %s10, 0
    %p51 = por %p49, %p50
    %p52 = scmp.ne.s32.totalorder %s44, %s46
    %p53 = scmp.eq.s32.totalorder %s15, 1
    %p54 = por %p52, %p53
    %p55 = scmp.ne.s32.totalorder %s46, %s47
    %p56 = scmp.eq.s32.totalorder %s15, 0
    %p57 = por %p55, %p56
    %p58 = scmp.ne.s32.totalorder %s46, %s47
    %p59 = scmp.eq.s32.totalorder %s16, 1
    %p60 = por %p58, %p59
    %p62 = scmp.ne.s32.totalorder %s47, %s61
    %p63 = scmp.eq.s32.totalorder %s16, 0
    %p64 = por %p62, %p63
    %s65 = ssub.s32 %s10, %s17
    %p66 = scmp.eq.s32.totalorder %s65, 0
    %s68 = sadd.s32 %s67, 1
    %s69 = scalar_select %p66, %s67, %s68
    %p72 = pneg %p66
    %p73 = scmp.eq.s32.totalorder %s10, 1
    %p74 = por %p72, %p73
    %p75 = scmp.ne.s32.totalorder %s67, %s70
    %p76 = scmp.eq.s32.totalorder %s10, 0
    %p77 = por %p75, %p76
    %p78 = scmp.ne.s32.totalorder %s67, %s70
    %p79 = scmp.eq.s32.totalorder %s15, 1
    %p80 = por %p78, %p79
    %p81 = scmp.ne.s32.totalorder %s70, %s71
    %p82 = scmp.eq.s32.totalorder %s15, 0
    %p83 = por %p81, %p82
    %p84 = scmp.ne.s32.totalorder %s70, %s71
    %p85 = scmp.eq.s32.totalorder %s16, 1
    %p86 = por %p84, %p85
    %p88 = scmp.ne.s32.totalorder %s71, %s87
    %p89 = scmp.eq.s32.totalorder %s16, 0
    %p90 = por %p88, %p89
    %s91 = ssub.s32 %s10, %s17
    %p92 = scmp.eq.s32.totalorder %s91, 0
    %s94 = sadd.s32 %s93, 1
    %s95 = scalar_select %p92, %s93, %s94
    %p98 = pneg %p92
    %p99 = scmp.eq.s32.totalorder %s10, 1
    %p100 = por %p98, %p99
    %p101 = scmp.ne.s32.totalorder %s93, %s96
    %p102 = scmp.eq.s32.totalorder %s10, 0
    %p103 = por %p101, %p102
    %p104 = scmp.ne.s32.totalorder %s93, %s96
    %p105 = scmp.eq.s32.totalorder %s15, 1
    %p106 = por %p104, %p105
    %p107 = scmp.ne.s32.totalorder %s96, %s97
    %p108 = scmp.eq.s32.totalorder %s15, 0
    %p109 = por %p107, %p108
    %p110 = scmp.ne.s32.totalorder %s96, %s97
    %p111 = scmp.eq.s32.totalorder %s16, 1
    %p112 = por %p110, %p111
    %p114 = scmp.ne.s32.totalorder %s97, %s113
    %p115 = scmp.eq.s32.totalorder %s16, 0
    %p116 = por %p114, %p115
    %p117 = scmp.le.s32.totalorder 1, %s10
    %p118 = scmp.lt.s32.totalorder %s10, 3
    %p119 = pnand %p117, %p118
    %p120 = pneg %p119
    // Predicated region
    $region9: #{cnn_block_forward.2} parent=5 // pred_check
      _
    $region10: #{cnn_block_forward.2} parent=5 // pred_check_branch
      %122 = sbr.rel (%p119) target = $region12
    $region11: #{cnn_block_forward.2} parent=5 // pred_region
      %s123 = ssub.s32 %s10, 1
      // Predicated region
      $region13: #{cnn_block_forward.2} parent=11 // pred_check
        %p124 = pneg %p57
      $region14: #{cnn_block_forward.2} parent=11 // pred_check_branch
        %126 = sbr.rel (%p124) target = $region16
      $region15: #{cnn_block_forward.2} parent=11 // pred_region
        _
      $region16: #{cnn_block_forward.2} parent=11 // pred_fallthru
        _
    $region12: #{cnn_block_forward.2} parent=5 // pred_fallthru
      _
    %p127 = scmp.lt.s32.totalorder %s10, 2
    // Predicated region
    $region17: #{cnn_block_forward.2} parent=5 // pred_check
      %p128 = pneg %p127
    $region18: #{cnn_block_forward.2} parent=5 // pred_check_branch
      %130 = sbr.rel (%p128) target = $region20
    $region19: #{cnn_block_forward.2} parent=5 // pred_region
      // Predicated region
      $region21: #{cnn_block_forward.2} parent=19 // pred_check
        %p131 = pneg %p30
      $region22: #{cnn_block_forward.2} parent=19 // pred_check_branch
        %133 = sbr.rel (%p131) target = $region24
      $region23: #{cnn_block_forward.2} parent=19 // pred_region
        %p134 = scmp.lt.s32.totalorder %s10, 1
        %s135 = scalar_select %p134, %s10, 1
        %s136 = smul.addr %s135, 72
        %s137 = smul.addr %s136, 8
        %s138 = scalar_lea.vmem %s0, %s137
      $region24: #{cnn_block_forward.2} parent=19 // pred_fallthru
        _
    $region20: #{cnn_block_forward.2} parent=5 // pred_fallthru
      _
    %p139 = scmp.le.s32.totalorder 1, %s10
    %p140 = scmp.lt.s32.totalorder %s10, 3
    %p141 = pnand %p139, %p140
    %p142 = pneg %p141
    // Predicated region
    $region25: #{cnn_block_forward.2} parent=5 // pred_check
      _
    $region26: #{cnn_block_forward.2} parent=5 // pred_check_branch
      %144 = sbr.rel (%p141) target = $region28
    $region27: #{cnn_block_forward.2} parent=5 // pred_region
      %s145 = ssub.s32 %s10, 1
      %p146 = scmp.lt.s32.totalorder %s15, 1
      %s147 = scalar_select %p146, %s15, 1
      %s148 = smul.addr %s147, 72
      %s149 = smul.addr %s148, 8
      %s150 = scalar_lea.vmem %s0, %s149
      %p151 = pneg %p36
      %p152 = pneg %p33
      %p153 = pneg %p57
      %p154 = pneg %p54
      %p155 = pneg %p83
      %p156 = pneg %p80
      %p157 = scmp.lt.s32.totalorder %s15, 1
      %s158 = scalar_select %p157, %s15, 1
      %s159 = smul.addr %s158, 8
      %s160 = smul.addr %s159, 8
      %s161 = scalar_lea.vmem %s2, %s160
      %p162 = pneg %p109
      %p163 = pneg %p106
      %p164 = scmp.lt.s32.totalorder %s15, 1
      %s165 = scalar_select %p164, %s15, 1
      %s166 = smul.addr %s165, 2
      %s167 = scalar_lea.vmem %s3, %s166
      %p168 = scmp.lt.s32.totalorder %s15, 1
      %s169 = scalar_select %p168, %s15, 1
      %s170 = smul.addr %s169, 72
      %s171 = smul.addr %s170, 8
      %s172 = scalar_lea.vmem %s0, %s171
      %p173 = scmp.lt.s32.totalorder %s15, 1
      %s174 = scalar_select %p173, %s15, 1
      %s175 = smul.addr %s174, 8
      %s176 = smul.addr %s175, 8
      %s177 = scalar_lea.vmem %s2, %s176
      %p178 = scmp.lt.s32.totalorder %s15, 1
      %s179 = scalar_select %p178, %s15, 1
      %s180 = smul.addr %s179, 2
      %s181 = scalar_lea.vmem %s3, %s180
      %v182 = vld [vmem:[%s172] sm:$0xff]
      %v183 = vld [vmem:[%s172 + $0x10] sm:$0xff]
      %v184 = vld [vmem:[%s172 + $0x20] sm:$0xff]
      %v185 = vld [vmem:[%s172 + $0x30] sm:$0xff]
      %v186 = vld [vmem:[%s172 + $0x40] sm:$0xff]
      %v187 = vld [vmem:[%s172 + $0x50] sm:$0xff]
      %v188 = vld [vmem:[%s172 + $0x60] sm:$0xff]
      %v189 = vld [vmem:[%s172 + $0x70] sm:$0xff]
      %v190 = vld [vmem:[%s1] sm:$0xf]
      %s191 = scalar_lea.vmem %s172, 144
      %v192 = vld [vmem:[%s191] sm:$0xff]
      %v193 = vld [vmem:[%s191 + $0x10] sm:$0xff]
      %v194 = vld [vmem:[%s191 + $0x20] sm:$0xff]
      %v195 = vld [vmem:[%s191 + $0x30] sm:$0xff]
      %v196 = vld [vmem:[%s191 + $0x40] sm:$0xff]
      %v197 = vld [vmem:[%s191 + $0x50] sm:$0xff]
      %v198 = vld [vmem:[%s191 + $0x60] sm:$0xff]
      %v199 = vld [vmem:[%s191 + $0x70] sm:$0xff]
      %s200 = scalar_lea.vmem %s1, 4
      %v201 = vld [vmem:[%s200] sm:$0xf]
      %vm202 = vcmask 31744
      %v204 = vsel %vm202, %v192, 0
      %v207 = vsel %vm202, %v193, 0
      %v210 = vsel %vm202, %v194, 0
      %v213 = vsel %vm202, %v195, 0
      %v216 = vsel %vm202, %v196, 0
      %v219 = vsel %vm202, %v197, 0
      %v222 = vsel %vm202, %v198, 0
      %v225 = vsel %vm202, %v199, 0
      %vm227 = vcmask 1043456
      %v229 = vsel %vm227, %v201, 0
      %231 = vmatprep.subr.mxu0 0.0
      %232 = vmatpush1.msra.mxu0 0.0
      %233 = vmatprep.subr.mxu0 0.0
      %234 = vmatpush1.msra.mxu0 0.0
      %235 = vmatprep.subr.mxu0 0.0
      %236 = vmatpush1.msra.mxu0 0.0
      %237 = vmatprep.subr.mxu0 0.0
      %238 = vmatpush1.msra.mxu0 0.0
      %239 = vmatprep.subr.mxu0 0.0
      %240 = vmatpush1.msra.mxu0 0.0
      %241 = vmatprep.subr.mxu0 0.0
      %242 = vmatpush1.msra.mxu0 0.0
      %243 = vmatprep.subr.mxu0 0.0
      %244 = vmatpush1.msra.mxu0 0.0
      %245 = vmatprep.subr.mxu0 0.0
      %246 = vmatpush1.msra.mxu0 0.0
      %247 = vmatprep.subr.mxu0 0.0
      %248 = vmatpush1.msra.mxu0 0.0
      %249 = vmatprep.subr.mxu0 0.0
      %250 = vmatpush1.msra.mxu0 0.0
      %251 = vmatprep.subr.mxu0 0.0
      %252 = vmatpush1.msra.mxu0 0.0
      %253 = vmatprep.subr.mxu0 0.0
      %254 = vmatpush1.msra.mxu0 0.0
      %255 = vmatprep.subr.mxu0 0.0
      %256 = vmatpush1.msra.mxu0 0.0
      %257 = vmatprep.subr.mxu0 0.0
      %258 = vmatpush1.msra.mxu0 0.0
      %259 = vmatprep.subr.mxu0 0.0
      %260 = vmatpush1.msra.mxu0 0.0
      %261 = vmatprep.subr.mxu0 0.0
      %262 = vmatpush1.msra.mxu0 %v229
      %263 = vmatprep.subr.mxu0 0.0
      %264 = vmatpush2.msra.mxu0 0.0
      %265 = vmatprep.subr.mxu0 0.0
      %266 = vmatpush2.msra.mxu0 0.0
      %267 = vmatprep.subr.mxu0 0.0
      %268 = vmatpush2.msra.mxu0 0.0
      %269 = vmatprep.subr.mxu0 0.0
      %270 = vmatpush2.msra.mxu0 0.0
      %271 = vmatprep.subr.mxu0 0.0
      %272 = vmatpush2.msra.mxu0 0.0
      %273 = vmatprep.subr.mxu0 0.0
      %274 = vmatpush2.msra.mxu0 0.0
      %275 = vmatprep.subr.mxu0 0.0
      %276 = vmatpush2.msra.mxu0 0.0
      %277 = vmatprep.subr.mxu0 0.0
      %278 = vmatpush2.msra.mxu0 0.0
      %279 = vmatprep.subr.mxu0 0.0
      %280 = vmatpush2.msra.mxu0 0.0
      %281 = vmatprep.subr.mxu0 0.0
      %282 = vmatpush2.msra.mxu0 0.0
      %283 = vmatprep.subr.mxu0 0.0
      %284 = vmatpush2.msra.mxu0 0.0
      %285 = vmatprep.subr.mxu0 0.0
      %286 = vmatpush2.msra.mxu0 0.0
      %287 = vmatprep.subr.mxu0 0.0
      %288 = vmatpush2.msra.mxu0 0.0
      %289 = vmatprep.subr.mxu0 0.0
      %290 = vmatpush2.msra.mxu0 0.0
      %291 = vmatprep.subr.mxu0 0.0
      %292 = vmatpush2.msra.mxu0 0.0
      %293 = vmatprep.subr.mxu0 0.0
      %294 = vmatpush2.msra.mxu0 0.0
      %295 = vmatprep.mubr.f32.mxu0 0.0
      %296 = vmatmul.mubr.f32.gmra.mxu0 %v204
      %v297 = vpop.f32.mrf.mxu0
      %v298 = vadd.f32 0.0, %v297
      %v299 = vpop.f32.mrf.mxu0
      %300 = vmatprep.mubr.f32.mxu0 0.0
      %301 = vmatmul.mubr.f32.gmra.mxu0 %v207
      %v302 = vpop.f32.mrf.mxu0
      %v303 = vadd.f32 0.0, %v302
      %v304 = vpop.f32.mrf.mxu0
      %305 = vmatprep.mubr.f32.mxu0 0.0
      %306 = vmatmul.mubr.f32.gmra.mxu0 %v210
      %v307 = vpop.f32.mrf.mxu0
      %v308 = vadd.f32 0.0, %v307
      %v309 = vpop.f32.mrf.mxu0
      %310 = vmatprep.mubr.f32.mxu0 0.0
      %311 = vmatmul.mubr.f32.gmra.mxu0 %v213
      %v312 = vpop.f32.mrf.mxu0
      %v313 = vadd.f32 0.0, %v312
      %v314 = vpop.f32.mrf.mxu0
      %315 = vmatprep.mubr.f32.mxu0 0.0
      %316 = vmatmul.mubr.f32.gmra.mxu0 %v216
      %v317 = vpop.f32.mrf.mxu0
      %v318 = vadd.f32 0.0, %v317
      %v319 = vpop.f32.mrf.mxu0
      %320 = vmatprep.mubr.f32.mxu0 0.0
      %321 = vmatmul.mubr.f32.gmra.mxu0 %v219
      %v322 = vpop.f32.mrf.mxu0
      %v323 = vadd.f32 0.0, %v322
      %v324 = vpop.f32.mrf.mxu0
      %325 = vmatprep.mubr.f32.mxu0 0.0
      %326 = vmatmul.mubr.f32.gmra.mxu0 %v222
      %v327 = vpop.f32.mrf.mxu0
      %v328 = vadd.f32 0.0, %v327
      %v329 = vpop.f32.mrf.mxu0
      %330 = vmatprep.mubr.f32.mxu0 0.0
      %331 = vmatmul.mubr.f32.gmra.mxu0 %v225
      %v332 = vpop.f32.mrf.mxu0
      %v333 = vadd.f32 0.0, %v332
      %v334 = vpop.f32.mrf.mxu0
      %335 = vdwg.mxu0
      %v337 = vsel %vm202, %v182, 0
      %v340 = vsel %vm202, %v183, 0
      %v343 = vsel %vm202, %v184, 0
      %v346 = vsel %vm202, %v185, 0
      %v349 = vsel %vm202, %v186, 0
      %v352 = vsel %vm202, %v187, 0
      %v355 = vsel %vm202, %v188, 0
      %v358 = vsel %vm202, %v189, 0
      %v361 = vsel %vm227, %v190, 0
      %363 = vmatprep.subr.mxu0 0.0
      %364 = vmatpush1.msra.mxu0 0.0
      %365 = vmatprep.subr.mxu0 0.0
      %366 = vmatpush1.msra.mxu0 0.0
      %367 = vmatprep.subr.mxu0 0.0
      %368 = vmatpush1.msra.mxu0 0.0
      %369 = vmatprep.subr.mxu0 0.0
      %370 = vmatpush1.msra.mxu0 0.0
      %371 = vmatprep.subr.mxu0 0.0
      %372 = vmatpush1.msra.mxu0 0.0
      %373 = vmatprep.subr.mxu0 0.0
      %374 = vmatpush1.msra.mxu0 0.0
      %375 = vmatprep.subr.mxu0 0.0
      %376 = vmatpush1.msra.mxu0 0.0
      %377 = vmatprep.subr.mxu0 0.0
      %378 = vmatpush1.msra.mxu0 0.0
      %379 = vmatprep.subr.mxu0 0.0
      %380 = vmatpush1.msra.mxu0 0.0
      %381 = vmatprep.subr.mxu0 0.0
      %382 = vmatpush1.msra.mxu0 0.0
      %383 = vmatprep.subr.mxu0 0.0
      %384 = vmatpush1.msra.mxu0 0.0
      %385 = vmatprep.subr.mxu0 0.0
      %386 = vmatpush1.msra.mxu0 0.0
      %387 = vmatprep.subr.mxu0 0.0
      %388 = vmatpush1.msra.mxu0 0.0
      %389 = vmatprep.subr.mxu0 0.0
      %390 = vmatpush1.msra.mxu0 0.0
      %391 = vmatprep.subr.mxu0 0.0
      %392 = vmatpush1.msra.mxu0 0.0
      %393 = vmatprep.subr.mxu0 0.0
      %394 = vmatpush1.msra.mxu0 %v361
      %395 = vmatprep.subr.mxu0 0.0
      %396 = vmatpush2.msra.mxu0 0.0
      %397 = vmatprep.subr.mxu0 0.0
      %398 = vmatpush2.msra.mxu0 0.0
      %399 = vmatprep.subr.mxu0 0.0
      %400 = vmatpush2.msra.mxu0 0.0
      %401 = vmatprep.subr.mxu0 0.0
      %402 = vmatpush2.msra.mxu0 0.0
      %403 = vmatprep.subr.mxu0 0.0
      %404 = vmatpush2.msra.mxu0 0.0
      %405 = vmatprep.subr.mxu0 0.0
      %406 = vmatpush2.msra.mxu0 0.0
      %407 = vmatprep.subr.mxu0 0.0
      %408 = vmatpush2.msra.mxu0 0.0
      %409 = vmatprep.subr.mxu0 0.0
      %410 = vmatpush2.msra.mxu0 0.0
      %411 = vmatprep.subr.mxu0 0.0
      %412 = vmatpush2.msra.mxu0 0.0
      %413 = vmatprep.subr.mxu0 0.0
      %414 = vmatpush2.msra.mxu0 0.0
      %415 = vmatprep.subr.mxu0 0.0
      %416 = vmatpush2.msra.mxu0 0.0
      %417 = vmatprep.subr.mxu0 0.0
      %418 = vmatpush2.msra.mxu0 0.0
      %419 = vmatprep.subr.mxu0 0.0
      %420 = vmatpush2.msra.mxu0 0.0
      %421 = vmatprep.subr.mxu0 0.0
      %422 = vmatpush2.msra.mxu0 0.0
      %423 = vmatprep.subr.mxu0 0.0
      %424 = vmatpush2.msra.mxu0 0.0
      %425 = vmatprep.subr.mxu0 0.0
      %426 = vmatpush2.msra.mxu0 0.0
      %427 = vmatprep.mubr.f32.mxu0 0.0
      %428 = vmatmul.mubr.f32.gmra.mxu0 %v337
      %v429 = vpop.f32.mrf.mxu0
      %v430 = vadd.f32 %v298, %v429
      %v431 = vpop.f32.mrf.mxu0
      %432 = vmatprep.mubr.f32.mxu0 0.0
      %433 = vmatmul.mubr.f32.gmra.mxu0 %v340
      %v434 = vpop.f32.mrf.mxu0
      %v435 = vadd.f32 %v303, %v434
      %v436 = vpop.f32.mrf.mxu0
      %437 = vmatprep.mubr.f32.mxu0 0.0
      %438 = vmatmul.mubr.f32.gmra.mxu0 %v343
      %v439 = vpop.f32.mrf.mxu0
      %v440 = vadd.f32 %v308, %v439
      %v441 = vpop.f32.mrf.mxu0
      %442 = vmatprep.mubr.f32.mxu0 0.0
      %443 = vmatmul.mubr.f32.gmra.mxu0 %v346
      %v444 = vpop.f32.mrf.mxu0
      %v445 = vadd.f32 %v313, %v444
      %v446 = vpop.f32.mrf.mxu0
      %447 = vmatprep.mubr.f32.mxu0 0.0
      %448 = vmatmul.mubr.f32.gmra.mxu0 %v349
      %v449 = vpop.f32.mrf.mxu0
      %v450 = vadd.f32 %v318, %v449
      %v451 = vpop.f32.mrf.mxu0
      %452 = vmatprep.mubr.f32.mxu0 0.0
      %453 = vmatmul.mubr.f32.gmra.mxu0 %v352
      %v454 = vpop.f32.mrf.mxu0
      %v455 = vadd.f32 %v323, %v454
      %v456 = vpop.f32.mrf.mxu0
      %457 = vmatprep.mubr.f32.mxu0 0.0
      %458 = vmatmul.mubr.f32.gmra.mxu0 %v355
      %v459 = vpop.f32.mrf.mxu0
      %v460 = vadd.f32 %v328, %v459
      %v461 = vpop.f32.mrf.mxu0
      %462 = vmatprep.mubr.f32.mxu0 0.0
      %463 = vmatmul.mubr.f32.gmra.mxu0 %v358
      %v464 = vpop.f32.mrf.mxu0
      %v465 = vadd.f32 %v333, %v464
      %v466 = vpop.f32.mrf.mxu0
      %467 = vdwg.mxu0
      %v468 = vld [vmem:[%s172 + $0x1] sm:$0xff]
      %v469 = vld [vmem:[%s172 + $0x11] sm:$0xff]
      %v470 = vld [vmem:[%s172 + $0x21] sm:$0xff]
      %v471 = vld [vmem:[%s172 + $0x31] sm:$0xff]
      %v472 = vld [vmem:[%s172 + $0x41] sm:$0xff]
      %v473 = vld [vmem:[%s172 + $0x51] sm:$0xff]
      %v474 = vld [vmem:[%s172 + $0x61] sm:$0xff]
      %v475 = vld [vmem:[%s172 + $0x71] sm:$0xff]
      %s476 = scalar_lea.vmem %s1, 8
      %v477 = vld [vmem:[%s476] sm:$0xf]
      %v479 = vsel %vm202, %v468, 0
      %v482 = vsel %vm202, %v469, 0
      %v485 = vsel %vm202, %v470, 0
      %v488 = vsel %vm202, %v471, 0
      %v491 = vsel %vm202, %v472, 0
      %v494 = vsel %vm202, %v473, 0
      %v497 = vsel %vm202, %v474, 0
      %v500 = vsel %vm202, %v475, 0
      %v503 = vsel %vm227, %v477, 0
      %505 = vmatprep.subr.mxu0 0.0
      %506 = vmatpush1.msra.mxu0 0.0
      %507 = vmatprep.subr.mxu0 0.0
      %508 = vmatpush1.msra.mxu0 0.0
      %509 = vmatprep.subr.mxu0 0.0
      %510 = vmatpush1.msra.mxu0 0.0
      %511 = vmatprep.subr.mxu0 0.0
      %512 = vmatpush1.msra.mxu0 0.0
      %513 = vmatprep.subr.mxu0 0.0
      %514 = vmatpush1.msra.mxu0 0.0
      %515 = vmatprep.subr.mxu0 0.0
      %516 = vmatpush1.msra.mxu0 0.0
      %517 = vmatprep.subr.mxu0 0.0
      %518 = vmatpush1.msra.mxu0 0.0
      %519 = vmatprep.subr.mxu0 0.0
      %520 = vmatpush1.msra.mxu0 0.0
      %521 = vmatprep.subr.mxu0 0.0
      %522 = vmatpush1.msra.mxu0 0.0
      %523 = vmatprep.subr.mxu0 0.0
      %524 = vmatpush1.msra.mxu0 0.0
      %525 = vmatprep.subr.mxu0 0.0
      %526 = vmatpush1.msra.mxu0 0.0
      %527 = vmatprep.subr.mxu0 0.0
      %528 = vmatpush1.msra.mxu0 0.0
      %529 = vmatprep.subr.mxu0 0.0
      %530 = vmatpush1.msra.mxu0 0.0
      %531 = vmatprep.subr.mxu0 0.0
      %532 = vmatpush1.msra.mxu0 0.0
      %533 = vmatprep.subr.mxu0 0.0
      %534 = vmatpush1.msra.mxu0 0.0
      %535 = vmatprep.subr.mxu0 0.0
      %536 = vmatpush1.msra.mxu0 %v503
      %537 = vmatprep.subr.mxu0 0.0
      %538 = vmatpush2.msra.mxu0 0.0
      %539 = vmatprep.subr.mxu0 0.0
      %540 = vmatpush2.msra.mxu0 0.0
      %541 = vmatprep.subr.mxu0 0.0
      %542 = vmatpush2.msra.mxu0 0.0
      %543 = vmatprep.subr.mxu0 0.0
      %544 = vmatpush2.msra.mxu0 0.0
      %545 = vmatprep.subr.mxu0 0.0
      %546 = vmatpush2.msra.mxu0 0.0
      %547 = vmatprep.subr.mxu0 0.0
      %548 = vmatpush2.msra.mxu0 0.0
      %549 = vmatprep.subr.mxu0 0.0
      %550 = vmatpush2.msra.mxu0 0.0
      %551 = vmatprep.subr.mxu0 0.0
      %552 = vmatpush2.msra.mxu0 0.0
      %553 = vmatprep.subr.mxu0 0.0
      %554 = vmatpush2.msra.mxu0 0.0
      %555 = vmatprep.subr.mxu0 0.0
      %556 = vmatpush2.msra.mxu0 0.0
      %557 = vmatprep.subr.mxu0 0.0
      %558 = vmatpush2.msra.mxu0 0.0
      %559 = vmatprep.subr.mxu0 0.0
      %560 = vmatpush2.msra.mxu0 0.0
      %561 = vmatprep.subr.mxu0 0.0
      %562 = vmatpush2.msra.mxu0 0.0
      %563 = vmatprep.subr.mxu0 0.0
      %564 = vmatpush2.msra.mxu0 0.0
      %565 = vmatprep.subr.mxu0 0.0
      %566 = vmatpush2.msra.mxu0 0.0
      %567 = vmatprep.subr.mxu0 0.0
      %568 = vmatpush2.msra.mxu0 0.0
      %569 = vmatprep.mubr.f32.mxu0 0.0
      %570 = vmatmul.mubr.f32.gmra.mxu0 %v479
      %v571 = vpop.f32.mrf.mxu0
      %v572 = vadd.f32 0.0, %v571
      %v573 = vpop.f32.mrf.mxu0
      %574 = vmatprep.mubr.f32.mxu0 0.0
      %575 = vmatmul.mubr.f32.gmra.mxu0 %v482
      %v576 = vpop.f32.mrf.mxu0
      %v577 = vadd.f32 0.0, %v576
      %v578 = vpop.f32.mrf.mxu0
      %579 = vmatprep.mubr.f32.mxu0 0.0
      %580 = vmatmul.mubr.f32.gmra.mxu0 %v485
      %v581 = vpop.f32.mrf.mxu0
      %v582 = vadd.f32 0.0, %v581
      %v583 = vpop.f32.mrf.mxu0
      %584 = vmatprep.mubr.f32.mxu0 0.0
      %585 = vmatmul.mubr.f32.gmra.mxu0 %v488
      %v586 = vpop.f32.mrf.mxu0
      %v587 = vadd.f32 0.0, %v586
      %v588 = vpop.f32.mrf.mxu0
      %589 = vmatprep.mubr.f32.mxu0 0.0
      %590 = vmatmul.mubr.f32.gmra.mxu0 %v491
      %v591 = vpop.f32.mrf.mxu0
      %v592 = vadd.f32 0.0, %v591
      %v593 = vpop.f32.mrf.mxu0
      %594 = vmatprep.mubr.f32.mxu0 0.0
      %595 = vmatmul.mubr.f32.gmra.mxu0 %v494
      %v596 = vpop.f32.mrf.mxu0
      %v597 = vadd.f32 0.0, %v596
      %v598 = vpop.f32.mrf.mxu0
      %599 = vmatprep.mubr.f32.mxu0 0.0
      %600 = vmatmul.mubr.f32.gmra.mxu0 %v497
      %v601 = vpop.f32.mrf.mxu0
      %v602 = vadd.f32 0.0, %v601
      %v603 = vpop.f32.mrf.mxu0
      %604 = vmatprep.mubr.f32.mxu0 0.0
      %605 = vmatmul.mubr.f32.gmra.mxu0 %v500
      %v606 = vpop.f32.mrf.mxu0
      %v607 = vadd.f32 0.0, %v606
      %v608 = vpop.f32.mrf.mxu0
      %609 = vdwg.mxu0
      %v610 = vadd.f32 %v430, %v572
      %v611 = vadd.f32 %v435, %v577
      %v612 = vadd.f32 %v440, %v582
      %v613 = vadd.f32 %v445, %v587
      %v614 = vadd.f32 %v450, %v592
      %v615 = vadd.f32 %v455, %v597
      %v616 = vadd.f32 %v460, %v602
      %v617 = vadd.f32 %v465, %v607
      %v618 = vld [vmem:[%s191 + $0x1] sm:$0xff]
      %v619 = vld [vmem:[%s191 + $0x11] sm:$0xff]
      %v620 = vld [vmem:[%s191 + $0x21] sm:$0xff]
      %v621 = vld [vmem:[%s191 + $0x31] sm:$0xff]
      %v622 = vld [vmem:[%s191 + $0x41] sm:$0xff]
      %v623 = vld [vmem:[%s191 + $0x51] sm:$0xff]
      %v624 = vld [vmem:[%s191 + $0x61] sm:$0xff]
      %v625 = vld [vmem:[%s191 + $0x71] sm:$0xff]
      %s626 = scalar_lea.vmem %s1, 12
      %v627 = vld [vmem:[%s626] sm:$0xf]
      %v629 = vsel %vm202, %v618, 0
      %v632 = vsel %vm202, %v619, 0
      %v635 = vsel %vm202, %v620, 0
      %v638 = vsel %vm202, %v621, 0
      %v641 = vsel %vm202, %v622, 0
      %v644 = vsel %vm202, %v623, 0
      %v647 = vsel %vm202, %v624, 0
      %v650 = vsel %vm202, %v625, 0
      %v653 = vsel %vm227, %v627, 0
      %655 = vmatprep.subr.mxu0 0.0
      %656 = vmatpush1.msra.mxu0 0.0
      %657 = vmatprep.subr.mxu0 0.0
      %658 = vmatpush1.msra.mxu0 0.0
      %659 = vmatprep.subr.mxu0 0.0
      %660 = vmatpush1.msra.mxu0 0.0
      %661 = vmatprep.subr.mxu0 0.0
      %662 = vmatpush1.msra.mxu0 0.0
      %663 = vmatprep.subr.mxu0 0.0
      %664 = vmatpush1.msra.mxu0 0.0
      %665 = vmatprep.subr.mxu0 0.0
      %666 = vmatpush1.msra.mxu0 0.0
      %667 = vmatprep.subr.mxu0 0.0
      %668 = vmatpush1.msra.mxu0 0.0
      %669 = vmatprep.subr.mxu0 0.0
      %670 = vmatpush1.msra.mxu0 0.0
      %671 = vmatprep.subr.mxu0 0.0
      %672 = vmatpush1.msra.mxu0 0.0
      %673 = vmatprep.subr.mxu0 0.0
      %674 = vmatpush1.msra.mxu0 0.0
      %675 = vmatprep.subr.mxu0 0.0
      %676 = vmatpush1.msra.mxu0 0.0
      %677 = vmatprep.subr.mxu0 0.0
      %678 = vmatpush1.msra.mxu0 0.0
      %679 = vmatprep.subr.mxu0 0.0
      %680 = vmatpush1.msra.mxu0 0.0
      %681 = vmatprep.subr.mxu0 0.0
      %682 = vmatpush1.msra.mxu0 0.0
      %683 = vmatprep.subr.mxu0 0.0
      %684 = vmatpush1.msra.mxu0 0.0
      %685 = vmatprep.subr.mxu0 0.0
      %686 = vmatpush1.msra.mxu0 %v653
      %687 = vmatprep.subr.mxu0 0.0
      %688 = vmatpush2.msra.mxu0 0.0
      %689 = vmatprep.subr.mxu0 0.0
      %690 = vmatpush2.msra.mxu0 0.0
      %691 = vmatprep.subr.mxu0 0.0
      %692 = vmatpush2.msra.mxu0 0.0
      %693 = vmatprep.subr.mxu0 0.0
      %694 = vmatpush2.msra.mxu0 0.0
      %695 = vmatprep.subr.mxu0 0.0
      %696 = vmatpush2.msra.mxu0 0.0
      %697 = vmatprep.subr.mxu0 0.0
      %698 = vmatpush2.msra.mxu0 0.0
      %699 = vmatprep.subr.mxu0 0.0
      %700 = vmatpush2.msra.mxu0 0.0
      %701 = vmatprep.subr.mxu0 0.0
      %702 = vmatpush2.msra.mxu0 0.0
      %703 = vmatprep.subr.mxu0 0.0
      %704 = vmatpush2.msra.mxu0 0.0
      %705 = vmatprep.subr.mxu0 0.0
      %706 = vmatpush2.msra.mxu0 0.0
      %707 = vmatprep.subr.mxu0 0.0
      %708 = vmatpush2.msra.mxu0 0.0
      %709 = vmatprep.subr.mxu0 0.0
      %710 = vmatpush2.msra.mxu0 0.0
      %711 = vmatprep.subr.mxu0 0.0
      %712 = vmatpush2.msra.mxu0 0.0
      %713 = vmatprep.subr.mxu0 0.0
      %714 = vmatpush2.msra.mxu0 0.0
      %715 = vmatprep.subr.mxu0 0.0
      %716 = vmatpush2.msra.mxu0 0.0
      %717 = vmatprep.subr.mxu0 0.0
      %718 = vmatpush2.msra.mxu0 0.0
      %719 = vmatprep.mubr.f32.mxu0 0.0
      %720 = vmatmul.mubr.f32.gmra.mxu0 %v629
      %v721 = vpop.f32.mrf.mxu0
      %v722 = vadd.f32 0.0, %v721
      %v723 = vpop.f32.mrf.mxu0
      %724 = vmatprep.mubr.f32.mxu0 0.0
      %725 = vmatmul.mubr.f32.gmra.mxu0 %v632
      %v726 = vpop.f32.mrf.mxu0
      %v727 = vadd.f32 0.0, %v726
      %v728 = vpop.f32.mrf.mxu0
      %729 = vmatprep.mubr.f32.mxu0 0.0
      %730 = vmatmul.mubr.f32.gmra.mxu0 %v635
      %v731 = vpop.f32.mrf.mxu0
      %v732 = vadd.f32 0.0, %v731
      %v733 = vpop.f32.mrf.mxu0
      %734 = vmatprep.mubr.f32.mxu0 0.0
      %735 = vmatmul.mubr.f32.gmra.mxu0 %v638
      %v736 = vpop.f32.mrf.mxu0
      %v737 = vadd.f32 0.0, %v736
      %v738 = vpop.f32.mrf.mxu0
      %739 = vmatprep.mubr.f32.mxu0 0.0
      %740 = vmatmul.mubr.f32.gmra.mxu0 %v641
      %v741 = vpop.f32.mrf.mxu0
      %v742 = vadd.f32 0.0, %v741
      %v743 = vpop.f32.mrf.mxu0
      %744 = vmatprep.mubr.f32.mxu0 0.0
      %745 = vmatmul.mubr.f32.gmra.mxu0 %v644
      %v746 = vpop.f32.mrf.mxu0
      %v747 = vadd.f32 0.0, %v746
      %v748 = vpop.f32.mrf.mxu0
      %749 = vmatprep.mubr.f32.mxu0 0.0
      %750 = vmatmul.mubr.f32.gmra.mxu0 %v647
      %v751 = vpop.f32.mrf.mxu0
      %v752 = vadd.f32 0.0, %v751
      %v753 = vpop.f32.mrf.mxu0
      %754 = vmatprep.mubr.f32.mxu0 0.0
      %755 = vmatmul.mubr.f32.gmra.mxu0 %v650
      %v756 = vpop.f32.mrf.mxu0
      %v757 = vadd.f32 0.0, %v756
      %v758 = vpop.f32.mrf.mxu0
      %759 = vdwg.mxu0
      %v760 = vadd.f32 %v610, %v722
      %v761 = vadd.f32 %v611, %v727
      %v762 = vadd.f32 %v612, %v732
      %v763 = vadd.f32 %v613, %v737
      %v764 = vadd.f32 %v614, %v742
      %v765 = vadd.f32 %v615, %v747
      %v766 = vadd.f32 %v616, %v752
      %v767 = vadd.f32 %v617, %v757
      %s768 = scalar_lea.vmem %s172, 288
      %v769 = vld [vmem:[%s768] sm:$0xff]
      %v770 = vld [vmem:[%s768 + $0x10] sm:$0xff]
      %v771 = vld [vmem:[%s768 + $0x20] sm:$0xff]
      %v772 = vld [vmem:[%s768 + $0x30] sm:$0xff]
      %v773 = vld [vmem:[%s768 + $0x40] sm:$0xff]
      %v774 = vld [vmem:[%s768 + $0x50] sm:$0xff]
      %v775 = vld [vmem:[%s768 + $0x60] sm:$0xff]
      %v776 = vld [vmem:[%s768 + $0x70] sm:$0xff]
      %s777 = scalar_lea.vmem %s1, 16
      %v778 = vld [vmem:[%s777] sm:$0xf]
      %v780 = vsel %vm202, %v769, 0
      %v783 = vsel %vm202, %v770, 0
      %v786 = vsel %vm202, %v771, 0
      %v789 = vsel %vm202, %v772, 0
      %v792 = vsel %vm202, %v773, 0
      %v795 = vsel %vm202, %v774, 0
      %v798 = vsel %vm202, %v775, 0
      %v801 = vsel %vm202, %v776, 0
      %v804 = vsel %vm227, %v778, 0
      %806 = vmatprep.subr.mxu0 0.0
      %807 = vmatpush1.msra.mxu0 0.0
      %808 = vmatprep.subr.mxu0 0.0
      %809 = vmatpush1.msra.mxu0 0.0
      %810 = vmatprep.subr.mxu0 0.0
      %811 = vmatpush1.msra.mxu0 0.0
      %812 = vmatprep.subr.mxu0 0.0
      %813 = vmatpush1.msra.mxu0 0.0
      %814 = vmatprep.subr.mxu0 0.0
      %815 = vmatpush1.msra.mxu0 0.0
      %816 = vmatprep.subr.mxu0 0.0
      %817 = vmatpush1.msra.mxu0 0.0
      %818 = vmatprep.subr.mxu0 0.0
      %819 = vmatpush1.msra.mxu0 0.0
      %820 = vmatprep.subr.mxu0 0.0
      %821 = vmatpush1.msra.mxu0 0.0
      %822 = vmatprep.subr.mxu0 0.0
      %823 = vmatpush1.msra.mxu0 0.0
      %824 = vmatprep.subr.mxu0 0.0
      %825 = vmatpush1.msra.mxu0 0.0
      %826 = vmatprep.subr.mxu0 0.0
      %827 = vmatpush1.msra.mxu0 0.0
      %828 = vmatprep.subr.mxu0 0.0
      %829 = vmatpush1.msra.mxu0 0.0
      %830 = vmatprep.subr.mxu0 0.0
      %831 = vmatpush1.msra.mxu0 0.0
      %832 = vmatprep.subr.mxu0 0.0
      %833 = vmatpush1.msra.mxu0 0.0
      %834 = vmatprep.subr.mxu0 0.0
      %835 = vmatpush1.msra.mxu0 0.0
      %836 = vmatprep.subr.mxu0 0.0
      %837 = vmatpush1.msra.mxu0 %v804
      %838 = vmatprep.subr.mxu0 0.0
      %839 = vmatpush2.msra.mxu0 0.0
      %840 = vmatprep.subr.mxu0 0.0
      %841 = vmatpush2.msra.mxu0 0.0
      %842 = vmatprep.subr.mxu0 0.0
      %843 = vmatpush2.msra.mxu0 0.0
      %844 = vmatprep.subr.mxu0 0.0
      %845 = vmatpush2.msra.mxu0 0.0
      %846 = vmatprep.subr.mxu0 0.0
      %847 = vmatpush2.msra.mxu0 0.0
      %848 = vmatprep.subr.mxu0 0.0
      %849 = vmatpush2.msra.mxu0 0.0
      %850 = vmatprep.subr.mxu0 0.0
      %851 = vmatpush2.msra.mxu0 0.0
      %852 = vmatprep.subr.mxu0 0.0
      %853 = vmatpush2.msra.mxu0 0.0
      %854 = vmatprep.subr.mxu0 0.0
      %855 = vmatpush2.msra.mxu0 0.0
      %856 = vmatprep.subr.mxu0 0.0
      %857 = vmatpush2.msra.mxu0 0.0
      %858 = vmatprep.subr.mxu0 0.0
      %859 = vmatpush2.msra.mxu0 0.0
      %860 = vmatprep.subr.mxu0 0.0
      %861 = vmatpush2.msra.mxu0 0.0
      %862 = vmatprep.subr.mxu0 0.0
      %863 = vmatpush2.msra.mxu0 0.0
      %864 = vmatprep.subr.mxu0 0.0
      %865 = vmatpush2.msra.mxu0 0.0
      %866 = vmatprep.subr.mxu0 0.0
      %867 = vmatpush2.msra.mxu0 0.0
      %868 = vmatprep.subr.mxu0 0.0
      %869 = vmatpush2.msra.mxu0 0.0
      %870 = vmatprep.mubr.f32.mxu0 0.0
      %871 = vmatmul.mubr.f32.gmra.mxu0 %v780
      %v872 = vpop.f32.mrf.mxu0
      %v873 = vadd.f32 0.0, %v872
      %v874 = vpop.f32.mrf.mxu0
      %875 = vmatprep.mubr.f32.mxu0 0.0
      %876 = vmatmul.mubr.f32.gmra.mxu0 %v783
      %v877 = vpop.f32.mrf.mxu0
      %v878 = vadd.f32 0.0, %v877
      %v879 = vpop.f32.mrf.mxu0
      %880 = vmatprep.mubr.f32.mxu0 0.0
      %881 = vmatmul.mubr.f32.gmra.mxu0 %v786
      %v882 = vpop.f32.mrf.mxu0
      %v883 = vadd.f32 0.0, %v882
      %v884 = vpop.f32.mrf.mxu0
      %885 = vmatprep.mubr.f32.mxu0 0.0
      %886 = vmatmul.mubr.f32.gmra.mxu0 %v789
      %v887 = vpop.f32.mrf.mxu0
      %v888 = vadd.f32 0.0, %v887
      %v889 = vpop.f32.mrf.mxu0
      %890 = vmatprep.mubr.f32.mxu0 0.0
      %891 = vmatmul.mubr.f32.gmra.mxu0 %v792
      %v892 = vpop.f32.mrf.mxu0
      %v893 = vadd.f32 0.0, %v892
      %v894 = vpop.f32.mrf.mxu0
      %895 = vmatprep.mubr.f32.mxu0 0.0
      %896 = vmatmul.mubr.f32.gmra.mxu0 %v795
      %v897 = vpop.f32.mrf.mxu0
      %v898 = vadd.f32 0.0, %v897
      %v899 = vpop.f32.mrf.mxu0
      %900 = vmatprep.mubr.f32.mxu0 0.0
      %901 = vmatmul.mubr.f32.gmra.mxu0 %v798
      %v902 = vpop.f32.mrf.mxu0
      %v903 = vadd.f32 0.0, %v902
      %v904 = vpop.f32.mrf.mxu0
      %905 = vmatprep.mubr.f32.mxu0 0.0
      %906 = vmatmul.mubr.f32.gmra.mxu0 %v801
      %v907 = vpop.f32.mrf.mxu0
      %v908 = vadd.f32 0.0, %v907
      %v909 = vpop.f32.mrf.mxu0
      %910 = vdwg.mxu0
      %v911 = vadd.f32 %v760, %v873
      %v912 = vadd.f32 %v761, %v878
      %v913 = vadd.f32 %v762, %v883
      %v914 = vadd.f32 %v763, %v888
      %v915 = vadd.f32 %v764, %v893
      %v916 = vadd.f32 %v765, %v898
      %v917 = vadd.f32 %v766, %v903
      %v918 = vadd.f32 %v767, %v908
      %s919 = scalar_lea.vmem %s172, 432
      %v920 = vld [vmem:[%s919] sm:$0xff]
      %v921 = vld [vmem:[%s919 + $0x10] sm:$0xff]
      %v922 = vld [vmem:[%s919 + $0x20] sm:$0xff]
      %v923 = vld [vmem:[%s919 + $0x30] sm:$0xff]
      %v924 = vld [vmem:[%s919 + $0x40] sm:$0xff]
      %v925 = vld [vmem:[%s919 + $0x50] sm:$0xff]
      %v926 = vld [vmem:[%s919 + $0x60] sm:$0xff]
      %v927 = vld [vmem:[%s919 + $0x70] sm:$0xff]
      %s928 = scalar_lea.vmem %s1, 20
      %v929 = vld [vmem:[%s928] sm:$0xf]
      %v931 = vsel %vm202, %v920, 0
      %v934 = vsel %vm202, %v921, 0
      %v937 = vsel %vm202, %v922, 0
      %v940 = vsel %vm202, %v923, 0
      %v943 = vsel %vm202, %v924, 0
      %v946 = vsel %vm202, %v925, 0
      %v949 = vsel %vm202, %v926, 0
      %v952 = vsel %vm202, %v927, 0
      %v955 = vsel %vm227, %v929, 0
      %957 = vmatprep.subr.mxu0 0.0
      %958 = vmatpush1.msra.mxu0 0.0
      %959 = vmatprep.subr.mxu0 0.0
      %960 = vmatpush1.msra.mxu0 0.0
      %961 = vmatprep.subr.mxu0 0.0
      %962 = vmatpush1.msra.mxu0 0.0
      %963 = vmatprep.subr.mxu0 0.0
      %964 = vmatpush1.msra.mxu0 0.0
      %965 = vmatprep.subr.mxu0 0.0
      %966 = vmatpush1.msra.mxu0 0.0
      %967 = vmatprep.subr.mxu0 0.0
      %968 = vmatpush1.msra.mxu0 0.0
      %969 = vmatprep.subr.mxu0 0.0
      %970 = vmatpush1.msra.mxu0 0.0
      %971 = vmatprep.subr.mxu0 0.0
      %972 = vmatpush1.msra.mxu0 0.0
      %973 = vmatprep.subr.mxu0 0.0
      %974 = vmatpush1.msra.mxu0 0.0
      %975 = vmatprep.subr.mxu0 0.0
      %976 = vmatpush1.msra.mxu0 0.0
      %977 = vmatprep.subr.mxu0 0.0
      %978 = vmatpush1.msra.mxu0 0.0
      %979 = vmatprep.subr.mxu0 0.0
      %980 = vmatpush1.msra.mxu0 0.0
      %981 = vmatprep.subr.mxu0 0.0
      %982 = vmatpush1.msra.mxu0 0.0
      %983 = vmatprep.subr.mxu0 0.0
      %984 = vmatpush1.msra.mxu0 0.0
      %985 = vmatprep.subr.mxu0 0.0
      %986 = vmatpush1.msra.mxu0 0.0
      %987 = vmatprep.subr.mxu0 0.0
      %988 = vmatpush1.msra.mxu0 %v955
      %989 = vmatprep.subr.mxu0 0.0
      %990 = vmatpush2.msra.mxu0 0.0
      %991 = vmatprep.subr.mxu0 0.0
      %992 = vmatpush2.msra.mxu0 0.0
      %993 = vmatprep.subr.mxu0 0.0
      %994 = vmatpush2.msra.mxu0 0.0
      %995 = vmatprep.subr.mxu0 0.0
      %996 = vmatpush2.msra.mxu0 0.0
      %997 = vmatprep.subr.mxu0 0.0
      %998 = vmatpush2.msra.mxu0 0.0
      %999 = vmatprep.subr.mxu0 0.0
      %1000 = vmatpush2.msra.mxu0 0.0
      %1001 = vmatprep.subr.mxu0 0.0
      %1002 = vmatpush2.msra.mxu0 0.0
      %1003 = vmatprep.subr.mxu0 0.0
      %1004 = vmatpush2.msra.mxu0 0.0
      %1005 = vmatprep.subr.mxu0 0.0
      %1006 = vmatpush2.msra.mxu0 0.0
      %1007 = vmatprep.subr.mxu0 0.0
      %1008 = vmatpush2.msra.mxu0 0.0
      %1009 = vmatprep.subr.mxu0 0.0
      %1010 = vmatpush2.msra.mxu0 0.0
      %1011 = vmatprep.subr.mxu0 0.0
      %1012 = vmatpush2.msra.mxu0 0.0
      %1013 = vmatprep.subr.mxu0 0.0
      %1014 = vmatpush2.msra.mxu0 0.0
      %1015 = vmatprep.subr.mxu0 0.0
      %1016 = vmatpush2.msra.mxu0 0.0
      %1017 = vmatprep.subr.mxu0 0.0
      %1018 = vmatpush2.msra.mxu0 0.0
      %1019 = vmatprep.subr.mxu0 0.0
      %1020 = vmatpush2.msra.mxu0 0.0
      %1021 = vmatprep.mubr.f32.mxu0 0.0
      %1022 = vmatmul.mubr.f32.gmra.mxu0 %v931
      %v1023 = vpop.f32.mrf.mxu0
      %v1024 = vadd.f32 0.0, %v1023
      %v1025 = vpop.f32.mrf.mxu0
      %1026 = vmatprep.mubr.f32.mxu0 0.0
      %1027 = vmatmul.mubr.f32.gmra.mxu0 %v934
      %v1028 = vpop.f32.mrf.mxu0
      %v1029 = vadd.f32 0.0, %v1028
      %v1030 = vpop.f32.mrf.mxu0
      %1031 = vmatprep.mubr.f32.mxu0 0.0
      %1032 = vmatmul.mubr.f32.gmra.mxu0 %v937
      %v1033 = vpop.f32.mrf.mxu0
      %v1034 = vadd.f32 0.0, %v1033
      %v1035 = vpop.f32.mrf.mxu0
      %1036 = vmatprep.mubr.f32.mxu0 0.0
      %1037 = vmatmul.mubr.f32.gmra.mxu0 %v940
      %v1038 = vpop.f32.mrf.mxu0
      %v1039 = vadd.f32 0.0, %v1038
      %v1040 = vpop.f32.mrf.mxu0
      %1041 = vmatprep.mubr.f32.mxu0 0.0
      %1042 = vmatmul.mubr.f32.gmra.mxu0 %v943
      %v1043 = vpop.f32.mrf.mxu0
      %v1044 = vadd.f32 0.0, %v1043
      %v1045 = vpop.f32.mrf.mxu0
      %1046 = vmatprep.mubr.f32.mxu0 0.0
      %1047 = vmatmul.mubr.f32.gmra.mxu0 %v946
      %v1048 = vpop.f32.mrf.mxu0
      %v1049 = vadd.f32 0.0, %v1048
      %v1050 = vpop.f32.mrf.mxu0
      %1051 = vmatprep.mubr.f32.mxu0 0.0
      %1052 = vmatmul.mubr.f32.gmra.mxu0 %v949
      %v1053 = vpop.f32.mrf.mxu0
      %v1054 = vadd.f32 0.0, %v1053
      %v1055 = vpop.f32.mrf.mxu0
      %1056 = vmatprep.mubr.f32.mxu0 0.0
      %1057 = vmatmul.mubr.f32.gmra.mxu0 %v952
      %v1058 = vpop.f32.mrf.mxu0
      %v1059 = vadd.f32 0.0, %v1058
      %v1060 = vpop.f32.mrf.mxu0
      %1061 = vdwg.mxu0
      %v1062 = vadd.f32 %v911, %v1024
      %v1063 = vadd.f32 %v912, %v1029
      %v1064 = vadd.f32 %v913, %v1034
      %v1065 = vadd.f32 %v914, %v1039
      %v1066 = vadd.f32 %v915, %v1044
      %v1067 = vadd.f32 %v916, %v1049
      %v1068 = vadd.f32 %v917, %v1054
      %v1069 = vadd.f32 %v918, %v1059
      %v1070 = vld [vmem:[%s768 + $0x1] sm:$0xff]
      %v1071 = vld [vmem:[%s768 + $0x11] sm:$0xff]
      %v1072 = vld [vmem:[%s768 + $0x21] sm:$0xff]
      %v1073 = vld [vmem:[%s768 + $0x31] sm:$0xff]
      %v1074 = vld [vmem:[%s768 + $0x41] sm:$0xff]
      %v1075 = vld [vmem:[%s768 + $0x51] sm:$0xff]
      %v1076 = vld [vmem:[%s768 + $0x61] sm:$0xff]
      %v1077 = vld [vmem:[%s768 + $0x71] sm:$0xff]
      %s1078 = scalar_lea.vmem %s1, 24
      %v1079 = vld [vmem:[%s1078] sm:$0xf]
      %v1081 = vsel %vm202, %v1070, 0
      %v1084 = vsel %vm202, %v1071, 0
      %v1087 = vsel %vm202, %v1072, 0
      %v1090 = vsel %vm202, %v1073, 0
      %v1093 = vsel %vm202, %v1074, 0
      %v1096 = vsel %vm202, %v1075, 0
      %v1099 = vsel %vm202, %v1076, 0
      %v1102 = vsel %vm202, %v1077, 0
      %v1105 = vsel %vm227, %v1079, 0
      %1107 = vmatprep.subr.mxu0 0.0
      %1108 = vmatpush1.msra.mxu0 0.0
      %1109 = vmatprep.subr.mxu0 0.0
      %1110 = vmatpush1.msra.mxu0 0.0
      %1111 = vmatprep.subr.mxu0 0.0
      %1112 = vmatpush1.msra.mxu0 0.0
      %1113 = vmatprep.subr.mxu0 0.0
      %1114 = vmatpush1.msra.mxu0 0.0
      %1115 = vmatprep.subr.mxu0 0.0
      %1116 = vmatpush1.msra.mxu0 0.0
      %1117 = vmatprep.subr.mxu0 0.0
      %1118 = vmatpush1.msra.mxu0 0.0
      %1119 = vmatprep.subr.mxu0 0.0
      %1120 = vmatpush1.msra.mxu0 0.0
      %1121 = vmatprep.subr.mxu0 0.0
      %1122 = vmatpush1.msra.mxu0 0.0
      %1123 = vmatprep.subr.mxu0 0.0
      %1124 = vmatpush1.msra.mxu0 0.0
      %1125 = vmatprep.subr.mxu0 0.0
      %1126 = vmatpush1.msra.mxu0 0.0
      %1127 = vmatprep.subr.mxu0 0.0
      %1128 = vmatpush1.msra.mxu0 0.0
      %1129 = vmatprep.subr.mxu0 0.0
      %1130 = vmatpush1.msra.mxu0 0.0
      %1131 = vmatprep.subr.mxu0 0.0
      %1132 = vmatpush1.msra.mxu0 0.0
      %1133 = vmatprep.subr.mxu0 0.0
      %1134 = vmatpush1.msra.mxu0 0.0
      %1135 = vmatprep.subr.mxu0 0.0
      %1136 = vmatpush1.msra.mxu0 0.0
      %1137 = vmatprep.subr.mxu0 0.0
      %1138 = vmatpush1.msra.mxu0 %v1105
      %1139 = vmatprep.subr.mxu0 0.0
      %1140 = vmatpush2.msra.mxu0 0.0
      %1141 = vmatprep.subr.mxu0 0.0
      %1142 = vmatpush2.msra.mxu0 0.0
      %1143 = vmatprep.subr.mxu0 0.0
      %1144 = vmatpush2.msra.mxu0 0.0
      %1145 = vmatprep.subr.mxu0 0.0
      %1146 = vmatpush2.msra.mxu0 0.0
      %1147 = vmatprep.subr.mxu0 0.0
      %1148 = vmatpush2.msra.mxu0 0.0
      %1149 = vmatprep.subr.mxu0 0.0
      %1150 = vmatpush2.msra.mxu0 0.0
      %1151 = vmatprep.subr.mxu0 0.0
      %1152 = vmatpush2.msra.mxu0 0.0
      %1153 = vmatprep.subr.mxu0 0.0
      %1154 = vmatpush2.msra.mxu0 0.0
      %1155 = vmatprep.subr.mxu0 0.0
      %1156 = vmatpush2.msra.mxu0 0.0
      %1157 = vmatprep.subr.mxu0 0.0
      %1158 = vmatpush2.msra.mxu0 0.0
      %1159 = vmatprep.subr.mxu0 0.0
      %1160 = vmatpush2.msra.mxu0 0.0
      %1161 = vmatprep.subr.mxu0 0.0
      %1162 = vmatpush2.msra.mxu0 0.0
      %1163 = vmatprep.subr.mxu0 0.0
      %1164 = vmatpush2.msra.mxu0 0.0
      %1165 = vmatprep.subr.mxu0 0.0
      %1166 = vmatpush2.msra.mxu0 0.0
      %1167 = vmatprep.subr.mxu0 0.0
      %1168 = vmatpush2.msra.mxu0 0.0
      %1169 = vmatprep.subr.mxu0 0.0
      %1170 = vmatpush2.msra.mxu0 0.0
      %1171 = vmatprep.mubr.f32.mxu0 0.0
      %1172 = vmatmul.mubr.f32.gmra.mxu0 %v1081
      %v1173 = vpop.f32.mrf.mxu0
      %v1174 = vadd.f32 0.0, %v1173
      %v1175 = vpop.f32.mrf.mxu0
      %1176 = vmatprep.mubr.f32.mxu0 0.0
      %1177 = vmatmul.mubr.f32.gmra.mxu0 %v1084
      %v1178 = vpop.f32.mrf.mxu0
      %v1179 = vadd.f32 0.0, %v1178
      %v1180 = vpop.f32.mrf.mxu0
      %1181 = vmatprep.mubr.f32.mxu0 0.0
      %1182 = vmatmul.mubr.f32.gmra.mxu0 %v1087
      %v1183 = vpop.f32.mrf.mxu0
      %v1184 = vadd.f32 0.0, %v1183
      %v1185 = vpop.f32.mrf.mxu0
      %1186 = vmatprep.mubr.f32.mxu0 0.0
      %1187 = vmatmul.mubr.f32.gmra.mxu0 %v1090
      %v1188 = vpop.f32.mrf.mxu0
      %v1189 = vadd.f32 0.0, %v1188
      %v1190 = vpop.f32.mrf.mxu0
      %1191 = vmatprep.mubr.f32.mxu0 0.0
      %1192 = vmatmul.mubr.f32.gmra.mxu0 %v1093
      %v1193 = vpop.f32.mrf.mxu0
      %v1194 = vadd.f32 0.0, %v1193
      %v1195 = vpop.f32.mrf.mxu0
      %1196 = vmatprep.mubr.f32.mxu0 0.0
      %1197 = vmatmul.mubr.f32.gmra.mxu0 %v1096
      %v1198 = vpop.f32.mrf.mxu0
      %v1199 = vadd.f32 0.0, %v1198
      %v1200 = vpop.f32.mrf.mxu0
      %1201 = vmatprep.mubr.f32.mxu0 0.0
      %1202 = vmatmul.mubr.f32.gmra.mxu0 %v1099
      %v1203 = vpop.f32.mrf.mxu0
      %v1204 = vadd.f32 0.0, %v1203
      %v1205 = vpop.f32.mrf.mxu0
      %1206 = vmatprep.mubr.f32.mxu0 0.0
      %1207 = vmatmul.mubr.f32.gmra.mxu0 %v1102
      %v1208 = vpop.f32.mrf.mxu0
      %v1209 = vadd.f32 0.0, %v1208
      %v1210 = vpop.f32.mrf.mxu0
      %1211 = vdwg.mxu0
      %v1212 = vadd.f32 %v1062, %v1174
      %v1213 = vadd.f32 %v1063, %v1179
      %v1214 = vadd.f32 %v1064, %v1184
      %v1215 = vadd.f32 %v1065, %v1189
      %v1216 = vadd.f32 %v1066, %v1194
      %v1217 = vadd.f32 %v1067, %v1199
      %v1218 = vadd.f32 %v1068, %v1204
      %v1219 = vadd.f32 %v1069, %v1209
      %v1220 = vld [vmem:[%s919 + $0x1] sm:$0xff]
      %v1221 = vld [vmem:[%s919 + $0x11] sm:$0xff]
      %v1222 = vld [vmem:[%s919 + $0x21] sm:$0xff]
      %v1223 = vld [vmem:[%s919 + $0x31] sm:$0xff]
      %v1224 = vld [vmem:[%s919 + $0x41] sm:$0xff]
      %v1225 = vld [vmem:[%s919 + $0x51] sm:$0xff]
      %v1226 = vld [vmem:[%s919 + $0x61] sm:$0xff]
      %v1227 = vld [vmem:[%s919 + $0x71] sm:$0xff]
      %s1228 = scalar_lea.vmem %s1, 28
      %v1229 = vld [vmem:[%s1228] sm:$0xf]
      %v1231 = vsel %vm202, %v1220, 0
      %v1234 = vsel %vm202, %v1221, 0
      %v1237 = vsel %vm202, %v1222, 0
      %v1240 = vsel %vm202, %v1223, 0
      %v1243 = vsel %vm202, %v1224, 0
      %v1246 = vsel %vm202, %v1225, 0
      %v1249 = vsel %vm202, %v1226, 0
      %v1252 = vsel %vm202, %v1227, 0
      %v1255 = vsel %vm227, %v1229, 0
      %1257 = vmatprep.subr.mxu0 0.0
      %1258 = vmatpush1.msra.mxu0 0.0
      %1259 = vmatprep.subr.mxu0 0.0
      %1260 = vmatpush1.msra.mxu0 0.0
      %1261 = vmatprep.subr.mxu0 0.0
      %1262 = vmatpush1.msra.mxu0 0.0
      %1263 = vmatprep.subr.mxu0 0.0
      %1264 = vmatpush1.msra.mxu0 0.0
      %1265 = vmatprep.subr.mxu0 0.0
      %1266 = vmatpush1.msra.mxu0 0.0
      %1267 = vmatprep.subr.mxu0 0.0
      %1268 = vmatpush1.msra.mxu0 0.0
      %1269 = vmatprep.subr.mxu0 0.0
      %1270 = vmatpush1.msra.mxu0 0.0
      %1271 = vmatprep.subr.mxu0 0.0
      %1272 = vmatpush1.msra.mxu0 0.0
      %1273 = vmatprep.subr.mxu0 0.0
      %1274 = vmatpush1.msra.mxu0 0.0
      %1275 = vmatprep.subr.mxu0 0.0
      %1276 = vmatpush1.msra.mxu0 0.0
      %1277 = vmatprep.subr.mxu0 0.0
      %1278 = vmatpush1.msra.mxu0 0.0
      %1279 = vmatprep.subr.mxu0 0.0
      %1280 = vmatpush1.msra.mxu0 0.0
      %1281 = vmatprep.subr.mxu0 0.0
      %1282 = vmatpush1.msra.mxu0 0.0
      %1283 = vmatprep.subr.mxu0 0.0
      %1284 = vmatpush1.msra.mxu0 0.0
      %1285 = vmatprep.subr.mxu0 0.0
      %1286 = vmatpush1.msra.mxu0 0.0
      %1287 = vmatprep.subr.mxu0 0.0
      %1288 = vmatpush1.msra.mxu0 %v1255
      %1289 = vmatprep.subr.mxu0 0.0
      %1290 = vmatpush2.msra.mxu0 0.0
      %1291 = vmatprep.subr.mxu0 0.0
      %1292 = vmatpush2.msra.mxu0 0.0
      %1293 = vmatprep.subr.mxu0 0.0
      %1294 = vmatpush2.msra.mxu0 0.0
      %1295 = vmatprep.subr.mxu0 0.0
      %1296 = vmatpush2.msra.mxu0 0.0
      %1297 = vmatprep.subr.mxu0 0.0
      %1298 = vmatpush2.msra.mxu0 0.0
      %1299 = vmatprep.subr.mxu0 0.0
      %1300 = vmatpush2.msra.mxu0 0.0
      %1301 = vmatprep.subr.mxu0 0.0
      %1302 = vmatpush2.msra.mxu0 0.0
      %1303 = vmatprep.subr.mxu0 0.0
      %1304 = vmatpush2.msra.mxu0 0.0
      %1305 = vmatprep.subr.mxu0 0.0
      %1306 = vmatpush2.msra.mxu0 0.0
      %1307 = vmatprep.subr.mxu0 0.0
      %1308 = vmatpush2.msra.mxu0 0.0
      %1309 = vmatprep.subr.mxu0 0.0
      %1310 = vmatpush2.msra.mxu0 0.0
      %1311 = vmatprep.subr.mxu0 0.0
      %1312 = vmatpush2.msra.mxu0 0.0
      %1313 = vmatprep.subr.mxu0 0.0
      %1314 = vmatpush2.msra.mxu0 0.0
      %1315 = vmatprep.subr.mxu0 0.0
      %1316 = vmatpush2.msra.mxu0 0.0
      %1317 = vmatprep.subr.mxu0 0.0
      %1318 = vmatpush2.msra.mxu0 0.0
      %1319 = vmatprep.subr.mxu0 0.0
      %1320 = vmatpush2.msra.mxu0 0.0
      %1321 = vmatprep.mubr.f32.mxu0 0.0
      %1322 = vmatmul.mubr.f32.gmra.mxu0 %v1231
      %v1323 = vpop.f32.mrf.mxu0
      %v1324 = vadd.f32 0.0, %v1323
      %v1325 = vpop.f32.mrf.mxu0
      %1326 = vmatprep.mubr.f32.mxu0 0.0
      %1327 = vmatmul.mubr.f32.gmra.mxu0 %v1234
      %v1328 = vpop.f32.mrf.mxu0
      %v1329 = vadd.f32 0.0, %v1328
      %v1330 = vpop.f32.mrf.mxu0
      %1331 = vmatprep.mubr.f32.mxu0 0.0
      %1332 = vmatmul.mubr.f32.gmra.mxu0 %v1237
      %v1333 = vpop.f32.mrf.mxu0
      %v1334 = vadd.f32 0.0, %v1333
      %v1335 = vpop.f32.mrf.mxu0
      %1336 = vmatprep.mubr.f32.mxu0 0.0
      %1337 = vmatmul.mubr.f32.gmra.mxu0 %v1240
      %v1338 = vpop.f32.mrf.mxu0
      %v1339 = vadd.f32 0.0, %v1338
      %v1340 = vpop.f32.mrf.mxu0
      %1341 = vmatprep.mubr.f32.mxu0 0.0
      %1342 = vmatmul.mubr.f32.gmra.mxu0 %v1243
      %v1343 = vpop.f32.mrf.mxu0
      %v1344 = vadd.f32 0.0, %v1343
      %v1345 = vpop.f32.mrf.mxu0
      %1346 = vmatprep.mubr.f32.mxu0 0.0
      %1347 = vmatmul.mubr.f32.gmra.mxu0 %v1246
      %v1348 = vpop.f32.mrf.mxu0
      %v1349 = vadd.f32 0.0, %v1348
      %v1350 = vpop.f32.mrf.mxu0
      %1351 = vmatprep.mubr.f32.mxu0 0.0
      %1352 = vmatmul.mubr.f32.gmra.mxu0 %v1249
      %v1353 = vpop.f32.mrf.mxu0
      %v1354 = vadd.f32 0.0, %v1353
      %v1355 = vpop.f32.mrf.mxu0
      %1356 = vmatprep.mubr.f32.mxu0 0.0
      %1357 = vmatmul.mubr.f32.gmra.mxu0 %v1252
      %v1358 = vpop.f32.mrf.mxu0
      %v1359 = vadd.f32 0.0, %v1358
      %v1360 = vpop.f32.mrf.mxu0
      %1361 = vdwg.mxu0
      %v1362 = vadd.f32 %v1212, %v1324
      %v1363 = vadd.f32 %v1213, %v1329
      %v1364 = vadd.f32 %v1214, %v1334
      %v1365 = vadd.f32 %v1215, %v1339
      %v1366 = vadd.f32 %v1216, %v1344
      %v1367 = vadd.f32 %v1217, %v1349
      %v1368 = vadd.f32 %v1218, %v1354
      %v1369 = vadd.f32 %v1219, %v1359
      %s1370 = scalar_lea.vmem %s172, 16
      %v1371 = vld [vmem:[%s1370] sm:$0xff]
      %v1372 = vld [vmem:[%s1370 + $0x10] sm:$0xff]
      %v1373 = vld [vmem:[%s1370 + $0x20] sm:$0xff]
      %v1374 = vld [vmem:[%s1370 + $0x30] sm:$0xff]
      %v1375 = vld [vmem:[%s1370 + $0x40] sm:$0xff]
      %v1376 = vld [vmem:[%s1370 + $0x50] sm:$0xff]
      %v1377 = vld [vmem:[%s1370 + $0x60] sm:$0xff]
      %v1378 = vld [vmem:[%s1370 + $0x70] sm:$0xff]
      %s1379 = scalar_lea.vmem %s1, 32
      %v1380 = vld [vmem:[%s1379] sm:$0xf]
      %v1382 = vsel %vm202, %v1371, 0
      %v1385 = vsel %vm202, %v1372, 0
      %v1388 = vsel %vm202, %v1373, 0
      %v1391 = vsel %vm202, %v1374, 0
      %v1394 = vsel %vm202, %v1375, 0
      %v1397 = vsel %vm202, %v1376, 0
      %v1400 = vsel %vm202, %v1377, 0
      %v1403 = vsel %vm202, %v1378, 0
      %v1406 = vsel %vm227, %v1380, 0
      %1408 = vmatprep.subr.mxu0 0.0
      %1409 = vmatpush1.msra.mxu0 0.0
      %1410 = vmatprep.subr.mxu0 0.0
      %1411 = vmatpush1.msra.mxu0 0.0
      %1412 = vmatprep.subr.mxu0 0.0
      %1413 = vmatpush1.msra.mxu0 0.0
      %1414 = vmatprep.subr.mxu0 0.0
      %1415 = vmatpush1.msra.mxu0 0.0
      %1416 = vmatprep.subr.mxu0 0.0
      %1417 = vmatpush1.msra.mxu0 0.0
      %1418 = vmatprep.subr.mxu0 0.0
      %1419 = vmatpush1.msra.mxu0 0.0
      %1420 = vmatprep.subr.mxu0 0.0
      %1421 = vmatpush1.msra.mxu0 0.0
      %1422 = vmatprep.subr.mxu0 0.0
      %1423 = vmatpush1.msra.mxu0 0.0
      %1424 = vmatprep.subr.mxu0 0.0
      %1425 = vmatpush1.msra.mxu0 0.0
      %1426 = vmatprep.subr.mxu0 0.0
      %1427 = vmatpush1.msra.mxu0 0.0
      %1428 = vmatprep.subr.mxu0 0.0
      %1429 = vmatpush1.msra.mxu0 0.0
      %1430 = vmatprep.subr.mxu0 0.0
      %1431 = vmatpush1.msra.mxu0 0.0
      %1432 = vmatprep.subr.mxu0 0.0
      %1433 = vmatpush1.msra.mxu0 0.0
      %1434 = vmatprep.subr.mxu0 0.0
      %1435 = vmatpush1.msra.mxu0 0.0
      %1436 = vmatprep.subr.mxu0 0.0
      %1437 = vmatpush1.msra.mxu0 0.0
      %1438 = vmatprep.subr.mxu0 0.0
      %1439 = vmatpush1.msra.mxu0 %v1406
      %1440 = vmatprep.subr.mxu0 0.0
      %1441 = vmatpush2.msra.mxu0 0.0
      %1442 = vmatprep.subr.mxu0 0.0
      %1443 = vmatpush2.msra.mxu0 0.0
      %1444 = vmatprep.subr.mxu0 0.0
      %1445 = vmatpush2.msra.mxu0 0.0
      %1446 = vmatprep.subr.mxu0 0.0
      %1447 = vmatpush2.msra.mxu0 0.0
      %1448 = vmatprep.subr.mxu0 0.0
      %1449 = vmatpush2.msra.mxu0 0.0
      %1450 = vmatprep.subr.mxu0 0.0
      %1451 = vmatpush2.msra.mxu0 0.0
      %1452 = vmatprep.subr.mxu0 0.0
      %1453 = vmatpush2.msra.mxu0 0.0
      %1454 = vmatprep.subr.mxu0 0.0
      %1455 = vmatpush2.msra.mxu0 0.0
      %1456 = vmatprep.subr.mxu0 0.0
      %1457 = vmatpush2.msra.mxu0 0.0
      %1458 = vmatprep.subr.mxu0 0.0
      %1459 = vmatpush2.msra.mxu0 0.0
      %1460 = vmatprep.subr.mxu0 0.0
      %1461 = vmatpush2.msra.mxu0 0.0
      %1462 = vmatprep.subr.mxu0 0.0
      %1463 = vmatpush2.msra.mxu0 0.0
      %1464 = vmatprep.subr.mxu0 0.0
      %1465 = vmatpush2.msra.mxu0 0.0
      %1466 = vmatprep.subr.mxu0 0.0
      %1467 = vmatpush2.msra.mxu0 0.0
      %1468 = vmatprep.subr.mxu0 0.0
      %1469 = vmatpush2.msra.mxu0 0.0
      %1470 = vmatprep.subr.mxu0 0.0
      %1471 = vmatpush2.msra.mxu0 0.0
      %1472 = vmatprep.mubr.f32.mxu0 0.0
      %1473 = vmatmul.mubr.f32.gmra.mxu0 %v1382
      %v1474 = vpop.f32.mrf.mxu0
      %v1475 = vadd.f32 0.0, %v1474
      %v1476 = vpop.f32.mrf.mxu0
      %1477 = vmatprep.mubr.f32.mxu0 0.0
      %1478 = vmatmul.mubr.f32.gmra.mxu0 %v1385
      %v1479 = vpop.f32.mrf.mxu0
      %v1480 = vadd.f32 0.0, %v1479
      %v1481 = vpop.f32.mrf.mxu0
      %1482 = vmatprep.mubr.f32.mxu0 0.0
      %1483 = vmatmul.mubr.f32.gmra.mxu0 %v1388
      %v1484 = vpop.f32.mrf.mxu0
      %v1485 = vadd.f32 0.0, %v1484
      %v1486 = vpop.f32.mrf.mxu0
      %1487 = vmatprep.mubr.f32.mxu0 0.0
      %1488 = vmatmul.mubr.f32.gmra.mxu0 %v1391
      %v1489 = vpop.f32.mrf.mxu0
      %v1490 = vadd.f32 0.0, %v1489
      %v1491 = vpop.f32.mrf.mxu0
      %1492 = vmatprep.mubr.f32.mxu0 0.0
      %1493 = vmatmul.mubr.f32.gmra.mxu0 %v1394
      %v1494 = vpop.f32.mrf.mxu0
      %v1495 = vadd.f32 0.0, %v1494
      %v1496 = vpop.f32.mrf.mxu0
      %1497 = vmatprep.mubr.f32.mxu0 0.0
      %1498 = vmatmul.mubr.f32.gmra.mxu0 %v1397
      %v1499 = vpop.f32.mrf.mxu0
      %v1500 = vadd.f32 0.0, %v1499
      %v1501 = vpop.f32.mrf.mxu0
      %1502 = vmatprep.mubr.f32.mxu0 0.0
      %1503 = vmatmul.mubr.f32.gmra.mxu0 %v1400
      %v1504 = vpop.f32.mrf.mxu0
      %v1505 = vadd.f32 0.0, %v1504
      %v1506 = vpop.f32.mrf.mxu0
      %1507 = vmatprep.mubr.f32.mxu0 0.0
      %1508 = vmatmul.mubr.f32.gmra.mxu0 %v1403
      %v1509 = vpop.f32.mrf.mxu0
      %v1510 = vadd.f32 0.0, %v1509
      %v1511 = vpop.f32.mrf.mxu0
      %1512 = vdwg.mxu0
      %v1513 = vadd.f32 %v1362, %v1475
      %v1514 = vadd.f32 %v1363, %v1480
      %v1515 = vadd.f32 %v1364, %v1485
      %v1516 = vadd.f32 %v1365, %v1490
      %v1517 = vadd.f32 %v1366, %v1495
      %v1518 = vadd.f32 %v1367, %v1500
      %v1519 = vadd.f32 %v1368, %v1505
      %v1520 = vadd.f32 %v1369, %v1510
      %s1521 = scalar_lea.vmem %s172, 160
      %v1522 = vld [vmem:[%s1521] sm:$0xff]
      %v1523 = vld [vmem:[%s1521 + $0x10] sm:$0xff]
      %v1524 = vld [vmem:[%s1521 + $0x20] sm:$0xff]
      %v1525 = vld [vmem:[%s1521 + $0x30] sm:$0xff]
      %v1526 = vld [vmem:[%s1521 + $0x40] sm:$0xff]
      %v1527 = vld [vmem:[%s1521 + $0x50] sm:$0xff]
      %v1528 = vld [vmem:[%s1521 + $0x60] sm:$0xff]
      %v1529 = vld [vmem:[%s1521 + $0x70] sm:$0xff]
      %s1530 = scalar_lea.vmem %s1, 36
      %v1531 = vld [vmem:[%s1530] sm:$0xf]
      %v1533 = vsel %vm202, %v1522, 0
      %v1536 = vsel %vm202, %v1523, 0
      %v1539 = vsel %vm202, %v1524, 0
      %v1542 = vsel %vm202, %v1525, 0
      %v1545 = vsel %vm202, %v1526, 0
      %v1548 = vsel %vm202, %v1527, 0
      %v1551 = vsel %vm202, %v1528, 0
      %v1554 = vsel %vm202, %v1529, 0
      %v1557 = vsel %vm227, %v1531, 0
      %1559 = vmatprep.subr.mxu0 0.0
      %1560 = vmatpush1.msra.mxu0 0.0
      %1561 = vmatprep.subr.mxu0 0.0
      %1562 = vmatpush1.msra.mxu0 0.0
      %1563 = vmatprep.subr.mxu0 0.0
      %1564 = vmatpush1.msra.mxu0 0.0
      %1565 = vmatprep.subr.mxu0 0.0
      %1566 = vmatpush1.msra.mxu0 0.0
      %1567 = vmatprep.subr.mxu0 0.0
      %1568 = vmatpush1.msra.mxu0 0.0
      %1569 = vmatprep.subr.mxu0 0.0
      %1570 = vmatpush1.msra.mxu0 0.0
      %1571 = vmatprep.subr.mxu0 0.0
      %1572 = vmatpush1.msra.mxu0 0.0
      %1573 = vmatprep.subr.mxu0 0.0
      %1574 = vmatpush1.msra.mxu0 0.0
      %1575 = vmatprep.subr.mxu0 0.0
      %1576 = vmatpush1.msra.mxu0 0.0
      %1577 = vmatprep.subr.mxu0 0.0
      %1578 = vmatpush1.msra.mxu0 0.0
      %1579 = vmatprep.subr.mxu0 0.0
      %1580 = vmatpush1.msra.mxu0 0.0
      %1581 = vmatprep.subr.mxu0 0.0
      %1582 = vmatpush1.msra.mxu0 0.0
      %1583 = vmatprep.subr.mxu0 0.0
      %1584 = vmatpush1.msra.mxu0 0.0
      %1585 = vmatprep.subr.mxu0 0.0
      %1586 = vmatpush1.msra.mxu0 0.0
      %1587 = vmatprep.subr.mxu0 0.0
      %1588 = vmatpush1.msra.mxu0 0.0
      %1589 = vmatprep.subr.mxu0 0.0
      %1590 = vmatpush1.msra.mxu0 %v1557
      %1591 = vmatprep.subr.mxu0 0.0
      %1592 = vmatpush2.msra.mxu0 0.0
      %1593 = vmatprep.subr.mxu0 0.0
      %1594 = vmatpush2.msra.mxu0 0.0
      %1595 = vmatprep.subr.mxu0 0.0
      %1596 = vmatpush2.msra.mxu0 0.0
      %1597 = vmatprep.subr.mxu0 0.0
      %1598 = vmatpush2.msra.mxu0 0.0
      %1599 = vmatprep.subr.mxu0 0.0
      %1600 = vmatpush2.msra.mxu0 0.0
      %1601 = vmatprep.subr.mxu0 0.0
      %1602 = vmatpush2.msra.mxu0 0.0
      %1603 = vmatprep.subr.mxu0 0.0
      %1604 = vmatpush2.msra.mxu0 0.0
      %1605 = vmatprep.subr.mxu0 0.0
      %1606 = vmatpush2.msra.mxu0 0.0
      %1607 = vmatprep.subr.mxu0 0.0
      %1608 = vmatpush2.msra.mxu0 0.0
      %1609 = vmatprep.subr.mxu0 0.0
      %1610 = vmatpush2.msra.mxu0 0.0
      %1611 = vmatprep.subr.mxu0 0.0
      %1612 = vmatpush2.msra.mxu0 0.0
      %1613 = vmatprep.subr.mxu0 0.0
      %1614 = vmatpush2.msra.mxu0 0.0
      %1615 = vmatprep.subr.mxu0 0.0
      %1616 = vmatpush2.msra.mxu0 0.0
      %1617 = vmatprep.subr.mxu0 0.0
      %1618 = vmatpush2.msra.mxu0 0.0
      %1619 = vmatprep.subr.mxu0 0.0
      %1620 = vmatpush2.msra.mxu0 0.0
      %1621 = vmatprep.subr.mxu0 0.0
      %1622 = vmatpush2.msra.mxu0 0.0
      %1623 = vmatprep.mubr.f32.mxu0 0.0
      %1624 = vmatmul.mubr.f32.gmra.mxu0 %v1533
      %v1625 = vpop.f32.mrf.mxu0
      %v1626 = vadd.f32 0.0, %v1625
      %v1627 = vpop.f32.mrf.mxu0
      %1628 = vmatprep.mubr.f32.mxu0 0.0
      %1629 = vmatmul.mubr.f32.gmra.mxu0 %v1536
      %v1630 = vpop.f32.mrf.mxu0
      %v1631 = vadd.f32 0.0, %v1630
      %v1632 = vpop.f32.mrf.mxu0
      %1633 = vmatprep.mubr.f32.mxu0 0.0
      %1634 = vmatmul.mubr.f32.gmra.mxu0 %v1539
      %v1635 = vpop.f32.mrf.mxu0
      %v1636 = vadd.f32 0.0, %v1635
      %v1637 = vpop.f32.mrf.mxu0
      %1638 = vmatprep.mubr.f32.mxu0 0.0
      %1639 = vmatmul.mubr.f32.gmra.mxu0 %v1542
      %v1640 = vpop.f32.mrf.mxu0
      %v1641 = vadd.f32 0.0, %v1640
      %v1642 = vpop.f32.mrf.mxu0
      %1643 = vmatprep.mubr.f32.mxu0 0.0
      %1644 = vmatmul.mubr.f32.gmra.mxu0 %v1545
      %v1645 = vpop.f32.mrf.mxu0
      %v1646 = vadd.f32 0.0, %v1645
      %v1647 = vpop.f32.mrf.mxu0
      %1648 = vmatprep.mubr.f32.mxu0 0.0
      %1649 = vmatmul.mubr.f32.gmra.mxu0 %v1548
      %v1650 = vpop.f32.mrf.mxu0
      %v1651 = vadd.f32 0.0, %v1650
      %v1652 = vpop.f32.mrf.mxu0
      %1653 = vmatprep.mubr.f32.mxu0 0.0
      %1654 = vmatmul.mubr.f32.gmra.mxu0 %v1551
      %v1655 = vpop.f32.mrf.mxu0
      %v1656 = vadd.f32 0.0, %v1655
      %v1657 = vpop.f32.mrf.mxu0
      %1658 = vmatprep.mubr.f32.mxu0 0.0
      %1659 = vmatmul.mubr.f32.gmra.mxu0 %v1554
      %v1660 = vpop.f32.mrf.mxu0
      %v1661 = vadd.f32 0.0, %v1660
      %v1662 = vpop.f32.mrf.mxu0
      %1663 = vdwg.mxu0
      %v1664 = vadd.f32 %v1513, %v1626
      %v1665 = vadd.f32 %v1514, %v1631
      %v1666 = vadd.f32 %v1515, %v1636
      %v1667 = vadd.f32 %v1516, %v1641
      %v1668 = vadd.f32 %v1517, %v1646
      %v1669 = vadd.f32 %v1518, %v1651
      %v1670 = vadd.f32 %v1519, %v1656
      %v1671 = vadd.f32 %v1520, %v1661
      %v1672 = vld [vmem:[%s1370 + $0x1] sm:$0xff]
      %v1673 = vld [vmem:[%s1370 + $0x11] sm:$0xff]
      %v1674 = vld [vmem:[%s1370 + $0x21] sm:$0xff]
      %v1675 = vld [vmem:[%s1370 + $0x31] sm:$0xff]
      %v1676 = vld [vmem:[%s1370 + $0x41] sm:$0xff]
      %v1677 = vld [vmem:[%s1370 + $0x51] sm:$0xff]
      %v1678 = vld [vmem:[%s1370 + $0x61] sm:$0xff]
      %v1679 = vld [vmem:[%s1370 + $0x71] sm:$0xff]
      %s1680 = scalar_lea.vmem %s1, 40
      %v1681 = vld [vmem:[%s1680] sm:$0xf]
      %v1683 = vsel %vm202, %v1672, 0
      %v1686 = vsel %vm202, %v1673, 0
      %v1689 = vsel %vm202, %v1674, 0
      %v1692 = vsel %vm202, %v1675, 0
      %v1695 = vsel %vm202, %v1676, 0
      %v1698 = vsel %vm202, %v1677, 0
      %v1701 = vsel %vm202, %v1678, 0
      %v1704 = vsel %vm202, %v1679, 0
      %v1707 = vsel %vm227, %v1681, 0
      %1709 = vmatprep.subr.mxu0 0.0
      %1710 = vmatpush1.msra.mxu0 0.0
      %1711 = vmatprep.subr.mxu0 0.0
      %1712 = vmatpush1.msra.mxu0 0.0
      %1713 = vmatprep.subr.mxu0 0.0
      %1714 = vmatpush1.msra.mxu0 0.0
      %1715 = vmatprep.subr.mxu0 0.0
      %1716 = vmatpush1.msra.mxu0 0.0
      %1717 = vmatprep.subr.mxu0 0.0
      %1718 = vmatpush1.msra.mxu0 0.0
      %1719 = vmatprep.subr.mxu0 0.0
      %1720 = vmatpush1.msra.mxu0 0.0
      %1721 = vmatprep.subr.mxu0 0.0
      %1722 = vmatpush1.msra.mxu0 0.0
      %1723 = vmatprep.subr.mxu0 0.0
      %1724 = vmatpush1.msra.mxu0 0.0
      %1725 = vmatprep.subr.mxu0 0.0
      %1726 = vmatpush1.msra.mxu0 0.0
      %1727 = vmatprep.subr.mxu0 0.0
      %1728 = vmatpush1.msra.mxu0 0.0
      %1729 = vmatprep.subr.mxu0 0.0
      %1730 = vmatpush1.msra.mxu0 0.0
      %1731 = vmatprep.subr.mxu0 0.0
      %1732 = vmatpush1.msra.mxu0 0.0
      %1733 = vmatprep.subr.mxu0 0.0
      %1734 = vmatpush1.msra.mxu0 0.0
      %1735 = vmatprep.subr.mxu0 0.0
      %1736 = vmatpush1.msra.mxu0 0.0
      %1737 = vmatprep.subr.mxu0 0.0
      %1738 = vmatpush1.msra.mxu0 0.0
      %1739 = vmatprep.subr.mxu0 0.0
      %1740 = vmatpush1.msra.mxu0 %v1707
      %1741 = vmatprep.subr.mxu0 0.0
      %1742 = vmatpush2.msra.mxu0 0.0
      %1743 = vmatprep.subr.mxu0 0.0
      %1744 = vmatpush2.msra.mxu0 0.0
      %1745 = vmatprep.subr.mxu0 0.0
      %1746 = vmatpush2.msra.mxu0 0.0
      %1747 = vmatprep.subr.mxu0 0.0
      %1748 = vmatpush2.msra.mxu0 0.0
      %1749 = vmatprep.subr.mxu0 0.0
      %1750 = vmatpush2.msra.mxu0 0.0
      %1751 = vmatprep.subr.mxu0 0.0
      %1752 = vmatpush2.msra.mxu0 0.0
      %1753 = vmatprep.subr.mxu0 0.0
      %1754 = vmatpush2.msra.mxu0 0.0
      %1755 = vmatprep.subr.mxu0 0.0
      %1756 = vmatpush2.msra.mxu0 0.0
      %1757 = vmatprep.subr.mxu0 0.0
      %1758 = vmatpush2.msra.mxu0 0.0
      %1759 = vmatprep.subr.mxu0 0.0
      %1760 = vmatpush2.msra.mxu0 0.0
      %1761 = vmatprep.subr.mxu0 0.0
      %1762 = vmatpush2.msra.mxu0 0.0
      %1763 = vmatprep.subr.mxu0 0.0
      %1764 = vmatpush2.msra.mxu0 0.0
      %1765 = vmatprep.subr.mxu0 0.0
      %1766 = vmatpush2.msra.mxu0 0.0
      %1767 = vmatprep.subr.mxu0 0.0
      %1768 = vmatpush2.msra.mxu0 0.0
      %1769 = vmatprep.subr.mxu0 0.0
      %1770 = vmatpush2.msra.mxu0 0.0
      %1771 = vmatprep.subr.mxu0 0.0
      %1772 = vmatpush2.msra.mxu0 0.0
      %1773 = vmatprep.mubr.f32.mxu0 0.0
      %1774 = vmatmul.mubr.f32.gmra.mxu0 %v1683
      %v1775 = vpop.f32.mrf.mxu0
      %v1776 = vadd.f32 0.0, %v1775
      %v1777 = vpop.f32.mrf.mxu0
      %1778 = vmatprep.mubr.f32.mxu0 0.0
      %1779 = vmatmul.mubr.f32.gmra.mxu0 %v1686
      %v1780 = vpop.f32.mrf.mxu0
      %v1781 = vadd.f32 0.0, %v1780
      %v1782 = vpop.f32.mrf.mxu0
      %1783 = vmatprep.mubr.f32.mxu0 0.0
      %1784 = vmatmul.mubr.f32.gmra.mxu0 %v1689
      %v1785 = vpop.f32.mrf.mxu0
      %v1786 = vadd.f32 0.0, %v1785
      %v1787 = vpop.f32.mrf.mxu0
      %1788 = vmatprep.mubr.f32.mxu0 0.0
      %1789 = vmatmul.mubr.f32.gmra.mxu0 %v1692
      %v1790 = vpop.f32.mrf.mxu0
      %v1791 = vadd.f32 0.0, %v1790
      %v1792 = vpop.f32.mrf.mxu0
      %1793 = vmatprep.mubr.f32.mxu0 0.0
      %1794 = vmatmul.mubr.f32.gmra.mxu0 %v1695
      %v1795 = vpop.f32.mrf.mxu0
      %v1796 = vadd.f32 0.0, %v1795
      %v1797 = vpop.f32.mrf.mxu0
      %1798 = vmatprep.mubr.f32.mxu0 0.0
      %1799 = vmatmul.mubr.f32.gmra.mxu0 %v1698
      %v1800 = vpop.f32.mrf.mxu0
      %v1801 = vadd.f32 0.0, %v1800
      %v1802 = vpop.f32.mrf.mxu0
      %1803 = vmatprep.mubr.f32.mxu0 0.0
      %1804 = vmatmul.mubr.f32.gmra.mxu0 %v1701
      %v1805 = vpop.f32.mrf.mxu0
      %v1806 = vadd.f32 0.0, %v1805
      %v1807 = vpop.f32.mrf.mxu0
      %1808 = vmatprep.mubr.f32.mxu0 0.0
      %1809 = vmatmul.mubr.f32.gmra.mxu0 %v1704
      %v1810 = vpop.f32.mrf.mxu0
      %v1811 = vadd.f32 0.0, %v1810
      %v1812 = vpop.f32.mrf.mxu0
      %1813 = vdwg.mxu0
      %v1814 = vadd.f32 %v1664, %v1776
      %v1815 = vadd.f32 %v1665, %v1781
      %v1816 = vadd.f32 %v1666, %v1786
      %v1817 = vadd.f32 %v1667, %v1791
      %v1818 = vadd.f32 %v1668, %v1796
      %v1819 = vadd.f32 %v1669, %v1801
      %v1820 = vadd.f32 %v1670, %v1806
      %v1821 = vadd.f32 %v1671, %v1811
      %v1822 = vld [vmem:[%s1521 + $0x1] sm:$0xff]
      %v1823 = vld [vmem:[%s1521 + $0x11] sm:$0xff]
      %v1824 = vld [vmem:[%s1521 + $0x21] sm:$0xff]
      %v1825 = vld [vmem:[%s1521 + $0x31] sm:$0xff]
      %v1826 = vld [vmem:[%s1521 + $0x41] sm:$0xff]
      %v1827 = vld [vmem:[%s1521 + $0x51] sm:$0xff]
      %v1828 = vld [vmem:[%s1521 + $0x61] sm:$0xff]
      %v1829 = vld [vmem:[%s1521 + $0x71] sm:$0xff]
      %s1830 = scalar_lea.vmem %s1, 44
      %v1831 = vld [vmem:[%s1830] sm:$0xf]
      %v1833 = vsel %vm202, %v1822, 0
      %v1836 = vsel %vm202, %v1823, 0
      %v1839 = vsel %vm202, %v1824, 0
      %v1842 = vsel %vm202, %v1825, 0
      %v1845 = vsel %vm202, %v1826, 0
      %v1848 = vsel %vm202, %v1827, 0
      %v1851 = vsel %vm202, %v1828, 0
      %v1854 = vsel %vm202, %v1829, 0
      %v1857 = vsel %vm227, %v1831, 0
      %1859 = vmatprep.subr.mxu0 0.0
      %1860 = vmatpush1.msra.mxu0 0.0
      %1861 = vmatprep.subr.mxu0 0.0
      %1862 = vmatpush1.msra.mxu0 0.0
      %1863 = vmatprep.subr.mxu0 0.0
      %1864 = vmatpush1.msra.mxu0 0.0
      %1865 = vmatprep.subr.mxu0 0.0
      %1866 = vmatpush1.msra.mxu0 0.0
      %1867 = vmatprep.subr.mxu0 0.0
      %1868 = vmatpush1.msra.mxu0 0.0
      %1869 = vmatprep.subr.mxu0 0.0
      %1870 = vmatpush1.msra.mxu0 0.0
      %1871 = vmatprep.subr.mxu0 0.0
      %1872 = vmatpush1.msra.mxu0 0.0
      %1873 = vmatprep.subr.mxu0 0.0
      %1874 = vmatpush1.msra.mxu0 0.0
      %1875 = vmatprep.subr.mxu0 0.0
      %1876 = vmatpush1.msra.mxu0 0.0
      %1877 = vmatprep.subr.mxu0 0.0
      %1878 = vmatpush1.msra.mxu0 0.0
      %1879 = vmatprep.subr.mxu0 0.0
      %1880 = vmatpush1.msra.mxu0 0.0
      %1881 = vmatprep.subr.mxu0 0.0
      %1882 = vmatpush1.msra.mxu0 0.0
      %1883 = vmatprep.subr.mxu0 0.0
      %1884 = vmatpush1.msra.mxu0 0.0
      %1885 = vmatprep.subr.mxu0 0.0
      %1886 = vmatpush1.msra.mxu0 0.0
      %1887 = vmatprep.subr.mxu0 0.0
      %1888 = vmatpush1.msra.mxu0 0.0
      %1889 = vmatprep.subr.mxu0 0.0
      %1890 = vmatpush1.msra.mxu0 %v1857
      %1891 = vmatprep.subr.mxu0 0.0
      %1892 = vmatpush2.msra.mxu0 0.0
      %1893 = vmatprep.subr.mxu0 0.0
      %1894 = vmatpush2.msra.mxu0 0.0
      %1895 = vmatprep.subr.mxu0 0.0
      %1896 = vmatpush2.msra.mxu0 0.0
      %1897 = vmatprep.subr.mxu0 0.0
      %1898 = vmatpush2.msra.mxu0 0.0
      %1899 = vmatprep.subr.mxu0 0.0
      %1900 = vmatpush2.msra.mxu0 0.0
      %1901 = vmatprep.subr.mxu0 0.0
      %1902 = vmatpush2.msra.mxu0 0.0
      %1903 = vmatprep.subr.mxu0 0.0
      %1904 = vmatpush2.msra.mxu0 0.0
      %1905 = vmatprep.subr.mxu0 0.0
      %1906 = vmatpush2.msra.mxu0 0.0
      %1907 = vmatprep.subr.mxu0 0.0
      %1908 = vmatpush2.msra.mxu0 0.0
      %1909 = vmatprep.subr.mxu0 0.0
      %1910 = vmatpush2.msra.mxu0 0.0
      %1911 = vmatprep.subr.mxu0 0.0
      %1912 = vmatpush2.msra.mxu0 0.0
      %1913 = vmatprep.subr.mxu0 0.0
      %1914 = vmatpush2.msra.mxu0 0.0
      %1915 = vmatprep.subr.mxu0 0.0
      %1916 = vmatpush2.msra.mxu0 0.0
      %1917 = vmatprep.subr.mxu0 0.0
      %1918 = vmatpush2.msra.mxu0 0.0
      %1919 = vmatprep.subr.mxu0 0.0
      %1920 = vmatpush2.msra.mxu0 0.0
      %1921 = vmatprep.subr.mxu0 0.0
      %1922 = vmatpush2.msra.mxu0 0.0
      %1923 = vmatprep.mubr.f32.mxu0 0.0
      %1924 = vmatmul.mubr.f32.gmra.mxu0 %v1833
      %v1925 = vpop.f32.mrf.mxu0
      %v1926 = vadd.f32 0.0, %v1925
      %v1927 = vpop.f32.mrf.mxu0
      %1928 = vmatprep.mubr.f32.mxu0 0.0
      %1929 = vmatmul.mubr.f32.gmra.mxu0 %v1836
      %v1930 = vpop.f32.mrf.mxu0
      %v1931 = vadd.f32 0.0, %v1930
      %v1932 = vpop.f32.mrf.mxu0
      %1933 = vmatprep.mubr.f32.mxu0 0.0
      %1934 = vmatmul.mubr.f32.gmra.mxu0 %v1839
      %v1935 = vpop.f32.mrf.mxu0
      %v1936 = vadd.f32 0.0, %v1935
      %v1937 = vpop.f32.mrf.mxu0
      %1938 = vmatprep.mubr.f32.mxu0 0.0
      %1939 = vmatmul.mubr.f32.gmra.mxu0 %v1842
      %v1940 = vpop.f32.mrf.mxu0
      %v1941 = vadd.f32 0.0, %v1940
      %v1942 = vpop.f32.mrf.mxu0
      %1943 = vmatprep.mubr.f32.mxu0 0.0
      %1944 = vmatmul.mubr.f32.gmra.mxu0 %v1845
      %v1945 = vpop.f32.mrf.mxu0
      %v1946 = vadd.f32 0.0, %v1945
      %v1947 = vpop.f32.mrf.mxu0
      %1948 = vmatprep.mubr.f32.mxu0 0.0
      %1949 = vmatmul.mubr.f32.gmra.mxu0 %v1848
      %v1950 = vpop.f32.mrf.mxu0
      %v1951 = vadd.f32 0.0, %v1950
      %v1952 = vpop.f32.mrf.mxu0
      %1953 = vmatprep.mubr.f32.mxu0 0.0
      %1954 = vmatmul.mubr.f32.gmra.mxu0 %v1851
      %v1955 = vpop.f32.mrf.mxu0
      %v1956 = vadd.f32 0.0, %v1955
      %v1957 = vpop.f32.mrf.mxu0
      %1958 = vmatprep.mubr.f32.mxu0 0.0
      %1959 = vmatmul.mubr.f32.gmra.mxu0 %v1854
      %v1960 = vpop.f32.mrf.mxu0
      %v1961 = vadd.f32 0.0, %v1960
      %v1962 = vpop.f32.mrf.mxu0
      %1963 = vdwg.mxu0
      %v1964 = vadd.f32 %v1814, %v1926
      %v1965 = vadd.f32 %v1815, %v1931
      %v1966 = vadd.f32 %v1816, %v1936
      %v1967 = vadd.f32 %v1817, %v1941
      %v1968 = vadd.f32 %v1818, %v1946
      %v1969 = vadd.f32 %v1819, %v1951
      %v1970 = vadd.f32 %v1820, %v1956
      %v1971 = vadd.f32 %v1821, %v1961
      %s1972 = scalar_lea.vmem %s172, 304
      %v1973 = vld [vmem:[%s1972] sm:$0xff]
      %v1974 = vld [vmem:[%s1972 + $0x10] sm:$0xff]
      %v1975 = vld [vmem:[%s1972 + $0x20] sm:$0xff]
      %v1976 = vld [vmem:[%s1972 + $0x30] sm:$0xff]
      %v1977 = vld [vmem:[%s1972 + $0x40] sm:$0xff]
      %v1978 = vld [vmem:[%s1972 + $0x50] sm:$0xff]
      %v1979 = vld [vmem:[%s1972 + $0x60] sm:$0xff]
      %v1980 = vld [vmem:[%s1972 + $0x70] sm:$0xff]
      %s1981 = scalar_lea.vmem %s1, 48
      %v1982 = vld [vmem:[%s1981] sm:$0xf]
      %v1984 = vsel %vm202, %v1973, 0
      %v1987 = vsel %vm202, %v1974, 0
      %v1990 = vsel %vm202, %v1975, 0
      %v1993 = vsel %vm202, %v1976, 0
      %v1996 = vsel %vm202, %v1977, 0
      %v1999 = vsel %vm202, %v1978, 0
      %v2002 = vsel %vm202, %v1979, 0
      %v2005 = vsel %vm202, %v1980, 0
      %v2008 = vsel %vm227, %v1982, 0
      %2010 = vmatprep.subr.mxu0 0.0
      %2011 = vmatpush1.msra.mxu0 0.0
      %2012 = vmatprep.subr.mxu0 0.0
      %2013 = vmatpush1.msra.mxu0 0.0
      %2014 = vmatprep.subr.mxu0 0.0
      %2015 = vmatpush1.msra.mxu0 0.0
      %2016 = vmatprep.subr.mxu0 0.0
      %2017 = vmatpush1.msra.mxu0 0.0
      %2018 = vmatprep.subr.mxu0 0.0
      %2019 = vmatpush1.msra.mxu0 0.0
      %2020 = vmatprep.subr.mxu0 0.0
      %2021 = vmatpush1.msra.mxu0 0.0
      %2022 = vmatprep.subr.mxu0 0.0
      %2023 = vmatpush1.msra.mxu0 0.0
      %2024 = vmatprep.subr.mxu0 0.0
      %2025 = vmatpush1.msra.mxu0 0.0
      %2026 = vmatprep.subr.mxu0 0.0
      %2027 = vmatpush1.msra.mxu0 0.0
      %2028 = vmatprep.subr.mxu0 0.0
      %2029 = vmatpush1.msra.mxu0 0.0
      %2030 = vmatprep.subr.mxu0 0.0
      %2031 = vmatpush1.msra.mxu0 0.0
      %2032 = vmatprep.subr.mxu0 0.0
      %2033 = vmatpush1.msra.mxu0 0.0
      %2034 = vmatprep.subr.mxu0 0.0
      %2035 = vmatpush1.msra.mxu0 0.0
      %2036 = vmatprep.subr.mxu0 0.0
      %2037 = vmatpush1.msra.mxu0 0.0
      %2038 = vmatprep.subr.mxu0 0.0
      %2039 = vmatpush1.msra.mxu0 0.0
      %2040 = vmatprep.subr.mxu0 0.0
      %2041 = vmatpush1.msra.mxu0 %v2008
      %2042 = vmatprep.subr.mxu0 0.0
      %2043 = vmatpush2.msra.mxu0 0.0
      %2044 = vmatprep.subr.mxu0 0.0
      %2045 = vmatpush2.msra.mxu0 0.0
      %2046 = vmatprep.subr.mxu0 0.0
      %2047 = vmatpush2.msra.mxu0 0.0
      %2048 = vmatprep.subr.mxu0 0.0
      %2049 = vmatpush2.msra.mxu0 0.0
      %2050 = vmatprep.subr.mxu0 0.0
      %2051 = vmatpush2.msra.mxu0 0.0
      %2052 = vmatprep.subr.mxu0 0.0
      %2053 = vmatpush2.msra.mxu0 0.0
      %2054 = vmatprep.subr.mxu0 0.0
      %2055 = vmatpush2.msra.mxu0 0.0
      %2056 = vmatprep.subr.mxu0 0.0
      %2057 = vmatpush2.msra.mxu0 0.0
      %2058 = vmatprep.subr.mxu0 0.0
      %2059 = vmatpush2.msra.mxu0 0.0
      %2060 = vmatprep.subr.mxu0 0.0
      %2061 = vmatpush2.msra.mxu0 0.0
      %2062 = vmatprep.subr.mxu0 0.0
      %2063 = vmatpush2.msra.mxu0 0.0
      %2064 = vmatprep.subr.mxu0 0.0
      %2065 = vmatpush2.msra.mxu0 0.0
      %2066 = vmatprep.subr.mxu0 0.0
      %2067 = vmatpush2.msra.mxu0 0.0
      %2068 = vmatprep.subr.mxu0 0.0
      %2069 = vmatpush2.msra.mxu0 0.0
      %2070 = vmatprep.subr.mxu0 0.0
      %2071 = vmatpush2.msra.mxu0 0.0
      %2072 = vmatprep.subr.mxu0 0.0
      %2073 = vmatpush2.msra.mxu0 0.0
      %2074 = vmatprep.mubr.f32.mxu0 0.0
      %2075 = vmatmul.mubr.f32.gmra.mxu0 %v1984
      %v2076 = vpop.f32.mrf.mxu0
      %v2077 = vadd.f32 0.0, %v2076
      %v2078 = vpop.f32.mrf.mxu0
      %2079 = vmatprep.mubr.f32.mxu0 0.0
      %2080 = vmatmul.mubr.f32.gmra.mxu0 %v1987
      %v2081 = vpop.f32.mrf.mxu0
      %v2082 = vadd.f32 0.0, %v2081
      %v2083 = vpop.f32.mrf.mxu0
      %2084 = vmatprep.mubr.f32.mxu0 0.0
      %2085 = vmatmul.mubr.f32.gmra.mxu0 %v1990
      %v2086 = vpop.f32.mrf.mxu0
      %v2087 = vadd.f32 0.0, %v2086
      %v2088 = vpop.f32.mrf.mxu0
      %2089 = vmatprep.mubr.f32.mxu0 0.0
      %2090 = vmatmul.mubr.f32.gmra.mxu0 %v1993
      %v2091 = vpop.f32.mrf.mxu0
      %v2092 = vadd.f32 0.0, %v2091
      %v2093 = vpop.f32.mrf.mxu0
      %2094 = vmatprep.mubr.f32.mxu0 0.0
      %2095 = vmatmul.mubr.f32.gmra.mxu0 %v1996
      %v2096 = vpop.f32.mrf.mxu0
      %v2097 = vadd.f32 0.0, %v2096
      %v2098 = vpop.f32.mrf.mxu0
      %2099 = vmatprep.mubr.f32.mxu0 0.0
      %2100 = vmatmul.mubr.f32.gmra.mxu0 %v1999
      %v2101 = vpop.f32.mrf.mxu0
      %v2102 = vadd.f32 0.0, %v2101
      %v2103 = vpop.f32.mrf.mxu0
      %2104 = vmatprep.mubr.f32.mxu0 0.0
      %2105 = vmatmul.mubr.f32.gmra.mxu0 %v2002
      %v2106 = vpop.f32.mrf.mxu0
      %v2107 = vadd.f32 0.0, %v2106
      %v2108 = vpop.f32.mrf.mxu0
      %2109 = vmatprep.mubr.f32.mxu0 0.0
      %2110 = vmatmul.mubr.f32.gmra.mxu0 %v2005
      %v2111 = vpop.f32.mrf.mxu0
      %v2112 = vadd.f32 0.0, %v2111
      %v2113 = vpop.f32.mrf.mxu0
      %2114 = vdwg.mxu0
      %v2115 = vadd.f32 %v1964, %v2077
      %v2116 = vadd.f32 %v1965, %v2082
      %v2117 = vadd.f32 %v1966, %v2087
      %v2118 = vadd.f32 %v1967, %v2092
      %v2119 = vadd.f32 %v1968, %v2097
      %v2120 = vadd.f32 %v1969, %v2102
      %v2121 = vadd.f32 %v1970, %v2107
      %v2122 = vadd.f32 %v1971, %v2112
      %s2123 = scalar_lea.vmem %s172, 448
      %v2124 = vld [vmem:[%s2123] sm:$0xff]
      %v2125 = vld [vmem:[%s2123 + $0x10] sm:$0xff]
      %v2126 = vld [vmem:[%s2123 + $0x20] sm:$0xff]
      %v2127 = vld [vmem:[%s2123 + $0x30] sm:$0xff]
      %v2128 = vld [vmem:[%s2123 + $0x40] sm:$0xff]
      %v2129 = vld [vmem:[%s2123 + $0x50] sm:$0xff]
      %v2130 = vld [vmem:[%s2123 + $0x60] sm:$0xff]
      %v2131 = vld [vmem:[%s2123 + $0x70] sm:$0xff]
      %s2132 = scalar_lea.vmem %s1, 52
      %v2133 = vld [vmem:[%s2132] sm:$0xf]
      %v2135 = vsel %vm202, %v2124, 0
      %v2138 = vsel %vm202, %v2125, 0
      %v2141 = vsel %vm202, %v2126, 0
      %v2144 = vsel %vm202, %v2127, 0
      %v2147 = vsel %vm202, %v2128, 0
      %v2150 = vsel %vm202, %v2129, 0
      %v2153 = vsel %vm202, %v2130, 0
      %v2156 = vsel %vm202, %v2131, 0
      %v2159 = vsel %vm227, %v2133, 0
      %2161 = vmatprep.subr.mxu0 0.0
      %2162 = vmatpush1.msra.mxu0 0.0
      %2163 = vmatprep.subr.mxu0 0.0
      %2164 = vmatpush1.msra.mxu0 0.0
      %2165 = vmatprep.subr.mxu0 0.0
      %2166 = vmatpush1.msra.mxu0 0.0
      %2167 = vmatprep.subr.mxu0 0.0
      %2168 = vmatpush1.msra.mxu0 0.0
      %2169 = vmatprep.subr.mxu0 0.0
      %2170 = vmatpush1.msra.mxu0 0.0
      %2171 = vmatprep.subr.mxu0 0.0
      %2172 = vmatpush1.msra.mxu0 0.0
      %2173 = vmatprep.subr.mxu0 0.0
      %2174 = vmatpush1.msra.mxu0 0.0
      %2175 = vmatprep.subr.mxu0 0.0
      %2176 = vmatpush1.msra.mxu0 0.0
      %2177 = vmatprep.subr.mxu0 0.0
      %2178 = vmatpush1.msra.mxu0 0.0
      %2179 = vmatprep.subr.mxu0 0.0
      %2180 = vmatpush1.msra.mxu0 0.0
      %2181 = vmatprep.subr.mxu0 0.0
      %2182 = vmatpush1.msra.mxu0 0.0
      %2183 = vmatprep.subr.mxu0 0.0
      %2184 = vmatpush1.msra.mxu0 0.0
      %2185 = vmatprep.subr.mxu0 0.0
      %2186 = vmatpush1.msra.mxu0 0.0
      %2187 = vmatprep.subr.mxu0 0.0
      %2188 = vmatpush1.msra.mxu0 0.0
      %2189 = vmatprep.subr.mxu0 0.0
      %2190 = vmatpush1.msra.mxu0 0.0
      %2191 = vmatprep.subr.mxu0 0.0
      %2192 = vmatpush1.msra.mxu0 %v2159
      %2193 = vmatprep.subr.mxu0 0.0
      %2194 = vmatpush2.msra.mxu0 0.0
      %2195 = vmatprep.subr.mxu0 0.0
      %2196 = vmatpush2.msra.mxu0 0.0
      %2197 = vmatprep.subr.mxu0 0.0
      %2198 = vmatpush2.msra.mxu0 0.0
      %2199 = vmatprep.subr.mxu0 0.0
      %2200 = vmatpush2.msra.mxu0 0.0
      %2201 = vmatprep.subr.mxu0 0.0
      %2202 = vmatpush2.msra.mxu0 0.0
      %2203 = vmatprep.subr.mxu0 0.0
      %2204 = vmatpush2.msra.mxu0 0.0
      %2205 = vmatprep.subr.mxu0 0.0
      %2206 = vmatpush2.msra.mxu0 0.0
      %2207 = vmatprep.subr.mxu0 0.0
      %2208 = vmatpush2.msra.mxu0 0.0
      %2209 = vmatprep.subr.mxu0 0.0
      %2210 = vmatpush2.msra.mxu0 0.0
      %2211 = vmatprep.subr.mxu0 0.0
      %2212 = vmatpush2.msra.mxu0 0.0
      %2213 = vmatprep.subr.mxu0 0.0
      %2214 = vmatpush2.msra.mxu0 0.0
      %2215 = vmatprep.subr.mxu0 0.0
      %2216 = vmatpush2.msra.mxu0 0.0
      %2217 = vmatprep.subr.mxu0 0.0
      %2218 = vmatpush2.msra.mxu0 0.0
      %2219 = vmatprep.subr.mxu0 0.0
      %2220 = vmatpush2.msra.mxu0 0.0
      %2221 = vmatprep.subr.mxu0 0.0
      %2222 = vmatpush2.msra.mxu0 0.0
      %2223 = vmatprep.subr.mxu0 0.0
      %2224 = vmatpush2.msra.mxu0 0.0
      %2225 = vmatprep.mubr.f32.mxu0 0.0
      %2226 = vmatmul.mubr.f32.gmra.mxu0 %v2135
      %v2227 = vpop.f32.mrf.mxu0
      %v2228 = vadd.f32 0.0, %v2227
      %v2229 = vpop.f32.mrf.mxu0
      %2230 = vmatprep.mubr.f32.mxu0 0.0
      %2231 = vmatmul.mubr.f32.gmra.mxu0 %v2138
      %v2232 = vpop.f32.mrf.mxu0
      %v2233 = vadd.f32 0.0, %v2232
      %v2234 = vpop.f32.mrf.mxu0
      %2235 = vmatprep.mubr.f32.mxu0 0.0
      %2236 = vmatmul.mubr.f32.gmra.mxu0 %v2141
      %v2237 = vpop.f32.mrf.mxu0
      %v2238 = vadd.f32 0.0, %v2237
      %v2239 = vpop.f32.mrf.mxu0
      %2240 = vmatprep.mubr.f32.mxu0 0.0
      %2241 = vmatmul.mubr.f32.gmra.mxu0 %v2144
      %v2242 = vpop.f32.mrf.mxu0
      %v2243 = vadd.f32 0.0, %v2242
      %v2244 = vpop.f32.mrf.mxu0
      %2245 = vmatprep.mubr.f32.mxu0 0.0
      %2246 = vmatmul.mubr.f32.gmra.mxu0 %v2147
      %v2247 = vpop.f32.mrf.mxu0
      %v2248 = vadd.f32 0.0, %v2247
      %v2249 = vpop.f32.mrf.mxu0
      %2250 = vmatprep.mubr.f32.mxu0 0.0
      %2251 = vmatmul.mubr.f32.gmra.mxu0 %v2150
      %v2252 = vpop.f32.mrf.mxu0
      %v2253 = vadd.f32 0.0, %v2252
      %v2254 = vpop.f32.mrf.mxu0
      %2255 = vmatprep.mubr.f32.mxu0 0.0
      %2256 = vmatmul.mubr.f32.gmra.mxu0 %v2153
      %v2257 = vpop.f32.mrf.mxu0
      %v2258 = vadd.f32 0.0, %v2257
      %v2259 = vpop.f32.mrf.mxu0
      %2260 = vmatprep.mubr.f32.mxu0 0.0
      %2261 = vmatmul.mubr.f32.gmra.mxu0 %v2156
      %v2262 = vpop.f32.mrf.mxu0
      %v2263 = vadd.f32 0.0, %v2262
      %v2264 = vpop.f32.mrf.mxu0
      %2265 = vdwg.mxu0
      %v2266 = vadd.f32 %v2115, %v2228
      %v2267 = vadd.f32 %v2116, %v2233
      %v2268 = vadd.f32 %v2117, %v2238
      %v2269 = vadd.f32 %v2118, %v2243
      %v2270 = vadd.f32 %v2119, %v2248
      %v2271 = vadd.f32 %v2120, %v2253
      %v2272 = vadd.f32 %v2121, %v2258
      %v2273 = vadd.f32 %v2122, %v2263
      %v2274 = vld [vmem:[%s1972 + $0x1] sm:$0xff]
      %v2275 = vld [vmem:[%s1972 + $0x11] sm:$0xff]
      %v2276 = vld [vmem:[%s1972 + $0x21] sm:$0xff]
      %v2277 = vld [vmem:[%s1972 + $0x31] sm:$0xff]
      %v2278 = vld [vmem:[%s1972 + $0x41] sm:$0xff]
      %v2279 = vld [vmem:[%s1972 + $0x51] sm:$0xff]
      %v2280 = vld [vmem:[%s1972 + $0x61] sm:$0xff]
      %v2281 = vld [vmem:[%s1972 + $0x71] sm:$0xff]
      %s2282 = scalar_lea.vmem %s1, 56
      %v2283 = vld [vmem:[%s2282] sm:$0xf]
      %v2285 = vsel %vm202, %v2274, 0
      %v2288 = vsel %vm202, %v2275, 0
      %v2291 = vsel %vm202, %v2276, 0
      %v2294 = vsel %vm202, %v2277, 0
      %v2297 = vsel %vm202, %v2278, 0
      %v2300 = vsel %vm202, %v2279, 0
      %v2303 = vsel %vm202, %v2280, 0
      %v2306 = vsel %vm202, %v2281, 0
      %v2309 = vsel %vm227, %v2283, 0
      %2311 = vmatprep.subr.mxu0 0.0
      %2312 = vmatpush1.msra.mxu0 0.0
      %2313 = vmatprep.subr.mxu0 0.0
      %2314 = vmatpush1.msra.mxu0 0.0
      %2315 = vmatprep.subr.mxu0 0.0
      %2316 = vmatpush1.msra.mxu0 0.0
      %2317 = vmatprep.subr.mxu0 0.0
      %2318 = vmatpush1.msra.mxu0 0.0
      %2319 = vmatprep.subr.mxu0 0.0
      %2320 = vmatpush1.msra.mxu0 0.0
      %2321 = vmatprep.subr.mxu0 0.0
      %2322 = vmatpush1.msra.mxu0 0.0
      %2323 = vmatprep.subr.mxu0 0.0
      %2324 = vmatpush1.msra.mxu0 0.0
      %2325 = vmatprep.subr.mxu0 0.0
      %2326 = vmatpush1.msra.mxu0 0.0
      %2327 = vmatprep.subr.mxu0 0.0
      %2328 = vmatpush1.msra.mxu0 0.0
      %2329 = vmatprep.subr.mxu0 0.0
      %2330 = vmatpush1.msra.mxu0 0.0
      %2331 = vmatprep.subr.mxu0 0.0
      %2332 = vmatpush1.msra.mxu0 0.0
      %2333 = vmatprep.subr.mxu0 0.0
      %2334 = vmatpush1.msra.mxu0 0.0
      %2335 = vmatprep.subr.mxu0 0.0
      %2336 = vmatpush1.msra.mxu0 0.0
      %2337 = vmatprep.subr.mxu0 0.0
      %2338 = vmatpush1.msra.mxu0 0.0
      %2339 = vmatprep.subr.mxu0 0.0
      %2340 = vmatpush1.msra.mxu0 0.0
      %2341 = vmatprep.subr.mxu0 0.0
      %2342 = vmatpush1.msra.mxu0 %v2309
      %2343 = vmatprep.subr.mxu0 0.0
      %2344 = vmatpush2.msra.mxu0 0.0
      %2345 = vmatprep.subr.mxu0 0.0
      %2346 = vmatpush2.msra.mxu0 0.0
      %2347 = vmatprep.subr.mxu0 0.0
      %2348 = vmatpush2.msra.mxu0 0.0
      %2349 = vmatprep.subr.mxu0 0.0
      %2350 = vmatpush2.msra.mxu0 0.0
      %2351 = vmatprep.subr.mxu0 0.0
      %2352 = vmatpush2.msra.mxu0 0.0
      %2353 = vmatprep.subr.mxu0 0.0
      %2354 = vmatpush2.msra.mxu0 0.0
      %2355 = vmatprep.subr.mxu0 0.0
      %2356 = vmatpush2.msra.mxu0 0.0
      %2357 = vmatprep.subr.mxu0 0.0
      %2358 = vmatpush2.msra.mxu0 0.0
      %2359 = vmatprep.subr.mxu0 0.0
      %2360 = vmatpush2.msra.mxu0 0.0
      %2361 = vmatprep.subr.mxu0 0.0
      %2362 = vmatpush2.msra.mxu0 0.0
      %2363 = vmatprep.subr.mxu0 0.0
      %2364 = vmatpush2.msra.mxu0 0.0
      %2365 = vmatprep.subr.mxu0 0.0
      %2366 = vmatpush2.msra.mxu0 0.0
      %2367 = vmatprep.subr.mxu0 0.0
      %2368 = vmatpush2.msra.mxu0 0.0
      %2369 = vmatprep.subr.mxu0 0.0
      %2370 = vmatpush2.msra.mxu0 0.0
      %2371 = vmatprep.subr.mxu0 0.0
      %2372 = vmatpush2.msra.mxu0 0.0
      %2373 = vmatprep.subr.mxu0 0.0
      %2374 = vmatpush2.msra.mxu0 0.0
      %2375 = vmatprep.mubr.f32.mxu0 0.0
      %2376 = vmatmul.mubr.f32.gmra.mxu0 %v2285
      %v2377 = vpop.f32.mrf.mxu0
      %v2378 = vadd.f32 0.0, %v2377
      %v2379 = vpop.f32.mrf.mxu0
      %2380 = vmatprep.mubr.f32.mxu0 0.0
      %2381 = vmatmul.mubr.f32.gmra.mxu0 %v2288
      %v2382 = vpop.f32.mrf.mxu0
      %v2383 = vadd.f32 0.0, %v2382
      %v2384 = vpop.f32.mrf.mxu0
      %2385 = vmatprep.mubr.f32.mxu0 0.0
      %2386 = vmatmul.mubr.f32.gmra.mxu0 %v2291
      %v2387 = vpop.f32.mrf.mxu0
      %v2388 = vadd.f32 0.0, %v2387
      %v2389 = vpop.f32.mrf.mxu0
      %2390 = vmatprep.mubr.f32.mxu0 0.0
      %2391 = vmatmul.mubr.f32.gmra.mxu0 %v2294
      %v2392 = vpop.f32.mrf.mxu0
      %v2393 = vadd.f32 0.0, %v2392
      %v2394 = vpop.f32.mrf.mxu0
      %2395 = vmatprep.mubr.f32.mxu0 0.0
      %2396 = vmatmul.mubr.f32.gmra.mxu0 %v2297
      %v2397 = vpop.f32.mrf.mxu0
      %v2398 = vadd.f32 0.0, %v2397
      %v2399 = vpop.f32.mrf.mxu0
      %2400 = vmatprep.mubr.f32.mxu0 0.0
      %2401 = vmatmul.mubr.f32.gmra.mxu0 %v2300
      %v2402 = vpop.f32.mrf.mxu0
      %v2403 = vadd.f32 0.0, %v2402
      %v2404 = vpop.f32.mrf.mxu0
      %2405 = vmatprep.mubr.f32.mxu0 0.0
      %2406 = vmatmul.mubr.f32.gmra.mxu0 %v2303
      %v2407 = vpop.f32.mrf.mxu0
      %v2408 = vadd.f32 0.0, %v2407
      %v2409 = vpop.f32.mrf.mxu0
      %2410 = vmatprep.mubr.f32.mxu0 0.0
      %2411 = vmatmul.mubr.f32.gmra.mxu0 %v2306
      %v2412 = vpop.f32.mrf.mxu0
      %v2413 = vadd.f32 0.0, %v2412
      %v2414 = vpop.f32.mrf.mxu0
      %2415 = vdwg.mxu0
      %v2416 = vadd.f32 %v2266, %v2378
      %v2417 = vadd.f32 %v2267, %v2383
      %v2418 = vadd.f32 %v2268, %v2388
      %v2419 = vadd.f32 %v2269, %v2393
      %v2420 = vadd.f32 %v2270, %v2398
      %v2421 = vadd.f32 %v2271, %v2403
      %v2422 = vadd.f32 %v2272, %v2408
      %v2423 = vadd.f32 %v2273, %v2413
      %v2424 = vld [vmem:[%s2123 + $0x1] sm:$0xff]
      %v2425 = vld [vmem:[%s2123 + $0x11] sm:$0xff]
      %v2426 = vld [vmem:[%s2123 + $0x21] sm:$0xff]
      %v2427 = vld [vmem:[%s2123 + $0x31] sm:$0xff]
      %v2428 = vld [vmem:[%s2123 + $0x41] sm:$0xff]
      %v2429 = vld [vmem:[%s2123 + $0x51] sm:$0xff]
      %v2430 = vld [vmem:[%s2123 + $0x61] sm:$0xff]
      %v2431 = vld [vmem:[%s2123 + $0x71] sm:$0xff]
      %s2432 = scalar_lea.vmem %s1, 60
      %v2433 = vld [vmem:[%s2432] sm:$0xf]
      %v2435 = vsel %vm202, %v2424, 0
      %v2438 = vsel %vm202, %v2425, 0
      %v2441 = vsel %vm202, %v2426, 0
      %v2444 = vsel %vm202, %v2427, 0
      %v2447 = vsel %vm202, %v2428, 0
      %v2450 = vsel %vm202, %v2429, 0
      %v2453 = vsel %vm202, %v2430, 0
      %v2456 = vsel %vm202, %v2431, 0
      %v2459 = vsel %vm227, %v2433, 0
      %2461 = vmatprep.subr.mxu0 0.0
      %2462 = vmatpush1.msra.mxu0 0.0
      %2463 = vmatprep.subr.mxu0 0.0
      %2464 = vmatpush1.msra.mxu0 0.0
      %2465 = vmatprep.subr.mxu0 0.0
      %2466 = vmatpush1.msra.mxu0 0.0
      %2467 = vmatprep.subr.mxu0 0.0
      %2468 = vmatpush1.msra.mxu0 0.0
      %2469 = vmatprep.subr.mxu0 0.0
      %2470 = vmatpush1.msra.mxu0 0.0
      %2471 = vmatprep.subr.mxu0 0.0
      %2472 = vmatpush1.msra.mxu0 0.0
      %2473 = vmatprep.subr.mxu0 0.0
      %2474 = vmatpush1.msra.mxu0 0.0
      %2475 = vmatprep.subr.mxu0 0.0
      %2476 = vmatpush1.msra.mxu0 0.0
      %2477 = vmatprep.subr.mxu0 0.0
      %2478 = vmatpush1.msra.mxu0 0.0
      %2479 = vmatprep.subr.mxu0 0.0
      %2480 = vmatpush1.msra.mxu0 0.0
      %2481 = vmatprep.subr.mxu0 0.0
      %2482 = vmatpush1.msra.mxu0 0.0
      %2483 = vmatprep.subr.mxu0 0.0
      %2484 = vmatpush1.msra.mxu0 0.0
      %2485 = vmatprep.subr.mxu0 0.0
      %2486 = vmatpush1.msra.mxu0 0.0
      %2487 = vmatprep.subr.mxu0 0.0
      %2488 = vmatpush1.msra.mxu0 0.0
      %2489 = vmatprep.subr.mxu0 0.0
      %2490 = vmatpush1.msra.mxu0 0.0
      %2491 = vmatprep.subr.mxu0 0.0
      %2492 = vmatpush1.msra.mxu0 %v2459
      %2493 = vmatprep.subr.mxu0 0.0
      %2494 = vmatpush2.msra.mxu0 0.0
      %2495 = vmatprep.subr.mxu0 0.0
      %2496 = vmatpush2.msra.mxu0 0.0
      %2497 = vmatprep.subr.mxu0 0.0
      %2498 = vmatpush2.msra.mxu0 0.0
      %2499 = vmatprep.subr.mxu0 0.0
      %2500 = vmatpush2.msra.mxu0 0.0
      %2501 = vmatprep.subr.mxu0 0.0
      %2502 = vmatpush2.msra.mxu0 0.0
      %2503 = vmatprep.subr.mxu0 0.0
      %2504 = vmatpush2.msra.mxu0 0.0
      %2505 = vmatprep.subr.mxu0 0.0
      %2506 = vmatpush2.msra.mxu0 0.0
      %2507 = vmatprep.subr.mxu0 0.0
      %2508 = vmatpush2.msra.mxu0 0.0
      %2509 = vmatprep.subr.mxu0 0.0
      %2510 = vmatpush2.msra.mxu0 0.0
      %2511 = vmatprep.subr.mxu0 0.0
      %2512 = vmatpush2.msra.mxu0 0.0
      %2513 = vmatprep.subr.mxu0 0.0
      %2514 = vmatpush2.msra.mxu0 0.0
      %2515 = vmatprep.subr.mxu0 0.0
      %2516 = vmatpush2.msra.mxu0 0.0
      %2517 = vmatprep.subr.mxu0 0.0
      %2518 = vmatpush2.msra.mxu0 0.0
      %2519 = vmatprep.subr.mxu0 0.0
      %2520 = vmatpush2.msra.mxu0 0.0
      %2521 = vmatprep.subr.mxu0 0.0
      %2522 = vmatpush2.msra.mxu0 0.0
      %2523 = vmatprep.subr.mxu0 0.0
      %2524 = vmatpush2.msra.mxu0 0.0
      %2525 = vmatprep.mubr.f32.mxu0 0.0
      %2526 = vmatmul.mubr.f32.gmra.mxu0 %v2435
      %v2527 = vpop.f32.mrf.mxu0
      %v2528 = vadd.f32 0.0, %v2527
      %v2529 = vpop.f32.mrf.mxu0
      %2530 = vmatprep.mubr.f32.mxu0 0.0
      %2531 = vmatmul.mubr.f32.gmra.mxu0 %v2438
      %v2532 = vpop.f32.mrf.mxu0
      %v2533 = vadd.f32 0.0, %v2532
      %v2534 = vpop.f32.mrf.mxu0
      %2535 = vmatprep.mubr.f32.mxu0 0.0
      %2536 = vmatmul.mubr.f32.gmra.mxu0 %v2441
      %v2537 = vpop.f32.mrf.mxu0
      %v2538 = vadd.f32 0.0, %v2537
      %v2539 = vpop.f32.mrf.mxu0
      %2540 = vmatprep.mubr.f32.mxu0 0.0
      %2541 = vmatmul.mubr.f32.gmra.mxu0 %v2444
      %v2542 = vpop.f32.mrf.mxu0
      %v2543 = vadd.f32 0.0, %v2542
      %v2544 = vpop.f32.mrf.mxu0
      %2545 = vmatprep.mubr.f32.mxu0 0.0
      %2546 = vmatmul.mubr.f32.gmra.mxu0 %v2447
      %v2547 = vpop.f32.mrf.mxu0
      %v2548 = vadd.f32 0.0, %v2547
      %v2549 = vpop.f32.mrf.mxu0
      %2550 = vmatprep.mubr.f32.mxu0 0.0
      %2551 = vmatmul.mubr.f32.gmra.mxu0 %v2450
      %v2552 = vpop.f32.mrf.mxu0
      %v2553 = vadd.f32 0.0, %v2552
      %v2554 = vpop.f32.mrf.mxu0
      %2555 = vmatprep.mubr.f32.mxu0 0.0
      %2556 = vmatmul.mubr.f32.gmra.mxu0 %v2453
      %v2557 = vpop.f32.mrf.mxu0
      %v2558 = vadd.f32 0.0, %v2557
      %v2559 = vpop.f32.mrf.mxu0
      %2560 = vmatprep.mubr.f32.mxu0 0.0
      %2561 = vmatmul.mubr.f32.gmra.mxu0 %v2456
      %v2562 = vpop.f32.mrf.mxu0
      %v2563 = vadd.f32 0.0, %v2562
      %v2564 = vpop.f32.mrf.mxu0
      %2565 = vdwg.mxu0
      %v2566 = vadd.f32 %v2416, %v2528
      %v2567 = vadd.f32 %v2417, %v2533
      %v2568 = vadd.f32 %v2418, %v2538
      %v2569 = vadd.f32 %v2419, %v2543
      %v2570 = vadd.f32 %v2420, %v2548
      %v2571 = vadd.f32 %v2421, %v2553
      %v2572 = vadd.f32 %v2422, %v2558
      %v2573 = vadd.f32 %v2423, %v2563
      %vm2574 = vcmask 64512
      %2575 = vst.msk [vmem:[%s177] sm:$0xff] %vm2574, %v2566
      %2576 = vst.msk [vmem:[%s177 + $0x8] sm:$0xff] %vm2574, %v2567
      %2577 = vst.msk [vmem:[%s177 + $0x10] sm:$0xff] %vm2574, %v2568
      %2578 = vst.msk [vmem:[%s177 + $0x18] sm:$0xff] %vm2574, %v2569
      %2579 = vst.msk [vmem:[%s177 + $0x20] sm:$0xff] %vm2574, %v2570
      %2580 = vst.msk [vmem:[%s177 + $0x28] sm:$0xff] %vm2574, %v2571
      %2581 = vst.msk [vmem:[%s177 + $0x30] sm:$0xff] %vm2574, %v2572
      %2582 = vst.msk [vmem:[%s177 + $0x38] sm:$0xff] %vm2574, %v2573
      %v2583 = vsel %vm2574, %v2566, 0.0
      %v2584 = vsel %vm2574, %v2567, 0.0
      %v2585 = vadd.f32 %v2583, %v2584
      %v2586 = vsel %vm2574, %v2568, 0.0
      %v2587 = vadd.f32 %v2585, %v2586
      %v2588 = vsel %vm2574, %v2569, 0.0
      %v2589 = vadd.f32 %v2587, %v2588
      %v2590 = vsel %vm2574, %v2570, 0.0
      %v2591 = vadd.f32 %v2589, %v2590
      %v2592 = vsel %vm2574, %v2571, 0.0
      %v2593 = vadd.f32 %v2591, %v2592
      %v2594 = vsel %vm2574, %v2572, 0.0
      %v2595 = vadd.f32 %v2593, %v2594
      %v2596 = vsel %vm2574, %v2573, 0.0
      %v2597 = vadd.f32 %v2595, %v2596
      %v2598 = vrot.slane %v2597, 4
      %v2599 = vadd.f32 %v2597, %v2598
      %v2600 = vrot.slane %v2599, 2
      %v2601 = vadd.f32 %v2599, %v2600
      %v2602 = vrot.slane %v2601, 1
      %v2603 = vadd.f32 %v2601, %v2602
      %v2604 = vmul.f32 %v2603, 0.015625
      %v2605 = vsub.f32 %v2566, %v2604
      %v2606 = vsub.f32 %v2567, %v2604
      %v2607 = vsub.f32 %v2568, %v2604
      %v2608 = vsub.f32 %v2569, %v2604
      %v2609 = vsub.f32 %v2570, %v2604
      %v2610 = vsub.f32 %v2571, %v2604
      %v2611 = vsub.f32 %v2572, %v2604
      %v2612 = vsub.f32 %v2573, %v2604
      %vm2613 = vcmask 57344
      %2614 = vst.msk [vmem:[%s181] sm:$0x1] %vm2613, %v2603
      %v2615 = vmul.f32 %v2605, %v2605
      %v2616 = vmul.f32 %v2606, %v2606
      %v2617 = vmul.f32 %v2607, %v2607
      %v2618 = vmul.f32 %v2608, %v2608
      %v2619 = vmul.f32 %v2609, %v2609
      %v2620 = vmul.f32 %v2610, %v2610
      %v2621 = vmul.f32 %v2611, %v2611
      %v2622 = vmul.f32 %v2612, %v2612
      %v2623 = vsel %vm2574, %v2615, 0.0
      %v2624 = vsel %vm2574, %v2616, 0.0
      %v2625 = vadd.f32 %v2623, %v2624
      %v2626 = vsel %vm2574, %v2617, 0.0
      %v2627 = vadd.f32 %v2625, %v2626
      %v2628 = vsel %vm2574, %v2618, 0.0
      %v2629 = vadd.f32 %v2627, %v2628
      %v2630 = vsel %vm2574, %v2619, 0.0
      %v2631 = vadd.f32 %v2629, %v2630
      %v2632 = vsel %vm2574, %v2620, 0.0
      %v2633 = vadd.f32 %v2631, %v2632
      %v2634 = vsel %vm2574, %v2621, 0.0
      %v2635 = vadd.f32 %v2633, %v2634
      %v2636 = vsel %vm2574, %v2622, 0.0
      %v2637 = vadd.f32 %v2635, %v2636
      %v2638 = vrot.slane %v2637, 4
      %v2639 = vadd.f32 %v2637, %v2638
      %v2640 = vrot.slane %v2639, 2
      %v2641 = vadd.f32 %v2639, %v2640
      %v2642 = vrot.slane %v2641, 1
      %v2643 = vadd.f32 %v2641, %v2642
      %2644 = vst.msk [vmem:[%s181 + $0x1] sm:$0x1] %vm2613, %v2643
      %p2645 = scmp.lt.s32.totalorder %s15, 1
      %s2646 = scalar_select %p2645, %s15, 1
      %s2647 = smul.addr %s2646, 8
      %s2648 = smul.addr %s2647, 8
      %s2649 = scalar_lea.vmem %s2, %s2648
      %p2650 = scmp.lt.s32.totalorder %s15, 1
      %s2651 = scalar_select %p2650, %s15, 1
      %s2652 = smul.addr %s2651, 2
      %s2653 = scalar_lea.vmem %s3, %s2652
      // Predicated region
      $region29: #{cnn_block_forward.2} parent=27 // pred_check
        %p2654 = pneg %p80
      $region30: #{cnn_block_forward.2} parent=27 // pred_check_branch
        %2656 = sbr.rel (%p2654) target = $region32
      $region31: #{cnn_block_forward.2} parent=27 // pred_region
        _
      $region32: #{cnn_block_forward.2} parent=27 // pred_fallthru
        _
      // Predicated region
      $region33: #{cnn_block_forward.2} parent=27 // pred_check
        %p2657 = pneg %p106
      $region34: #{cnn_block_forward.2} parent=27 // pred_check_branch
        %2659 = sbr.rel (%p2657) target = $region36
      $region35: #{cnn_block_forward.2} parent=27 // pred_region
        _
      $region36: #{cnn_block_forward.2} parent=27 // pred_fallthru
        _
    $region28: #{cnn_block_forward.2} parent=5 // pred_fallthru
      _
    %p2660 = scmp.le.s32.totalorder 2, %s10
    // Predicated region
    $region37: #{cnn_block_forward.2} parent=5 // pred_check
      %p2661 = pneg %p2660
    $region38: #{cnn_block_forward.2} parent=5 // pred_check_branch
      %2663 = sbr.rel (%p2661) target = $region40
    $region39: #{cnn_block_forward.2} parent=5 // pred_region
      %s2664 = ssub.s32 %s10, 2
      // Predicated region
      $region41: #{cnn_block_forward.2} parent=39 // pred_check
        %p2665 = pneg %p86
      $region42: #{cnn_block_forward.2} parent=39 // pred_check_branch
        %2667 = sbr.rel (%p2665) target = $region44
      $region43: #{cnn_block_forward.2} parent=39 // pred_region
        %p2668 = scmp.lt.s32.totalorder %s16, 1
        %s2669 = scalar_select %p2668, %s16, 1
        %s2670 = smul.addr %s2669, 8
        %s2671 = smul.addr %s2670, 8
        %s2672 = scalar_lea.vmem %s2, %s2671
      $region44: #{cnn_block_forward.2} parent=39 // pred_fallthru
        _
      // Predicated region
      $region45: #{cnn_block_forward.2} parent=39 // pred_check
        %p2673 = pneg %p112
      $region46: #{cnn_block_forward.2} parent=39 // pred_check_branch
        %2675 = sbr.rel (%p2673) target = $region48
      $region47: #{cnn_block_forward.2} parent=39 // pred_region
        %p2676 = scmp.lt.s32.totalorder %s16, 1
        %s2677 = scalar_select %p2676, %s16, 1
        %s2678 = smul.addr %s2677, 2
        %s2679 = scalar_lea.vmem %s3, %s2678
      $region48: #{cnn_block_forward.2} parent=39 // pred_fallthru
        _
    $region40: #{cnn_block_forward.2} parent=5 // pred_fallthru
      _
  $region6: #{cnn_block_forward.2} parent=0 // loop_footer
    %s14 = sadd.s32 1, %s10
  $region7: #{cnn_block_forward.2} parent=0 // loop_footer_branch
    %9 = sbr.rel target = $region3
  $region8: #{cnn_block_forward.2} parent=0 // loop_exit
    _

</llo_original>
